<compile_context>
chip_gen: v6e
topology: v6e:2x2x1
jax: 0.10.0
libtpu: 0.0.40
codegen_flags: <defaults>
</compile_context>

<pallas_src>
import functools

import jax
import jax.numpy as jnp
from jax.experimental import pallas as pl
from jax.experimental.pallas import tpu as pltpu

LANE = 128           # channels are padded to a multiple of the lane width
SUB = 8              # f32 sublane tile
EPS = 1e-5
MAX_TILE_ROWS = 32   # cap on output rows per grid step (VMEM budget)


def _round_up(x, m):
    return (x + m - 1) // m * m


def _pick_row_tile(ho, max_rows):
    """Largest divisor of `ho` that is <= max_rows (keeps every tile full)."""
    tm = min(ho, max_rows)
    while ho % tm:
        tm -= 1
    return tm


def _pad_last(a, target):
    pad = target - a.shape[-1]
    if pad == 0:
        return a
    return jnp.pad(a, [(0, 0)] * (a.ndim - 1) + [(0, pad)])


# ---------------------------------------------------------------------------
# Kernel: (per-channel input affine) -> 3x3 valid conv -> bias -> ReLU
#         + per-channel BatchNorm partial statistics
# ---------------------------------------------------------------------------
def _conv_relu_stats_kernel(x_ref, w_ref, b_ref, sc_ref, sh_ref, y_ref, st_ref,
                            *, tm, kh, kw, wo_pad):
    # x_ref : (1, H, W_in, Ci)   full (width-padded) image, resident per image
    # w_ref : (kh*kw*Ci, Co)     taps flattened along the contraction axis
    # b_ref : (1, Co)            conv bias
    # sc_ref, sh_ref : (1, Ci)   input-channel affine (folded BN of previous block)
    # y_ref : (1, tm, Wo, Co)    relu(conv(x*sc+sh) + b) for this row tile
    # st_ref: (1, 1, 8, Co)      row 0: per-channel sum, row 1: sum of squares
    ci = x_ref.shape[3]
    wo = y_ref.shape[2]
    co = y_ref.shape[3]
    t = pl.program_id(1)
    r0 = t * tm                                        # first output row of tile

    xw = x_ref[0, pl.ds(r0, tm + kh - 1), :, :]        # (tm+2, W_in, Ci)
    sc = sc_ref[...].reshape(1, 1, ci)
    sh = sh_ref[...].reshape(1, 1, ci)
    xw = xw * sc + sh                                  # fused BN of previous block

    # im2col: one lane-aligned concat + one MXU matmul for the whole row tile.
    taps = []
    for ky in range(kh):
        for kx in range(kw):
            taps.append(xw[ky:ky + tm, kx:kx + wo_pad, :])     # (tm, wo_pad, Ci)
    patch = jnp.concatenate(taps, axis=-1)                     # (tm, wo_pad, kh*kw*Ci)
    patch = patch.reshape(tm * wo_pad, kh * kw * ci)           # aligned collapse

    acc = jnp.dot(patch, w_ref[...], preferred_element_type=jnp.float32)
    acc = jnp.maximum(acc + b_ref[...], 0.0)                   # bias + ReLU

    # BatchNorm partial statistics; mask the (wo_pad - wo) junk columns.
    col = jax.lax.broadcasted_iota(jnp.int32, (tm * wo_pad, 1), 0) % wo_pad
    accv = jnp.where(col < wo, acc, 0.0)
    psum = jnp.sum(accv, axis=0, keepdims=True)                # (1, Co)
    psq = jnp.sum(accv * accv, axis=0, keepdims=True)          # (1, Co)
    row = jax.lax.broadcasted_iota(jnp.int32, (SUB, co), 0)
    st_ref[0, 0] = jnp.where(row == 0, psum, 0.0) + jnp.where(row == 1, psq, 0.0)

    y_ref[0] = acc.reshape(tm, wo_pad, co)[:, :wo, :]


def _conv_relu_stats(x, w, b, in_scale, in_shift):
    """relu(conv3x3_valid(x * in_scale + in_shift, w) + b) plus per-channel
    (sum, sum-of-squares).  Channel dims must already be padded to LANE."""
    n, h, wdt, ci = x.shape
    kh, kw, _, co = w.shape
    ho, wo = h - kh + 1, wdt - kw + 1
    wo_pad = _round_up(wo, SUB)
    w_in = wo_pad + kw - 1
    if w_in > wdt:          # zero-pad width so every tap slice is in-bounds
        x = jnp.pad(x, ((0, 0), (0, 0), (0, w_in - wdt), (0, 0)))

    tm = _pick_row_tile(ho, MAX_TILE_ROWS)
    tiles = ho // tm

    kernel = functools.partial(
        _conv_relu_stats_kernel, tm=tm, kh=kh, kw=kw, wo_pad=wo_pad)

    y, stats = pl.pallas_call(
        kernel,
        grid=(n, tiles),
        in_specs=[
            pl.BlockSpec((1, h, w_in, ci), lambda i, t: (i, 0, 0, 0)),
            pl.BlockSpec((kh * kw * ci, co), lambda i, t: (0, 0)),
            pl.BlockSpec((1, co), lambda i, t: (0, 0)),
            pl.BlockSpec((1, ci), lambda i, t: (0, 0)),
            pl.BlockSpec((1, ci), lambda i, t: (0, 0)),
        ],
        out_specs=[
            pl.BlockSpec((1, tm, wo, co), lambda i, t: (i, t, 0, 0)),
            pl.BlockSpec((1, 1, SUB, co), lambda i, t: (i, t, 0, 0)),
        ],
        out_shape=[
            jax.ShapeDtypeStruct((n, ho, wo, co), jnp.float32),
            jax.ShapeDtypeStruct((n, tiles, SUB, co), jnp.float32),
        ],
        compiler_params=pltpu.CompilerParams(
            dimension_semantics=("parallel", "parallel"),
            vmem_limit_bytes=32 * 1024 * 1024,
        ),
    )(x, w.reshape(kh * kw * ci, co), b.reshape(1, co),
      in_scale.reshape(1, ci), in_shift.reshape(1, ci))

    psum = jnp.sum(stats[:, :, 0, :], axis=(0, 1))
    psq = jnp.sum(stats[:, :, 1, :], axis=(0, 1))
    return y, psum, psq


# ---------------------------------------------------------------------------
# Kernel: final BatchNorm application (per-channel affine), lane-dense
# ---------------------------------------------------------------------------
def _bn_apply_kernel(y_ref, sc_ref, sh_ref, o_ref):
    co = o_ref.shape[3]
    sc = sc_ref[...].reshape(1, 1, 1, co)
    sh = sh_ref[...].reshape(1, 1, 1, co)
    o_ref[...] = y_ref[...] * sc + sh


def _bn_apply(y, scale, shift):
    n, h, wdt, co = y.shape
    return pl.pallas_call(
        _bn_apply_kernel,
        grid=(n,),
        in_specs=[
            pl.BlockSpec((1, h, wdt, co), lambda i: (i, 0, 0, 0)),
            pl.BlockSpec((1, co), lambda i: (0, 0)),
            pl.BlockSpec((1, co), lambda i: (0, 0)),
        ],
        out_specs=pl.BlockSpec((1, h, wdt, co), lambda i: (i, 0, 0, 0)),
        out_shape=jax.ShapeDtypeStruct((n, h, wdt, co), jnp.float32),
        compiler_params=pltpu.CompilerParams(
            dimension_semantics=("parallel",)),
    )(y, scale.reshape(1, co), shift.reshape(1, co))


def _fold_bn_stats(psum, psq, count, gamma, beta, eps=EPS):
    mean = psum / count
    var = psq / count - mean * mean          # biased variance (PyTorch training)
    scale = gamma * jax.lax.rsqrt(var + eps)
    shift = beta - mean * scale
    return scale, shift


def init_params(key, inchannels, outchannels):
    """Deterministic synthetic params. Conv weights are kept in HWIO
    (3,3,Cin,Cout) for the channels-last kernels; BN affine params use
    PyTorch defaults (gamma=1, beta=0)."""
    k1, k2, k3, k4 = jax.random.split(key, 4)
    return {
        "w1": 0.1 * jax.random.normal(k1, (3, 3, inchannels, outchannels), jnp.float32),
        "b1": 0.05 * jax.random.normal(k2, (outchannels,), jnp.float32),
        "g1": jnp.ones((outchannels,), jnp.float32),
        "beta1": jnp.zeros((outchannels,), jnp.float32),
        "w2": 0.1 * jax.random.normal(k3, (3, 3, outchannels, outchannels), jnp.float32),
        "b2": 0.05 * jax.random.normal(k4, (outchannels,), jnp.float32),
        "g2": jnp.ones((outchannels,), jnp.float32),
        "beta2": jnp.zeros((outchannels,), jnp.float32),
    }


@jax.jit
def conv3x3_forward(x_nchw, params):
    # layout: PyTorch NCHW in/out; internal compute is NHWC (channels on lanes).
    n, cin, h, w = x_nchw.shape
    cout = params["b1"].shape[0]
    ci_p = _round_up(cin, LANE)
    co_p = _round_up(cout, LANE)

    x = jnp.transpose(x_nchw, (0, 2, 3, 1))
    x = _pad_last(x, ci_p)

    w1 = jnp.pad(params["w1"], ((0, 0), (0, 0), (0, ci_p - cin), (0, co_p - cout)))
    w2 = jnp.pad(params["w2"], ((0, 0), (0, 0), (0, co_p - cout), (0, co_p - cout)))
    b1 = _pad_last(params["b1"], co_p)
    g1 = _pad_last(params["g1"], co_p)
    be1 = _pad_last(params["beta1"], co_p)
    b2 = _pad_last(params["b2"], co_p)
    g2 = _pad_last(params["g2"], co_p)
    be2 = _pad_last(params["beta2"], co_p)

    # block 1: conv + bias + ReLU, BN statistics fused into the kernel.
    y1, s1, q1 = _conv_relu_stats(
        x, w1, b1, jnp.ones((ci_p,), jnp.float32), jnp.zeros((ci_p,), jnp.float32))
    ho1, wo1 = h - 2, w - 2
    scale1, shift1 = _fold_bn_stats(s1, q1, n * ho1 * wo1, g1, be1)

    # block 2: BatchNorm-1 is applied as the input-channel affine of conv 2,
    # so y1 makes a single HBM round trip.
    y2, s2, q2 = _conv_relu_stats(y1, w2, b2, scale1, shift1)
    ho2, wo2 = ho1 - 2, wo1 - 2
    scale2, shift2 = _fold_bn_stats(s2, q2, n * ho2 * wo2, g2, be2)

    out = _bn_apply(y2, scale2, shift2)      # final BatchNorm (Pallas, lane-dense)
    out = out[..., :cout]                    # strip channel padding
    return jnp.transpose(out, (0, 3, 1, 2))


def _reference_forward(x_nchw, params):
    """Pure-JAX reference (lax conv + relu + training-mode batchnorm)."""
    def block(x, w, b, g, bt, eps=EPS):
        y = jax.lax.conv_general_dilated(
            x, w, window_strides=(1, 1), padding="VALID",
            dimension_numbers=("NHWC", "HWIO", "NHWC"))
        y = jnp.maximum(y + b, 0.0)
        mean = jnp.mean(y, axis=(0, 1, 2), keepdims=True)
        var = jnp.mean((y - mean) ** 2, axis=(0, 1, 2), keepdims=True)
        return (y - mean) * jax.lax.rsqrt(var + eps) * g + bt

    x = jnp.transpose(x_nchw, (0, 2, 3, 1))
    y = block(x, params["w1"], params["b1"], params["g1"], params["beta1"])
    y = block(y, params["w2"], params["b2"], params["g2"], params["beta2"])
    return jnp.transpose(y, (0, 3, 1, 2))


if __name__ == "__main__":
    key = jax.random.PRNGKey(0)
    kx, kp = jax.random.split(key)

    N, Cin, Cout, H, W = 2, 4, 8, 16, 16
    x = jax.random.normal(kx, (N, Cin, H, W), jnp.float32)   # NCHW like PyTorch
    params = init_params(kp, Cin, Cout)

    out = jax.block_until_ready(conv3x3_forward(x, params))
    assert out.shape == (N, Cout, H - 4, W - 4), out.shape

    ref = jax.block_until_ready(_reference_forward(x, params))
    err = float(jnp.max(jnp.abs(out - ref)))
    # Tolerance note: the TPU MXU's default f32 matmul path rounds operands to
    # bfloat16.  Folding BatchNorm-1 into the conv-2 inputs is mathematically
    # exact but perturbs those operands at the ~1e-6 level vs. the XLA
    # reference, which can occasionally flip a bf16 rounding and produce
    # isolated ~1e-3 differences; 5e-3 covers that while catching real bugs.
    assert jnp.allclose(out, ref, atol=5e-3, rtol=5e-3), err

    print("KERNEL_OK")
</pallas_src>

<mosaic_0001>
module attributes {stable_mosaic.version = 11 : i64} {
  func.func @_conv_relu_stats_kernel(%arg0: i32, %arg1: i32, %arg2: memref<1x16x18x128xf32, #tpu.memory_space<vmem>>, %arg3: memref<1152x128xf32, #tpu.memory_space<vmem>>, %arg4: memref<1x128xf32, #tpu.memory_space<vmem>>, %arg5: memref<1x128xf32, #tpu.memory_space<vmem>>, %arg6: memref<1x128xf32, #tpu.memory_space<vmem>>, %arg7: memref<1x14x14x128xf32, #tpu.memory_space<vmem>>, %arg8: memref<1x1x8x128xf32, #tpu.memory_space<vmem>>) attributes {dimension_semantics = [#tpu.dimension_semantics<parallel>, #tpu.dimension_semantics<parallel>], iteration_bounds = array<i64: 2, 1>, scalar_prefetch = 0 : i64, scratch_operands = 0 : i64, tpu.core_type = #tpu.core_type<tc>, window_params = [{transform_indices = @transform_0, window_bounds = array<i64: 1, 16, 18, 128>}, {pipeline_mode = #tpu.pipeline_mode<synchronous>, transform_indices = @transform_1, window_bounds = array<i64: 1152, 128>}, {pipeline_mode = #tpu.pipeline_mode<synchronous>, transform_indices = @transform_2, window_bounds = array<i64: 1, 128>}, {pipeline_mode = #tpu.pipeline_mode<synchronous>, transform_indices = @transform_3, window_bounds = array<i64: 1, 128>}, {pipeline_mode = #tpu.pipeline_mode<synchronous>, transform_indices = @transform_4, window_bounds = array<i64: 1, 128>}, {transform_indices = @transform_5, window_bounds = array<i64: 1, 14, 14, 128>}, {transform_indices = @transform_6, window_bounds = array<i64: 1, 1, 8, 128>}]} {
    %c14_i32 = arith.constant 14 : i32
    %0 = arith.muli %arg1, %c14_i32 : i32
    %c0 = arith.constant 0 : index
    %1 = arith.index_cast %0 : i32 to index
    %c0_0 = arith.constant 0 : index
    %c0_1 = arith.constant 0 : index
    %2 = vector.load %arg2[%c0, %1, %c0_0, %c0_1] : memref<1x16x18x128xf32, #tpu.memory_space<vmem>>, vector<1x16x18x128xf32>
    %3 = vector.shape_cast %2 : vector<1x16x18x128xf32> to vector<16x18x128xf32>
    %c0_2 = arith.constant 0 : index
    %c0_3 = arith.constant 0 : index
    %4 = vector.load %arg5[%c0_2, %c0_3] : memref<1x128xf32, #tpu.memory_space<vmem>>, vector<1x128xf32>
    %5 = vector.shape_cast %4 : vector<1x128xf32> to vector<1x1x128xf32>
    %c0_4 = arith.constant 0 : index
    %c0_5 = arith.constant 0 : index
    %6 = vector.load %arg6[%c0_4, %c0_5] : memref<1x128xf32, #tpu.memory_space<vmem>>, vector<1x128xf32>
    %7 = vector.shape_cast %6 : vector<1x128xf32> to vector<1x1x128xf32>
    %8 = vector.broadcast %5 : vector<1x1x128xf32> to vector<16x18x128xf32>
    %9 = arith.mulf %3, %8 : vector<16x18x128xf32>
    %10 = vector.broadcast %7 : vector<1x1x128xf32> to vector<16x18x128xf32>
    %11 = arith.addf %9, %10 : vector<16x18x128xf32>
    %12 = vector.extract_strided_slice %11 {offsets = [0, 0, 0], sizes = [14, 16, 128], strides = [1, 1, 1]} : vector<16x18x128xf32> to vector<14x16x128xf32>
    %13 = vector.extract_strided_slice %11 {offsets = [0, 1, 0], sizes = [14, 16, 128], strides = [1, 1, 1]} : vector<16x18x128xf32> to vector<14x16x128xf32>
    %14 = vector.extract_strided_slice %11 {offsets = [0, 2, 0], sizes = [14, 16, 128], strides = [1, 1, 1]} : vector<16x18x128xf32> to vector<14x16x128xf32>
    %15 = vector.extract_strided_slice %11 {offsets = [1, 0, 0], sizes = [14, 16, 128], strides = [1, 1, 1]} : vector<16x18x128xf32> to vector<14x16x128xf32>
    %16 = vector.extract_strided_slice %11 {offsets = [1, 1, 0], sizes = [14, 16, 128], strides = [1, 1, 1]} : vector<16x18x128xf32> to vector<14x16x128xf32>
    %17 = vector.extract_strided_slice %11 {offsets = [1, 2, 0], sizes = [14, 16, 128], strides = [1, 1, 1]} : vector<16x18x128xf32> to vector<14x16x128xf32>
    %18 = vector.extract_strided_slice %11 {offsets = [2, 0, 0], sizes = [14, 16, 128], strides = [1, 1, 1]} : vector<16x18x128xf32> to vector<14x16x128xf32>
    %19 = vector.extract_strided_slice %11 {offsets = [2, 1, 0], sizes = [14, 16, 128], strides = [1, 1, 1]} : vector<16x18x128xf32> to vector<14x16x128xf32>
    %20 = vector.extract_strided_slice %11 {offsets = [2, 2, 0], sizes = [14, 16, 128], strides = [1, 1, 1]} : vector<16x18x128xf32> to vector<14x16x128xf32>
    %21 = tpu.concatenate %12, %13, %14, %15, %16, %17, %18, %19, %20 in 2 : vector<14x16x128xf32>, vector<14x16x128xf32>, vector<14x16x128xf32>, vector<14x16x128xf32>, vector<14x16x128xf32>, vector<14x16x128xf32>, vector<14x16x128xf32>, vector<14x16x128xf32>, vector<14x16x128xf32> -> vector<14x16x1152xf32>
    %22 = vector.shape_cast %21 : vector<14x16x1152xf32> to vector<224x1152xf32>
    %c0_6 = arith.constant 0 : index
    %c0_7 = arith.constant 0 : index
    %23 = vector.load %arg3[%c0_6, %c0_7] : memref<1152x128xf32, #tpu.memory_space<vmem>>, vector<1152x128xf32>
    %cst = arith.constant dense<0.000000e+00> : vector<224x128xf32>
    %24 = tpu.matmul %22, %23, %cst {dimension_numbers = #tpu.dot_dimension_numbers<[1], [0], [0], [1], [0, 0, 1, 1], [], []>} : vector<224x1152xf32>, vector<1152x128xf32>, vector<224x128xf32> -> vector<224x128xf32>
    %c0_8 = arith.constant 0 : index
    %c0_9 = arith.constant 0 : index
    %25 = vector.load %arg4[%c0_8, %c0_9] : memref<1x128xf32, #tpu.memory_space<vmem>>, vector<1x128xf32>
    %26 = vector.broadcast %25 : vector<1x128xf32> to vector<224x128xf32>
    %27 = arith.addf %24, %26 : vector<224x128xf32>
    %cst_10 = arith.constant 0.000000e+00 : f32
    %28 = vector.broadcast %cst_10 : f32 to vector<224x128xf32>
    %29 = arith.maximumf %27, %28 : vector<224x128xf32>
    %30 = tpu.iota {dimensions = array<i32: 0>} : vector<224x1xi32>
    %c16_i32 = arith.constant 16 : i32
    %c0_i32 = arith.constant 0 : i32
    %31 = arith.cmpi eq, %c16_i32, %c0_i32 : i32
    %c1_i32 = arith.constant 1 : i32
    %32 = arith.select %31, %c1_i32, %c16_i32 : i32
    %33 = vector.broadcast %32 : i32 to vector<224x1xi32>
    %34 = arith.remsi %30, %33 : vector<224x1xi32>
    %c0_i32_11 = arith.constant 0 : i32
    %35 = vector.broadcast %c0_i32_11 : i32 to vector<224x1xi32>
    %36 = arith.cmpi ne, %34, %35 : vector<224x1xi32>
    %c0_i32_12 = arith.constant 0 : i32
    %37 = vector.broadcast %c0_i32_12 : i32 to vector<224x1xi32>
    %38 = arith.cmpi slt, %34, %37 : vector<224x1xi32>
    %c0_i32_13 = arith.constant 0 : i32
    %39 = arith.cmpi slt, %32, %c0_i32_13 : i32
    %40 = vector.broadcast %39 : i1 to vector<224x1xi1>
    %41 = vector.broadcast %40 : vector<224x1xi1> to vector<224x1xi1>
    %42 = arith.xori %38, %41 : vector<224x1xi1>
    %43 = arith.andi %42, %36 : vector<224x1xi1>
    %44 = vector.broadcast %32 : i32 to vector<224x1xi32>
    %45 = arith.addi %34, %44 : vector<224x1xi32>
    %46 = arith.select %43, %45, %34 : vector<224x1xi1>, vector<224x1xi32>
    %c14_i32_14 = arith.constant 14 : i32
    %47 = vector.broadcast %c14_i32_14 : i32 to vector<224x1xi32>
    %48 = arith.cmpi slt, %46, %47 : vector<224x1xi32>
    %cst_15 = arith.constant 0.000000e+00 : f32
    %49 = vector.shape_cast %48 : vector<224x1xi1> to vector<224x1xi1>
    %50 = vector.broadcast %49 : vector<224x1xi1> to vector<224x128xi1>
    %51 = vector.broadcast %cst_15 : f32 to vector<224x128xf32>
    %52 = arith.select %50, %29, %51 : vector<224x128xi1>, vector<224x128xf32>
    %cst_16 = arith.constant dense<0.000000e+00> : vector<128xf32>
    %53 = vector.multi_reduction <add>, %52, %cst_16 [0] : vector<224x128xf32> to vector<128xf32>
    %54 = vector.shape_cast %53 : vector<128xf32> to vector<1x128xf32>
    %55 = arith.mulf %52, %52 : vector<224x128xf32>
    %cst_17 = arith.constant dense<0.000000e+00> : vector<128xf32>
    %56 = vector.multi_reduction <add>, %55, %cst_17 [0] : vector<224x128xf32> to vector<128xf32>
    %57 = vector.shape_cast %56 : vector<128xf32> to vector<1x128xf32>
    %58 = tpu.iota {dimensions = array<i32: 0>} : vector<8x128xi32>
    %c0_i32_18 = arith.constant 0 : i32
    %59 = vector.broadcast %c0_i32_18 : i32 to vector<8x128xi32>
    %60 = arith.cmpi eq, %58, %59 : vector<8x128xi32>
    %cst_19 = arith.constant 0.000000e+00 : f32
    %61 = vector.shape_cast %54 : vector<1x128xf32> to vector<1x128xf32>
    %62 = vector.broadcast %61 : vector<1x128xf32> to vector<8x128xf32>
    %63 = vector.broadcast %cst_19 : f32 to vector<8x128xf32>
    %64 = arith.select %60, %62, %63 : vector<8x128xi1>, vector<8x128xf32>
    %c1_i32_20 = arith.constant 1 : i32
    %65 = vector.broadcast %c1_i32_20 : i32 to vector<8x128xi32>
    %66 = arith.cmpi eq, %58, %65 : vector<8x128xi32>
    %cst_21 = arith.constant 0.000000e+00 : f32
    %67 = vector.shape_cast %57 : vector<1x128xf32> to vector<1x128xf32>
    %68 = vector.broadcast %67 : vector<1x128xf32> to vector<8x128xf32>
    %69 = vector.broadcast %cst_21 : f32 to vector<8x128xf32>
    %70 = arith.select %66, %68, %69 : vector<8x128xi1>, vector<8x128xf32>
    %71 = arith.addf %64, %70 : vector<8x128xf32>
    %c0_22 = arith.constant 0 : index
    %c0_23 = arith.constant 0 : index
    %c0_24 = arith.constant 0 : index
    %c0_25 = arith.constant 0 : index
    %72 = vector.load %arg8[%c0_22, %c0_23, %c0_24, %c0_25] : memref<1x1x8x128xf32, #tpu.memory_space<vmem>>, vector<1x1x8x128xf32>
    %73 = vector.shape_cast %72 : vector<1x1x8x128xf32> to vector<8x128xf32>
    %74 = vector.shape_cast %71 : vector<8x128xf32> to vector<1x1x8x128xf32>
    tpu.vector_store %arg8[%c0_22, %c0_23, %c0_24, %c0_25], %74 {strides = array<i32>} : memref<1x1x8x128xf32, #tpu.memory_space<vmem>>, vector<1x1x8x128xf32>,
    %75 = vector.shape_cast %29 : vector<224x128xf32> to vector<14x16x128xf32>
    %76 = vector.extract_strided_slice %75 {offsets = [0, 0, 0], sizes = [14, 14, 128], strides = [1, 1, 1]} : vector<14x16x128xf32> to vector<14x14x128xf32>
    %c0_26 = arith.constant 0 : index
    %c0_27 = arith.constant 0 : index
    %c0_28 = arith.constant 0 : index
    %c0_29 = arith.constant 0 : index
    %77 = vector.load %arg7[%c0_26, %c0_27, %c0_28, %c0_29] : memref<1x14x14x128xf32, #tpu.memory_space<vmem>>, vector<1x14x14x128xf32>
    %78 = vector.shape_cast %77 : vector<1x14x14x128xf32> to vector<14x14x128xf32>
    %79 = vector.shape_cast %76 : vector<14x14x128xf32> to vector<1x14x14x128xf32>
    tpu.vector_store %arg7[%c0_26, %c0_27, %c0_28, %c0_29], %79 {strides = array<i32>} : memref<1x14x14x128xf32, #tpu.memory_space<vmem>>, vector<1x14x14x128xf32>,
    return
  }
  func.func @transform_0(%arg0: i32, %arg1: i32) -> (i32, i32, i32, i32) {
    %c0_i32 = arith.constant 0 : i32
    %c0_i32_0 = arith.constant 0 : i32
    %c0_i32_1 = arith.constant 0 : i32
    %c0_i32_2 = arith.constant 0 : i32
    return %arg0, %c0_i32, %c0_i32_0, %c0_i32_1 : i32, i32, i32, i32
  }
  func.func @transform_1(%arg0: i32, %arg1: i32) -> (i32, i32) {
    %c0_i32 = arith.constant 0 : i32
    %c0_i32_0 = arith.constant 0 : i32
    %c0_i32_1 = arith.constant 0 : i32
    return %c0_i32, %c0_i32_0 : i32, i32
  }
  func.func @transform_2(%arg0: i32, %arg1: i32) -> (i32, i32) {
    %c0_i32 = arith.constant 0 : i32
    %c0_i32_0 = arith.constant 0 : i32
    %c0_i32_1 = arith.constant 0 : i32
    return %c0_i32, %c0_i32_0 : i32, i32
  }
  func.func @transform_3(%arg0: i32, %arg1: i32) -> (i32, i32) {
    %c0_i32 = arith.constant 0 : i32
    %c0_i32_0 = arith.constant 0 : i32
    %c0_i32_1 = arith.constant 0 : i32
    return %c0_i32, %c0_i32_0 : i32, i32
  }
  func.func @transform_4(%arg0: i32, %arg1: i32) -> (i32, i32) {
    %c0_i32 = arith.constant 0 : i32
    %c0_i32_0 = arith.constant 0 : i32
    %c0_i32_1 = arith.constant 0 : i32
    return %c0_i32, %c0_i32_0 : i32, i32
  }
  func.func @transform_5(%arg0: i32, %arg1: i32) -> (i32, i32, i32, i32) {
    %c0_i32 = arith.constant 0 : i32
    %c0_i32_0 = arith.constant 0 : i32
    %c0_i32_1 = arith.constant 0 : i32
    return %arg0, %arg1, %c0_i32, %c0_i32_0 : i32, i32, i32, i32
  }
  func.func @transform_6(%arg0: i32, %arg1: i32) -> (i32, i32, i32, i32) {
    %c0_i32 = arith.constant 0 : i32
    %c0_i32_0 = arith.constant 0 : i32
    %c0_i32_1 = arith.constant 0 : i32
    return %arg0, %arg1, %c0_i32, %c0_i32_0 : i32, i32, i32, i32
  }
}

module attributes {stable_mosaic.version = 11 : i64} {
  func.func @_conv_relu_stats_kernel(%arg0: i32, %arg1: i32, %arg2: memref<1x14x18x128xf32, #tpu.memory_space<vmem>>, %arg3: memref<1152x128xf32, #tpu.memory_space<vmem>>, %arg4: memref<1x128xf32, #tpu.memory_space<vmem>>, %arg5: memref<1x128xf32, #tpu.memory_space<vmem>>, %arg6: memref<1x128xf32, #tpu.memory_space<vmem>>, %arg7: memref<1x12x12x128xf32, #tpu.memory_space<vmem>>, %arg8: memref<1x1x8x128xf32, #tpu.memory_space<vmem>>) attributes {dimension_semantics = [#tpu.dimension_semantics<parallel>, #tpu.dimension_semantics<parallel>], iteration_bounds = array<i64: 2, 1>, scalar_prefetch = 0 : i64, scratch_operands = 0 : i64, tpu.core_type = #tpu.core_type<tc>, window_params = [{transform_indices = @transform_0, window_bounds = array<i64: 1, 14, 18, 128>}, {pipeline_mode = #tpu.pipeline_mode<synchronous>, transform_indices = @transform_1, window_bounds = array<i64: 1152, 128>}, {pipeline_mode = #tpu.pipeline_mode<synchronous>, transform_indices = @transform_2, window_bounds = array<i64: 1, 128>}, {pipeline_mode = #tpu.pipeline_mode<synchronous>, transform_indices = @transform_3, window_bounds = array<i64: 1, 128>}, {pipeline_mode = #tpu.pipeline_mode<synchronous>, transform_indices = @transform_4, window_bounds = array<i64: 1, 128>}, {transform_indices = @transform_5, window_bounds = array<i64: 1, 12, 12, 128>}, {transform_indices = @transform_6, window_bounds = array<i64: 1, 1, 8, 128>}]} {
    %c12_i32 = arith.constant 12 : i32
    %0 = arith.muli %arg1, %c12_i32 : i32
    %c0 = arith.constant 0 : index
    %1 = arith.index_cast %0 : i32 to index
    %c0_0 = arith.constant 0 : index
    %c0_1 = arith.constant 0 : index
    %2 = vector.load %arg2[%c0, %1, %c0_0, %c0_1] : memref<1x14x18x128xf32, #tpu.memory_space<vmem>>, vector<1x14x18x128xf32>
    %3 = vector.shape_cast %2 : vector<1x14x18x128xf32> to vector<14x18x128xf32>
    %c0_2 = arith.constant 0 : index
    %c0_3 = arith.constant 0 : index
    %4 = vector.load %arg5[%c0_2, %c0_3] : memref<1x128xf32, #tpu.memory_space<vmem>>, vector<1x128xf32>
    %5 = vector.shape_cast %4 : vector<1x128xf32> to vector<1x1x128xf32>
    %c0_4 = arith.constant 0 : index
    %c0_5 = arith.constant 0 : index
    %6 = vector.load %arg6[%c0_4, %c0_5] : memref<1x128xf32, #tpu.memory_space<vmem>>, vector<1x128xf32>
    %7 = vector.shape_cast %6 : vector<1x128xf32> to vector<1x1x128xf32>
    %8 = vector.broadcast %5 : vector<1x1x128xf32> to vector<14x18x128xf32>
    %9 = arith.mulf %3, %8 : vector<14x18x128xf32>
    %10 = vector.broadcast %7 : vector<1x1x128xf32> to vector<14x18x128xf32>
    %11 = arith.addf %9, %10 : vector<14x18x128xf32>
    %12 = vector.extract_strided_slice %11 {offsets = [0, 0, 0], sizes = [12, 16, 128], strides = [1, 1, 1]} : vector<14x18x128xf32> to vector<12x16x128xf32>
    %13 = vector.extract_strided_slice %11 {offsets = [0, 1, 0], sizes = [12, 16, 128], strides = [1, 1, 1]} : vector<14x18x128xf32> to vector<12x16x128xf32>
    %14 = vector.extract_strided_slice %11 {offsets = [0, 2, 0], sizes = [12, 16, 128], strides = [1, 1, 1]} : vector<14x18x128xf32> to vector<12x16x128xf32>
    %15 = vector.extract_strided_slice %11 {offsets = [1, 0, 0], sizes = [12, 16, 128], strides = [1, 1, 1]} : vector<14x18x128xf32> to vector<12x16x128xf32>
    %16 = vector.extract_strided_slice %11 {offsets = [1, 1, 0], sizes = [12, 16, 128], strides = [1, 1, 1]} : vector<14x18x128xf32> to vector<12x16x128xf32>
    %17 = vector.extract_strided_slice %11 {offsets = [1, 2, 0], sizes = [12, 16, 128], strides = [1, 1, 1]} : vector<14x18x128xf32> to vector<12x16x128xf32>
    %18 = vector.extract_strided_slice %11 {offsets = [2, 0, 0], sizes = [12, 16, 128], strides = [1, 1, 1]} : vector<14x18x128xf32> to vector<12x16x128xf32>
    %19 = vector.extract_strided_slice %11 {offsets = [2, 1, 0], sizes = [12, 16, 128], strides = [1, 1, 1]} : vector<14x18x128xf32> to vector<12x16x128xf32>
    %20 = vector.extract_strided_slice %11 {offsets = [2, 2, 0], sizes = [12, 16, 128], strides = [1, 1, 1]} : vector<14x18x128xf32> to vector<12x16x128xf32>
    %21 = tpu.concatenate %12, %13, %14, %15, %16, %17, %18, %19, %20 in 2 : vector<12x16x128xf32>, vector<12x16x128xf32>, vector<12x16x128xf32>, vector<12x16x128xf32>, vector<12x16x128xf32>, vector<12x16x128xf32>, vector<12x16x128xf32>, vector<12x16x128xf32>, vector<12x16x128xf32> -> vector<12x16x1152xf32>
    %22 = vector.shape_cast %21 : vector<12x16x1152xf32> to vector<192x1152xf32>
    %c0_6 = arith.constant 0 : index
    %c0_7 = arith.constant 0 : index
    %23 = vector.load %arg3[%c0_6, %c0_7] : memref<1152x128xf32, #tpu.memory_space<vmem>>, vector<1152x128xf32>
    %cst = arith.constant dense<0.000000e+00> : vector<192x128xf32>
    %24 = tpu.matmul %22, %23, %cst {dimension_numbers = #tpu.dot_dimension_numbers<[1], [0], [0], [1], [0, 0, 1, 1], [], []>} : vector<192x1152xf32>, vector<1152x128xf32>, vector<192x128xf32> -> vector<192x128xf32>
    %c0_8 = arith.constant 0 : index
    %c0_9 = arith.constant 0 : index
    %25 = vector.load %arg4[%c0_8, %c0_9] : memref<1x128xf32, #tpu.memory_space<vmem>>, vector<1x128xf32>
    %26 = vector.broadcast %25 : vector<1x128xf32> to vector<192x128xf32>
    %27 = arith.addf %24, %26 : vector<192x128xf32>
    %cst_10 = arith.constant 0.000000e+00 : f32
    %28 = vector.broadcast %cst_10 : f32 to vector<192x128xf32>
    %29 = arith.maximumf %27, %28 : vector<192x128xf32>
    %30 = tpu.iota {dimensions = array<i32: 0>} : vector<192x1xi32>
    %c16_i32 = arith.constant 16 : i32
    %c0_i32 = arith.constant 0 : i32
    %31 = arith.cmpi eq, %c16_i32, %c0_i32 : i32
    %c1_i32 = arith.constant 1 : i32
    %32 = arith.select %31, %c1_i32, %c16_i32 : i32
    %33 = vector.broadcast %32 : i32 to vector<192x1xi32>
    %34 = arith.remsi %30, %33 : vector<192x1xi32>
    %c0_i32_11 = arith.constant 0 : i32
    %35 = vector.broadcast %c0_i32_11 : i32 to vector<192x1xi32>
    %36 = arith.cmpi ne, %34, %35 : vector<192x1xi32>
    %c0_i32_12 = arith.constant 0 : i32
    %37 = vector.broadcast %c0_i32_12 : i32 to vector<192x1xi32>
    %38 = arith.cmpi slt, %34, %37 : vector<192x1xi32>
    %c0_i32_13 = arith.constant 0 : i32
    %39 = arith.cmpi slt, %32, %c0_i32_13 : i32
    %40 = vector.broadcast %39 : i1 to vector<192x1xi1>
    %41 = vector.broadcast %40 : vector<192x1xi1> to vector<192x1xi1>
    %42 = arith.xori %38, %41 : vector<192x1xi1>
    %43 = arith.andi %42, %36 : vector<192x1xi1>
    %44 = vector.broadcast %32 : i32 to vector<192x1xi32>
    %45 = arith.addi %34, %44 : vector<192x1xi32>
    %46 = arith.select %43, %45, %34 : vector<192x1xi1>, vector<192x1xi32>
    %c12_i32_14 = arith.constant 12 : i32
    %47 = vector.broadcast %c12_i32_14 : i32 to vector<192x1xi32>
    %48 = arith.cmpi slt, %46, %47 : vector<192x1xi32>
    %cst_15 = arith.constant 0.000000e+00 : f32
    %49 = vector.shape_cast %48 : vector<192x1xi1> to vector<192x1xi1>
    %50 = vector.broadcast %49 : vector<192x1xi1> to vector<192x128xi1>
    %51 = vector.broadcast %cst_15 : f32 to vector<192x128xf32>
    %52 = arith.select %50, %29, %51 : vector<192x128xi1>, vector<192x128xf32>
    %cst_16 = arith.constant dense<0.000000e+00> : vector<128xf32>
    %53 = vector.multi_reduction <add>, %52, %cst_16 [0] : vector<192x128xf32> to vector<128xf32>
    %54 = vector.shape_cast %53 : vector<128xf32> to vector<1x128xf32>
    %55 = arith.mulf %52, %52 : vector<192x128xf32>
    %cst_17 = arith.constant dense<0.000000e+00> : vector<128xf32>
    %56 = vector.multi_reduction <add>, %55, %cst_17 [0] : vector<192x128xf32> to vector<128xf32>
    %57 = vector.shape_cast %56 : vector<128xf32> to vector<1x128xf32>
    %58 = tpu.iota {dimensions = array<i32: 0>} : vector<8x128xi32>
    %c0_i32_18 = arith.constant 0 : i32
    %59 = vector.broadcast %c0_i32_18 : i32 to vector<8x128xi32>
    %60 = arith.cmpi eq, %58, %59 : vector<8x128xi32>
    %cst_19 = arith.constant 0.000000e+00 : f32
    %61 = vector.shape_cast %54 : vector<1x128xf32> to vector<1x128xf32>
    %62 = vector.broadcast %61 : vector<1x128xf32> to vector<8x128xf32>
    %63 = vector.broadcast %cst_19 : f32 to vector<8x128xf32>
    %64 = arith.select %60, %62, %63 : vector<8x128xi1>, vector<8x128xf32>
    %c1_i32_20 = arith.constant 1 : i32
    %65 = vector.broadcast %c1_i32_20 : i32 to vector<8x128xi32>
    %66 = arith.cmpi eq, %58, %65 : vector<8x128xi32>
    %cst_21 = arith.constant 0.000000e+00 : f32
    %67 = vector.shape_cast %57 : vector<1x128xf32> to vector<1x128xf32>
    %68 = vector.broadcast %67 : vector<1x128xf32> to vector<8x128xf32>
    %69 = vector.broadcast %cst_21 : f32 to vector<8x128xf32>
    %70 = arith.select %66, %68, %69 : vector<8x128xi1>, vector<8x128xf32>
    %71 = arith.addf %64, %70 : vector<8x128xf32>
    %c0_22 = arith.constant 0 : index
    %c0_23 = arith.constant 0 : index
    %c0_24 = arith.constant 0 : index
    %c0_25 = arith.constant 0 : index
    %72 = vector.load %arg8[%c0_22, %c0_23, %c0_24, %c0_25] : memref<1x1x8x128xf32, #tpu.memory_space<vmem>>, vector<1x1x8x128xf32>
    %73 = vector.shape_cast %72 : vector<1x1x8x128xf32> to vector<8x128xf32>
    %74 = vector.shape_cast %71 : vector<8x128xf32> to vector<1x1x8x128xf32>
    tpu.vector_store %arg8[%c0_22, %c0_23, %c0_24, %c0_25], %74 {strides = array<i32>} : memref<1x1x8x128xf32, #tpu.memory_space<vmem>>, vector<1x1x8x128xf32>,
    %75 = vector.shape_cast %29 : vector<192x128xf32> to vector<12x16x128xf32>
    %76 = vector.extract_strided_slice %75 {offsets = [0, 0, 0], sizes = [12, 12, 128], strides = [1, 1, 1]} : vector<12x16x128xf32> to vector<12x12x128xf32>
    %c0_26 = arith.constant 0 : index
    %c0_27 = arith.constant 0 : index
    %c0_28 = arith.constant 0 : index
    %c0_29 = arith.constant 0 : index
    %77 = vector.load %arg7[%c0_26, %c0_27, %c0_28, %c0_29] : memref<1x12x12x128xf32, #tpu.memory_space<vmem>>, vector<1x12x12x128xf32>
    %78 = vector.shape_cast %77 : vector<1x12x12x128xf32> to vector<12x12x128xf32>
    %79 = vector.shape_cast %76 : vector<12x12x128xf32> to vector<1x12x12x128xf32>
    tpu.vector_store %arg7[%c0_26, %c0_27, %c0_28, %c0_29], %79 {strides = array<i32>} : memref<1x12x12x128xf32, #tpu.memory_space<vmem>>, vector<1x12x12x128xf32>,
    return
  }
  func.func @transform_0(%arg0: i32, %arg1: i32) -> (i32, i32, i32, i32) {
    %c0_i32 = arith.constant 0 : i32
    %c0_i32_0 = arith.constant 0 : i32
    %c0_i32_1 = arith.constant 0 : i32
    %c0_i32_2 = arith.constant 0 : i32
    return %arg0, %c0_i32, %c0_i32_0, %c0_i32_1 : i32, i32, i32, i32
  }
  func.func @transform_1(%arg0: i32, %arg1: i32) -> (i32, i32) {
    %c0_i32 = arith.constant 0 : i32
    %c0_i32_0 = arith.constant 0 : i32
    %c0_i32_1 = arith.constant 0 : i32
    return %c0_i32, %c0_i32_0 : i32, i32
  }
  func.func @transform_2(%arg0: i32, %arg1: i32) -> (i32, i32) {
    %c0_i32 = arith.constant 0 : i32
    %c0_i32_0 = arith.constant 0 : i32
    %c0_i32_1 = arith.constant 0 : i32
    return %c0_i32, %c0_i32_0 : i32, i32
  }
  func.func @transform_3(%arg0: i32, %arg1: i32) -> (i32, i32) {
    %c0_i32 = arith.constant 0 : i32
    %c0_i32_0 = arith.constant 0 : i32
    %c0_i32_1 = arith.constant 0 : i32
    return %c0_i32, %c0_i32_0 : i32, i32
  }
  func.func @transform_4(%arg0: i32, %arg1: i32) -> (i32, i32) {
    %c0_i32 = arith.constant 0 : i32
    %c0_i32_0 = arith.constant 0 : i32
    %c0_i32_1 = arith.constant 0 : i32
    return %c0_i32, %c0_i32_0 : i32, i32
  }
  func.func @transform_5(%arg0: i32, %arg1: i32) -> (i32, i32, i32, i32) {
    %c0_i32 = arith.constant 0 : i32
    %c0_i32_0 = arith.constant 0 : i32
    %c0_i32_1 = arith.constant 0 : i32
    return %arg0, %arg1, %c0_i32, %c0_i32_0 : i32, i32, i32, i32
  }
  func.func @transform_6(%arg0: i32, %arg1: i32) -> (i32, i32, i32, i32) {
    %c0_i32 = arith.constant 0 : i32
    %c0_i32_0 = arith.constant 0 : i32
    %c0_i32_1 = arith.constant 0 : i32
    return %arg0, %arg1, %c0_i32, %c0_i32_0 : i32, i32, i32, i32
  }
}

module attributes {stable_mosaic.version = 11 : i64} {
  func.func @_bn_apply_kernel(%arg0: i32, %arg1: memref<1x12x12x128xf32, #tpu.memory_space<vmem>>, %arg2: memref<1x128xf32, #tpu.memory_space<vmem>>, %arg3: memref<1x128xf32, #tpu.memory_space<vmem>>, %arg4: memref<1x12x12x128xf32, #tpu.memory_space<vmem>>) attributes {dimension_semantics = [#tpu.dimension_semantics<parallel>], iteration_bounds = array<i64: 2>, scalar_prefetch = 0 : i64, scratch_operands = 0 : i64, tpu.core_type = #tpu.core_type<tc>, window_params = [{transform_indices = @transform_0, window_bounds = array<i64: 1, 12, 12, 128>}, {pipeline_mode = #tpu.pipeline_mode<synchronous>, transform_indices = @transform_1, window_bounds = array<i64: 1, 128>}, {pipeline_mode = #tpu.pipeline_mode<synchronous>, transform_indices = @transform_2, window_bounds = array<i64: 1, 128>}, {transform_indices = @transform_3, window_bounds = array<i64: 1, 12, 12, 128>}]} {
    %c0 = arith.constant 0 : index
    %c0_0 = arith.constant 0 : index
    %0 = vector.load %arg2[%c0, %c0_0] : memref<1x128xf32, #tpu.memory_space<vmem>>, vector<1x128xf32>
    %1 = vector.shape_cast %0 : vector<1x128xf32> to vector<1x1x1x128xf32>
    %c0_1 = arith.constant 0 : index
    %c0_2 = arith.constant 0 : index
    %2 = vector.load %arg3[%c0_1, %c0_2] : memref<1x128xf32, #tpu.memory_space<vmem>>, vector<1x128xf32>
    %3 = vector.shape_cast %2 : vector<1x128xf32> to vector<1x1x1x128xf32>
    %c0_3 = arith.constant 0 : index
    %c0_4 = arith.constant 0 : index
    %c0_5 = arith.constant 0 : index
    %c0_6 = arith.constant 0 : index
    %4 = vector.load %arg1[%c0_3, %c0_4, %c0_5, %c0_6] : memref<1x12x12x128xf32, #tpu.memory_space<vmem>>, vector<1x12x12x128xf32>
    %5 = vector.broadcast %1 : vector<1x1x1x128xf32> to vector<1x12x12x128xf32>
    %6 = arith.mulf %4, %5 : vector<1x12x12x128xf32>
    %7 = vector.broadcast %3 : vector<1x1x1x128xf32> to vector<1x12x12x128xf32>
    %8 = arith.addf %6, %7 : vector<1x12x12x128xf32>
    %c0_7 = arith.constant 0 : index
    %c0_8 = arith.constant 0 : index
    %c0_9 = arith.constant 0 : index
    %c0_10 = arith.constant 0 : index
    %9 = vector.load %arg4[%c0_7, %c0_8, %c0_9, %c0_10] : memref<1x12x12x128xf32, #tpu.memory_space<vmem>>, vector<1x12x12x128xf32>
    tpu.vector_store %arg4[%c0_7, %c0_8, %c0_9, %c0_10], %8 {strides = array<i32>} : memref<1x12x12x128xf32, #tpu.memory_space<vmem>>, vector<1x12x12x128xf32>,
    return
  }
  func.func @transform_0(%arg0: i32) -> (i32, i32, i32, i32) {
    %c0_i32 = arith.constant 0 : i32
    %c0_i32_0 = arith.constant 0 : i32
    %c0_i32_1 = arith.constant 0 : i32
    %c0_i32_2 = arith.constant 0 : i32
    return %arg0, %c0_i32, %c0_i32_0, %c0_i32_1 : i32, i32, i32, i32
  }
  func.func @transform_1(%arg0: i32) -> (i32, i32) {
    %c0_i32 = arith.constant 0 : i32
    %c0_i32_0 = arith.constant 0 : i32
    %c0_i32_1 = arith.constant 0 : i32
    return %c0_i32, %c0_i32_0 : i32, i32
  }
  func.func @transform_2(%arg0: i32) -> (i32, i32) {
    %c0_i32 = arith.constant 0 : i32
    %c0_i32_0 = arith.constant 0 : i32
    %c0_i32_1 = arith.constant 0 : i32
    return %c0_i32, %c0_i32_0 : i32, i32
  }
  func.func @transform_3(%arg0: i32) -> (i32, i32, i32, i32) {
    %c0_i32 = arith.constant 0 : i32
    %c0_i32_0 = arith.constant 0 : i32
    %c0_i32_1 = arith.constant 0 : i32
    %c0_i32_2 = arith.constant 0 : i32
    return %arg0, %c0_i32, %c0_i32_0, %c0_i32_1 : i32, i32, i32, i32
  }
}

</mosaic_0001>

<llo_original>
// kernel: conv3x3_forward.5
$region0: #{conv3x3_forward.5}
  #allocation0 [shape = 'u32[]', space=smem, size = 0x4, offset = 0x4, fixed_abs, tag = 'smem constant byte address 0x4 - core index']
  #allocation1 [shape = 'u32[144,128]{1,0:T(1,128)}', space=vmem, size = 0x12000, scoped, tag = 'internal scratch']
  %s0 = inlined_call_operand.vmem [shape: f32[2,12,12,128], index: 0, kind: input, shape index: {}]
  %s1 = inlined_call_operand.vmem [shape: f32[1,128], index: 1, kind: input, shape index: {}]
  %s2 = inlined_call_operand.vmem [shape: f32[1,128], index: 2, kind: input, shape index: {}]
  %s3 = inlined_call_operand.vmem [shape: f32[2,12,12,128], index: 3, kind: output, shape index: {}]
  %s4 = sld [smem:[#allocation0]]
  $region45: #{conv3x3_forward.5} parent=0
    _
  %s6 = ssub.s32 1, %s4
  %s7 = scalar_select 0, %s6, %s4
  loop: start=0, step=1, limit=4
  $region2: #{conv3x3_forward.5} parent=0 // loop_pre_header
    _
  $region3: #{conv3x3_forward.5} parent=0 // loop_header
    %s9 = sphi 0, %s13
    %p10 = scmp.ge.s32.totalorder %s9, 4
    %s19 = sphi 0, %s21
    %s22 = sphi 0, %s19
    %s23 = sphi 0, %s22
    %s39 = sphi 0, %s23
    %s43 = sphi 0, %s43
    %s45 = sphi 0, %s43
    %s46 = sphi 0, %s45
    %s60 = sphi 0, %s46
    %s64 = sphi 0, %s64
    %s66 = sphi 0, %s64
    %s67 = sphi 0, %s66
    %s81 = sphi 0, %s67
    %s87 = sphi 0, %s89
    %s90 = sphi 0, %s87
    %s91 = sphi 0, %s90
    %s107 = sphi 0, %s91
  $region4: #{conv3x3_forward.5} parent=0 // loop_header_branch
    %12 = sbr.rel (%p10) target = $region8
  $region5: #{conv3x3_forward.5} parent=0 // loop_body
    %s14 = ssub.s32 %s9, 1
    %s15 = ssub.s32 %s9, 2
    %s16 = sadd.s32 %s9, 1
    %s17 = ssub.s32 %s9, %s16
    %p18 = scmp.eq.s32.totalorder %s17, 0
    %s20 = sadd.s32 %s19, 1
    %s21 = scalar_select %p18, %s19, %s20
    %p24 = pneg %p18
    %p25 = scmp.eq.s32.totalorder %s9, 1
    %p26 = por %p24, %p25
    %p27 = scmp.ne.s32.totalorder %s19, %s22
    %p28 = scmp.eq.s32.totalorder %s9, 0
    %p29 = por %p27, %p28
    %p30 = scmp.ne.s32.totalorder %s19, %s22
    %p31 = scmp.eq.s32.totalorder %s14, 1
    %p32 = por %p30, %p31
    %p33 = scmp.ne.s32.totalorder %s22, %s23
    %p34 = scmp.eq.s32.totalorder %s14, 0
    %p35 = por %p33, %p34
    %p36 = scmp.ne.s32.totalorder %s22, %s23
    %p37 = scmp.eq.s32.totalorder %s15, 1
    %p38 = por %p36, %p37
    %p40 = scmp.ne.s32.totalorder %s23, %s39
    %p41 = scmp.eq.s32.totalorder %s15, 0
    %p42 = por %p40, %p41
    %s44 = sadd.s32 %s43, 1
    %p47 = scmp.eq.s32.totalorder %s9, 1
    %p48 = scmp.ne.s32.totalorder %s43, %s45
    %p49 = scmp.eq.s32.totalorder %s9, 0
    %p50 = por %p48, %p49
    %p51 = scmp.ne.s32.totalorder %s43, %s45
    %p52 = scmp.eq.s32.totalorder %s14, 1
    %p53 = por %p51, %p52
    %p54 = scmp.ne.s32.totalorder %s45, %s46
    %p55 = scmp.eq.s32.totalorder %s14, 0
    %p56 = por %p54, %p55
    %p57 = scmp.ne.s32.totalorder %s45, %s46
    %p58 = scmp.eq.s32.totalorder %s15, 1
    %p59 = por %p57, %p58
    %p61 = scmp.ne.s32.totalorder %s46, %s60
    %p62 = scmp.eq.s32.totalorder %s15, 0
    %p63 = por %p61, %p62
    %s65 = sadd.s32 %s64, 1
    %p68 = scmp.eq.s32.totalorder %s9, 1
    %p69 = scmp.ne.s32.totalorder %s64, %s66
    %p70 = scmp.eq.s32.totalorder %s9, 0
    %p71 = por %p69, %p70
    %p72 = scmp.ne.s32.totalorder %s64, %s66
    %p73 = scmp.eq.s32.totalorder %s14, 1
    %p74 = por %p72, %p73
    %p75 = scmp.ne.s32.totalorder %s66, %s67
    %p76 = scmp.eq.s32.totalorder %s14, 0
    %p77 = por %p75, %p76
    %p78 = scmp.ne.s32.totalorder %s66, %s67
    %p79 = scmp.eq.s32.totalorder %s15, 1
    %p80 = por %p78, %p79
    %p82 = scmp.ne.s32.totalorder %s67, %s81
    %p83 = scmp.eq.s32.totalorder %s15, 0
    %p84 = por %p82, %p83
    %s85 = ssub.s32 %s9, %s16
    %p86 = scmp.eq.s32.totalorder %s85, 0
    %s88 = sadd.s32 %s87, 1
    %s89 = scalar_select %p86, %s87, %s88
    %p92 = pneg %p86
    %p93 = scmp.eq.s32.totalorder %s9, 1
    %p94 = por %p92, %p93
    %p95 = scmp.ne.s32.totalorder %s87, %s90
    %p96 = scmp.eq.s32.totalorder %s9, 0
    %p97 = por %p95, %p96
    %p98 = scmp.ne.s32.totalorder %s87, %s90
    %p99 = scmp.eq.s32.totalorder %s14, 1
    %p100 = por %p98, %p99
    %p101 = scmp.ne.s32.totalorder %s90, %s91
    %p102 = scmp.eq.s32.totalorder %s14, 0
    %p103 = por %p101, %p102
    %p104 = scmp.ne.s32.totalorder %s90, %s91
    %p105 = scmp.eq.s32.totalorder %s15, 1
    %p106 = por %p104, %p105
    %p108 = scmp.ne.s32.totalorder %s91, %s107
    %p109 = scmp.eq.s32.totalorder %s15, 0
    %p110 = por %p108, %p109
    %p111 = scmp.le.s32.totalorder 1, %s9
    %p112 = scmp.lt.s32.totalorder %s9, 3
    %p113 = pnand %p111, %p112
    %p114 = pneg %p113
    // Predicated region
    $region9: #{conv3x3_forward.5} parent=5 // pred_check
      _
    $region10: #{conv3x3_forward.5} parent=5 // pred_check_branch
      %116 = sbr.rel (%p113) target = $region12
    $region11: #{conv3x3_forward.5} parent=5 // pred_region
      %s117 = ssub.s32 %s9, 1
      // Predicated region
      $region13: #{conv3x3_forward.5} parent=11 // pred_check
        %p118 = pneg %p56
      $region14: #{conv3x3_forward.5} parent=11 // pred_check_branch
        %120 = sbr.rel (%p118) target = $region16
      $region15: #{conv3x3_forward.5} parent=11 // pred_region
        _
      $region16: #{conv3x3_forward.5} parent=11 // pred_fallthru
        _
      // Predicated region
      $region17: #{conv3x3_forward.5} parent=11 // pred_check
        %p121 = pneg %p77
      $region18: #{conv3x3_forward.5} parent=11 // pred_check_branch
        %123 = sbr.rel (%p121) target = $region20
      $region19: #{conv3x3_forward.5} parent=11 // pred_region
        _
      $region20: #{conv3x3_forward.5} parent=11 // pred_fallthru
        _
    $region12: #{conv3x3_forward.5} parent=5 // pred_fallthru
      _
    %p124 = scmp.lt.s32.totalorder %s9, 2
    // Predicated region
    $region21: #{conv3x3_forward.5} parent=5 // pred_check
      %p125 = pneg %p124
    $region22: #{conv3x3_forward.5} parent=5 // pred_check_branch
      %127 = sbr.rel (%p125) target = $region24
    $region23: #{conv3x3_forward.5} parent=5 // pred_region
      // Predicated region
      $region25: #{conv3x3_forward.5} parent=23 // pred_check
        %p128 = pneg %p29
      $region26: #{conv3x3_forward.5} parent=23 // pred_check_branch
        %130 = sbr.rel (%p128) target = $region28
      $region27: #{conv3x3_forward.5} parent=23 // pred_region
        %p131 = scmp.lt.s32.totalorder %s9, 1
        %s132 = scalar_select %p131, %s9, 1
        %s133 = smul.addr %s132, 24
        %s134 = smul.addr %s133, 8
        %s135 = scalar_lea.vmem %s0, %s134
      $region28: #{conv3x3_forward.5} parent=23 // pred_fallthru
        _
    $region24: #{conv3x3_forward.5} parent=5 // pred_fallthru
      _
    %p136 = scmp.le.s32.totalorder 1, %s9
    %p137 = scmp.lt.s32.totalorder %s9, 3
    %p138 = pnand %p136, %p137
    %p139 = pneg %p138
    // Predicated region
    $region29: #{conv3x3_forward.5} parent=5 // pred_check
      _
    $region30: #{conv3x3_forward.5} parent=5 // pred_check_branch
      %141 = sbr.rel (%p138) target = $region32
    $region31: #{conv3x3_forward.5} parent=5 // pred_region
      %s142 = ssub.s32 %s9, 1
      %p143 = scmp.lt.s32.totalorder %s14, 1
      %s144 = scalar_select %p143, %s14, 1
      %s145 = smul.addr %s144, 24
      %s146 = smul.addr %s145, 8
      %s147 = scalar_lea.vmem %s0, %s146
      %p148 = pneg %p35
      %p149 = pneg %p32
      %p150 = pneg %p56
      %p151 = pneg %p53
      %p152 = pneg %p77
      %p153 = pneg %p74
      %p154 = pneg %p103
      %p155 = pneg %p100
      %p156 = scmp.lt.s32.totalorder %s14, 1
      %s157 = scalar_select %p156, %s14, 1
      %s158 = smul.addr %s157, 24
      %s159 = smul.addr %s158, 8
      %s160 = scalar_lea.vmem %s3, %s159
      %p161 = scmp.lt.s32.totalorder %s14, 1
      %s162 = scalar_select %p161, %s14, 1
      %s163 = smul.addr %s162, 24
      %s164 = smul.addr %s163, 8
      %s165 = scalar_lea.vmem %s0, %s164
      %p166 = scmp.lt.s32.totalorder %s14, 1
      %s167 = scalar_select %p166, %s14, 1
      %s168 = smul.addr %s167, 24
      %s169 = smul.addr %s168, 8
      %s170 = scalar_lea.vmem %s3, %s169
      %v171 = vld [vmem:[%s1] sm:$0x1]
      %v172 = vld [vmem:[%s2] sm:$0x1]
      %v173 = vld [vmem:[%s165] sm:$0xff]
      %v174 = vld [vmem:[%s165 + $0x8] sm:$0xf]
      %v175 = vld [vmem:[%s165 + $0x10] sm:$0xff]
      %v176 = vld [vmem:[%s165 + $0x18] sm:$0xf]
      %v177 = vld [vmem:[%s165 + $0x20] sm:$0xff]
      %v178 = vld [vmem:[%s165 + $0x28] sm:$0xf]
      %v179 = vld [vmem:[%s165 + $0x30] sm:$0xff]
      %v180 = vld [vmem:[%s165 + $0x38] sm:$0xf]
      %v181 = vld [vmem:[%s165 + $0x40] sm:$0xff]
      %v182 = vld [vmem:[%s165 + $0x48] sm:$0xf]
      %v183 = vld [vmem:[%s165 + $0x50] sm:$0xff]
      %v184 = vld [vmem:[%s165 + $0x58] sm:$0xf]
      %v185 = vld [vmem:[%s165 + $0x60] sm:$0xff]
      %v186 = vld [vmem:[%s165 + $0x68] sm:$0xf]
      %v187 = vld [vmem:[%s165 + $0x70] sm:$0xff]
      %v188 = vld [vmem:[%s165 + $0x78] sm:$0xf]
      %v189 = vld [vmem:[%s165 + $0x80] sm:$0xff]
      %v190 = vld [vmem:[%s165 + $0x88] sm:$0xf]
      %v191 = vld [vmem:[%s165 + $0x90] sm:$0xff]
      %v192 = vld [vmem:[%s165 + $0x98] sm:$0xf]
      %v193 = vld [vmem:[%s165 + $0xa0] sm:$0xff]
      %v194 = vld [vmem:[%s165 + $0xa8] sm:$0xf]
      %v195 = vld [vmem:[%s165 + $0xb0] sm:$0xff]
      %v196 = vld [vmem:[%s165 + $0xb8] sm:$0xf]
      %v198 = vlaneseq
      %v199 = vshrl.u32 %v198, 7
      %v200 = vsub.s32 0, %v199
      %v201 = vrot.slane %v171, %v200
      %v203 = vmul.f32 %v173, %v201
      %v204 = vmul.f32 %v174, %v201
      %v205 = vmul.f32 %v175, %v201
      %v206 = vmul.f32 %v176, %v201
      %v207 = vmul.f32 %v177, %v201
      %v208 = vmul.f32 %v178, %v201
      %v209 = vmul.f32 %v179, %v201
      %v210 = vmul.f32 %v180, %v201
      %v211 = vmul.f32 %v181, %v201
      %v212 = vmul.f32 %v182, %v201
      %v213 = vmul.f32 %v183, %v201
      %v214 = vmul.f32 %v184, %v201
      %v215 = vmul.f32 %v185, %v201
      %v216 = vmul.f32 %v186, %v201
      %v217 = vmul.f32 %v187, %v201
      %v218 = vmul.f32 %v188, %v201
      %v219 = vmul.f32 %v189, %v201
      %v220 = vmul.f32 %v190, %v201
      %v221 = vmul.f32 %v191, %v201
      %v222 = vmul.f32 %v192, %v201
      %v223 = vmul.f32 %v193, %v201
      %v224 = vmul.f32 %v194, %v201
      %v225 = vmul.f32 %v195, %v201
      %v226 = vmul.f32 %v196, %v201
      %v228 = vlaneseq
      %v229 = vshrl.u32 %v228, 7
      %v230 = vsub.s32 0, %v229
      %v231 = vrot.slane %v172, %v230
      %v233 = vadd.f32 %v203, %v231
      %v234 = vadd.f32 %v204, %v231
      %v235 = vadd.f32 %v205, %v231
      %v236 = vadd.f32 %v206, %v231
      %v237 = vadd.f32 %v207, %v231
      %v238 = vadd.f32 %v208, %v231
      %v239 = vadd.f32 %v209, %v231
      %v240 = vadd.f32 %v210, %v231
      %v241 = vadd.f32 %v211, %v231
      %v242 = vadd.f32 %v212, %v231
      %v243 = vadd.f32 %v213, %v231
      %v244 = vadd.f32 %v214, %v231
      %v245 = vadd.f32 %v215, %v231
      %v246 = vadd.f32 %v216, %v231
      %v247 = vadd.f32 %v217, %v231
      %v248 = vadd.f32 %v218, %v231
      %v249 = vadd.f32 %v219, %v231
      %v250 = vadd.f32 %v220, %v231
      %v251 = vadd.f32 %v221, %v231
      %v252 = vadd.f32 %v222, %v231
      %v253 = vadd.f32 %v223, %v231
      %v254 = vadd.f32 %v224, %v231
      %v255 = vadd.f32 %v225, %v231
      %v256 = vadd.f32 %v226, %v231
      %257 = vst [vmem:[%s170] sm:$0xff] %v233
      %258 = vst [vmem:[%s170 + $0x8] sm:$0xf] %v234
      %259 = vst [vmem:[%s170 + $0x10] sm:$0xff] %v235
      %260 = vst [vmem:[%s170 + $0x18] sm:$0xf] %v236
      %261 = vst [vmem:[%s170 + $0x20] sm:$0xff] %v237
      %262 = vst [vmem:[%s170 + $0x28] sm:$0xf] %v238
      %263 = vst [vmem:[%s170 + $0x30] sm:$0xff] %v239
      %264 = vst [vmem:[%s170 + $0x38] sm:$0xf] %v240
      %265 = vst [vmem:[%s170 + $0x40] sm:$0xff] %v241
      %266 = vst [vmem:[%s170 + $0x48] sm:$0xf] %v242
      %267 = vst [vmem:[%s170 + $0x50] sm:$0xff] %v243
      %268 = vst [vmem:[%s170 + $0x58] sm:$0xf] %v244
      %269 = vst [vmem:[%s170 + $0x60] sm:$0xff] %v245
      %270 = vst [vmem:[%s170 + $0x68] sm:$0xf] %v246
      %271 = vst [vmem:[%s170 + $0x70] sm:$0xff] %v247
      %272 = vst [vmem:[%s170 + $0x78] sm:$0xf] %v248
      %273 = vst [vmem:[%s170 + $0x80] sm:$0xff] %v249
      %274 = vst [vmem:[%s170 + $0x88] sm:$0xf] %v250
      %275 = vst [vmem:[%s170 + $0x90] sm:$0xff] %v251
      %276 = vst [vmem:[%s170 + $0x98] sm:$0xf] %v252
      %277 = vst [vmem:[%s170 + $0xa0] sm:$0xff] %v253
      %278 = vst [vmem:[%s170 + $0xa8] sm:$0xf] %v254
      %279 = vst [vmem:[%s170 + $0xb0] sm:$0xff] %v255
      %280 = vst [vmem:[%s170 + $0xb8] sm:$0xf] %v256
      %p281 = scmp.lt.s32.totalorder %s14, 1
      %s282 = scalar_select %p281, %s14, 1
      %s283 = smul.addr %s282, 24
      %s284 = smul.addr %s283, 8
      %s285 = scalar_lea.vmem %s3, %s284
      // Predicated region
      $region33: #{conv3x3_forward.5} parent=31 // pred_check
        %p286 = pneg %p100
      $region34: #{conv3x3_forward.5} parent=31 // pred_check_branch
        %288 = sbr.rel (%p286) target = $region36
      $region35: #{conv3x3_forward.5} parent=31 // pred_region
        _
      $region36: #{conv3x3_forward.5} parent=31 // pred_fallthru
        _
    $region32: #{conv3x3_forward.5} parent=5 // pred_fallthru
      _
    %p289 = scmp.le.s32.totalorder 2, %s9
    // Predicated region
    $region37: #{conv3x3_forward.5} parent=5 // pred_check
      %p290 = pneg %p289
    $region38: #{conv3x3_forward.5} parent=5 // pred_check_branch
      %292 = sbr.rel (%p290) target = $region40
    $region39: #{conv3x3_forward.5} parent=5 // pred_region
      %s293 = ssub.s32 %s9, 2
      // Predicated region
      $region41: #{conv3x3_forward.5} parent=39 // pred_check
        %p294 = pneg %p106
      $region42: #{conv3x3_forward.5} parent=39 // pred_check_branch
        %296 = sbr.rel (%p294) target = $region44
      $region43: #{conv3x3_forward.5} parent=39 // pred_region
        %p297 = scmp.lt.s32.totalorder %s15, 1
        %s298 = scalar_select %p297, %s15, 1
        %s299 = smul.addr %s298, 24
        %s300 = smul.addr %s299, 8
        %s301 = scalar_lea.vmem %s3, %s300
      $region44: #{conv3x3_forward.5} parent=39 // pred_fallthru
        _
    $region40: #{conv3x3_forward.5} parent=5 // pred_fallthru
      _
  $region6: #{conv3x3_forward.5} parent=0 // loop_footer
    %s13 = sadd.s32 1, %s9
  $region7: #{conv3x3_forward.5} parent=0 // loop_footer_branch
    %8 = sbr.rel target = $region3
  $region8: #{conv3x3_forward.5} parent=0 // loop_exit
    _

// kernel: conv3x3_forward.4
$region0: #{conv3x3_forward.4}
  #allocation0 [shape = 'u32[]', space=smem, size = 0x4, offset = 0x4, fixed_abs, tag = 'smem constant byte address 0x4 - core index']
  #allocation1 [shape = 'u32[144,128]{1,0:T(1,128)}', space=vmem, size = 0x12000, scoped, tag = 'internal scratch']
  %s0 = inlined_call_operand.vmem [shape: f32[2,14,18,128], index: 0, kind: input, shape index: {}]
  %s1 = inlined_call_operand.vmem [shape: f32[1152,128], index: 1, kind: input, shape index: {}]
  %s2 = inlined_call_operand.vmem [shape: f32[1,128], index: 2, kind: input, shape index: {}]
  %s3 = inlined_call_operand.vmem [shape: f32[1,128], index: 3, kind: input, shape index: {}]
  %s4 = inlined_call_operand.vmem [shape: f32[1,128], index: 4, kind: input, shape index: {}]
  %s5 = inlined_call_operand.vmem [shape: f32[2,12,12,128], index: 5, kind: output, shape index: {0}]
  %s6 = inlined_call_operand.vmem [shape: f32[2,1,8,128], index: 6, kind: output, shape index: {1}]
  %7 = xla_tuple %s5, %s6
  %s8 = sld [smem:[#allocation0]]
  $region61: #{conv3x3_forward.4} parent=0
    _
  %s10 = ssub.s32 1, %s8
  %s11 = scalar_select 0, %s10, %s8
  loop: start=0, step=1, limit=4
  $region2: #{conv3x3_forward.4} parent=0 // loop_pre_header
    _
  $region3: #{conv3x3_forward.4} parent=0 // loop_header
    %s13 = sphi 0, %s17
    %p14 = scmp.ge.s32.totalorder %s13, 4
    %s20 = sphi 0, %s32
    %s21 = sphi 0, %s28
    %s22 = sphi 0, %s20
    %s23 = sphi 0, %s21
    %s24 = sphi 0, %s22
    %s25 = sphi 0, %s23
    %s35 = sphi 0, %s37
    %s38 = sphi 0, %s35
    %s39 = sphi 0, %s38
    %s55 = sphi 0, %s39
    %s59 = sphi 0, %s59
    %s61 = sphi 0, %s59
    %s62 = sphi 0, %s61
    %s76 = sphi 0, %s62
    %s80 = sphi 0, %s80
    %s82 = sphi 0, %s80
    %s83 = sphi 0, %s82
    %s97 = sphi 0, %s83
    %s101 = sphi 0, %s101
    %s103 = sphi 0, %s101
    %s104 = sphi 0, %s103
    %s118 = sphi 0, %s104
    %s122 = sphi 0, %s122
    %s124 = sphi 0, %s122
    %s125 = sphi 0, %s124
    %s139 = sphi 0, %s125
    %s147 = sphi 0, %s149
    %s150 = sphi 0, %s147
    %s151 = sphi 0, %s150
    %s167 = sphi 0, %s151
    %s175 = sphi 0, %s177
    %s178 = sphi 0, %s175
    %s179 = sphi 0, %s178
    %s195 = sphi 0, %s179
  $region4: #{conv3x3_forward.4} parent=0 // loop_header_branch
    %16 = sbr.rel (%p14) target = $region8
  $region5: #{conv3x3_forward.4} parent=0 // loop_body
    %s18 = ssub.s32 %s13, 1
    %s19 = ssub.s32 %s13, 2
    %s26 = sadd.s32 1, %s21
    %p27 = scmp.ge.s32.totalorder %s26, 1
    %s28 = scalar_select %p27, 0, %s26
    %s29 = sadd.s32 1, %s20
    %s30 = scalar_select %p27, %s29, %s20
    %p31 = scmp.ge.s32.totalorder %s30, 2
    %s32 = scalar_select %p31, 0, %s30
    %s33 = ssub.s32 %s20, %s32
    %p34 = scmp.eq.s32.totalorder %s33, 0
    %s36 = sadd.s32 %s35, 1
    %s37 = scalar_select %p34, %s35, %s36
    %p40 = pneg %p34
    %p41 = scmp.eq.s32.totalorder %s13, 1
    %p42 = por %p40, %p41
    %p43 = scmp.ne.s32.totalorder %s35, %s38
    %p44 = scmp.eq.s32.totalorder %s13, 0
    %p45 = por %p43, %p44
    %p46 = scmp.ne.s32.totalorder %s35, %s38
    %p47 = scmp.eq.s32.totalorder %s18, 1
    %p48 = por %p46, %p47
    %p49 = scmp.ne.s32.totalorder %s38, %s39
    %p50 = scmp.eq.s32.totalorder %s18, 0
    %p51 = por %p49, %p50
    %p52 = scmp.ne.s32.totalorder %s38, %s39
    %p53 = scmp.eq.s32.totalorder %s19, 1
    %p54 = por %p52, %p53
    %p56 = scmp.ne.s32.totalorder %s39, %s55
    %p57 = scmp.eq.s32.totalorder %s19, 0
    %p58 = por %p56, %p57
    %s60 = sadd.s32 %s59, 1
    %p63 = scmp.eq.s32.totalorder %s13, 1
    %p64 = scmp.ne.s32.totalorder %s59, %s61
    %p65 = scmp.eq.s32.totalorder %s13, 0
    %p66 = por %p64, %p65
    %p67 = scmp.ne.s32.totalorder %s59, %s61
    %p68 = scmp.eq.s32.totalorder %s18, 1
    %p69 = por %p67, %p68
    %p70 = scmp.ne.s32.totalorder %s61, %s62
    %p71 = scmp.eq.s32.totalorder %s18, 0
    %p72 = por %p70, %p71
    %p73 = scmp.ne.s32.totalorder %s61, %s62
    %p74 = scmp.eq.s32.totalorder %s19, 1
    %p75 = por %p73, %p74
    %p77 = scmp.ne.s32.totalorder %s62, %s76
    %p78 = scmp.eq.s32.totalorder %s19, 0
    %p79 = por %p77, %p78
    %s81 = sadd.s32 %s80, 1
    %p84 = scmp.eq.s32.totalorder %s13, 1
    %p85 = scmp.ne.s32.totalorder %s80, %s82
    %p86 = scmp.eq.s32.totalorder %s13, 0
    %p87 = por %p85, %p86
    %p88 = scmp.ne.s32.totalorder %s80, %s82
    %p89 = scmp.eq.s32.totalorder %s18, 1
    %p90 = por %p88, %p89
    %p91 = scmp.ne.s32.totalorder %s82, %s83
    %p92 = scmp.eq.s32.totalorder %s18, 0
    %p93 = por %p91, %p92
    %p94 = scmp.ne.s32.totalorder %s82, %s83
    %p95 = scmp.eq.s32.totalorder %s19, 1
    %p96 = por %p94, %p95
    %p98 = scmp.ne.s32.totalorder %s83, %s97
    %p99 = scmp.eq.s32.totalorder %s19, 0
    %p100 = por %p98, %p99
    %s102 = sadd.s32 %s101, 1
    %p105 = scmp.eq.s32.totalorder %s13, 1
    %p106 = scmp.ne.s32.totalorder %s101, %s103
    %p107 = scmp.eq.s32.totalorder %s13, 0
    %p108 = por %p106, %p107
    %p109 = scmp.ne.s32.totalorder %s101, %s103
    %p110 = scmp.eq.s32.totalorder %s18, 1
    %p111 = por %p109, %p110
    %p112 = scmp.ne.s32.totalorder %s103, %s104
    %p113 = scmp.eq.s32.totalorder %s18, 0
    %p114 = por %p112, %p113
    %p115 = scmp.ne.s32.totalorder %s103, %s104
    %p116 = scmp.eq.s32.totalorder %s19, 1
    %p117 = por %p115, %p116
    %p119 = scmp.ne.s32.totalorder %s104, %s118
    %p120 = scmp.eq.s32.totalorder %s19, 0
    %p121 = por %p119, %p120
    %s123 = sadd.s32 %s122, 1
    %p126 = scmp.eq.s32.totalorder %s13, 1
    %p127 = scmp.ne.s32.totalorder %s122, %s124
    %p128 = scmp.eq.s32.totalorder %s13, 0
    %p129 = por %p127, %p128
    %p130 = scmp.ne.s32.totalorder %s122, %s124
    %p131 = scmp.eq.s32.totalorder %s18, 1
    %p132 = por %p130, %p131
    %p133 = scmp.ne.s32.totalorder %s124, %s125
    %p134 = scmp.eq.s32.totalorder %s18, 0
    %p135 = por %p133, %p134
    %p136 = scmp.ne.s32.totalorder %s124, %s125
    %p137 = scmp.eq.s32.totalorder %s19, 1
    %p138 = por %p136, %p137
    %p140 = scmp.ne.s32.totalorder %s125, %s139
    %p141 = scmp.eq.s32.totalorder %s19, 0
    %p142 = por %p140, %p141
    %s143 = ssub.s32 %s20, %s32
    %s144 = ssub.s32 %s21, %s28
    %s145 = sor.u32 %s143, %s144
    %p146 = scmp.eq.s32.totalorder %s145, 0
    %s148 = sadd.s32 %s147, 1
    %s149 = scalar_select %p146, %s147, %s148
    %p152 = pneg %p146
    %p153 = scmp.eq.s32.totalorder %s13, 1
    %p154 = por %p152, %p153
    %p155 = scmp.ne.s32.totalorder %s147, %s150
    %p156 = scmp.eq.s32.totalorder %s13, 0
    %p157 = por %p155, %p156
    %p158 = scmp.ne.s32.totalorder %s147, %s150
    %p159 = scmp.eq.s32.totalorder %s18, 1
    %p160 = por %p158, %p159
    %p161 = scmp.ne.s32.totalorder %s150, %s151
    %p162 = scmp.eq.s32.totalorder %s18, 0
    %p163 = por %p161, %p162
    %p164 = scmp.ne.s32.totalorder %s150, %s151
    %p165 = scmp.eq.s32.totalorder %s19, 1
    %p166 = por %p164, %p165
    %p168 = scmp.ne.s32.totalorder %s151, %s167
    %p169 = scmp.eq.s32.totalorder %s19, 0
    %p170 = por %p168, %p169
    %s171 = ssub.s32 %s20, %s32
    %s172 = ssub.s32 %s21, %s28
    %s173 = sor.u32 %s171, %s172
    %p174 = scmp.eq.s32.totalorder %s173, 0
    %s176 = sadd.s32 %s175, 1
    %s177 = scalar_select %p174, %s175, %s176
    %p180 = pneg %p174
    %p181 = scmp.eq.s32.totalorder %s13, 1
    %p182 = por %p180, %p181
    %p183 = scmp.ne.s32.totalorder %s175, %s178
    %p184 = scmp.eq.s32.totalorder %s13, 0
    %p185 = por %p183, %p184
    %p186 = scmp.ne.s32.totalorder %s175, %s178
    %p187 = scmp.eq.s32.totalorder %s18, 1
    %p188 = por %p186, %p187
    %p189 = scmp.ne.s32.totalorder %s178, %s179
    %p190 = scmp.eq.s32.totalorder %s18, 0
    %p191 = por %p189, %p190
    %p192 = scmp.ne.s32.totalorder %s178, %s179
    %p193 = scmp.eq.s32.totalorder %s19, 1
    %p194 = por %p192, %p193
    %p196 = scmp.ne.s32.totalorder %s179, %s195
    %p197 = scmp.eq.s32.totalorder %s19, 0
    %p198 = por %p196, %p197
    %p199 = scmp.le.s32.totalorder 1, %s13
    %p200 = scmp.lt.s32.totalorder %s13, 3
    %p201 = pnand %p199, %p200
    %p202 = pneg %p201
    // Predicated region
    $region9: #{conv3x3_forward.4} parent=5 // pred_check
      _
    $region10: #{conv3x3_forward.4} parent=5 // pred_check_branch
      %204 = sbr.rel (%p201) target = $region12
    $region11: #{conv3x3_forward.4} parent=5 // pred_region
      %s205 = ssub.s32 %s13, 1
      // Predicated region
      $region13: #{conv3x3_forward.4} parent=11 // pred_check
        %p206 = pneg %p72
      $region14: #{conv3x3_forward.4} parent=11 // pred_check_branch
        %208 = sbr.rel (%p206) target = $region16
      $region15: #{conv3x3_forward.4} parent=11 // pred_region
        _
      $region16: #{conv3x3_forward.4} parent=11 // pred_fallthru
        _
      // Predicated region
      $region17: #{conv3x3_forward.4} parent=11 // pred_check
        %p209 = pneg %p93
      $region18: #{conv3x3_forward.4} parent=11 // pred_check_branch
        %211 = sbr.rel (%p209) target = $region20
      $region19: #{conv3x3_forward.4} parent=11 // pred_region
        _
      $region20: #{conv3x3_forward.4} parent=11 // pred_fallthru
        _
      // Predicated region
      $region21: #{conv3x3_forward.4} parent=11 // pred_check
        %p212 = pneg %p114
      $region22: #{conv3x3_forward.4} parent=11 // pred_check_branch
        %214 = sbr.rel (%p212) target = $region24
      $region23: #{conv3x3_forward.4} parent=11 // pred_region
        _
      $region24: #{conv3x3_forward.4} parent=11 // pred_fallthru
        _
      // Predicated region
      $region25: #{conv3x3_forward.4} parent=11 // pred_check
        %p215 = pneg %p135
      $region26: #{conv3x3_forward.4} parent=11 // pred_check_branch
        %217 = sbr.rel (%p215) target = $region28
      $region27: #{conv3x3_forward.4} parent=11 // pred_region
        _
      $region28: #{conv3x3_forward.4} parent=11 // pred_fallthru
        _
    $region12: #{conv3x3_forward.4} parent=5 // pred_fallthru
      _
    %p218 = scmp.lt.s32.totalorder %s13, 2
    // Predicated region
    $region29: #{conv3x3_forward.4} parent=5 // pred_check
      %p219 = pneg %p218
    $region30: #{conv3x3_forward.4} parent=5 // pred_check_branch
      %221 = sbr.rel (%p219) target = $region32
    $region31: #{conv3x3_forward.4} parent=5 // pred_region
      // Predicated region
      $region33: #{conv3x3_forward.4} parent=31 // pred_check
        %p222 = pneg %p45
      $region34: #{conv3x3_forward.4} parent=31 // pred_check_branch
        %224 = sbr.rel (%p222) target = $region36
      $region35: #{conv3x3_forward.4} parent=31 // pred_region
        %p225 = scmp.lt.s32.totalorder %s20, 1
        %s226 = scalar_select %p225, %s20, 1
        %s227 = smul.addr %s226, 42
        %s228 = smul.addr %s227, 8
        %s229 = scalar_lea.vmem %s0, %s228
      $region36: #{conv3x3_forward.4} parent=31 // pred_fallthru
        _
    $region32: #{conv3x3_forward.4} parent=5 // pred_fallthru
      _
    %p230 = scmp.le.s32.totalorder 1, %s13
    %p231 = scmp.lt.s32.totalorder %s13, 3
    %p232 = pnand %p230, %p231
    %p233 = pneg %p232
    // Predicated region
    $region37: #{conv3x3_forward.4} parent=5 // pred_check
      _
    $region38: #{conv3x3_forward.4} parent=5 // pred_check_branch
      %235 = sbr.rel (%p232) target = $region40
    $region39: #{conv3x3_forward.4} parent=5 // pred_region
      %s236 = ssub.s32 %s13, 1
      %p237 = scmp.lt.s32.totalorder %s22, 1
      %s238 = scalar_select %p237, %s22, 1
      %s239 = smul.addr %s238, 42
      %s240 = smul.addr %s239, 8
      %s241 = scalar_lea.vmem %s0, %s240
      %p242 = pneg %p51
      %p243 = pneg %p48
      %p244 = pneg %p72
      %p245 = pneg %p69
      %p246 = pneg %p93
      %p247 = pneg %p90
      %p248 = pneg %p114
      %p249 = pneg %p111
      %p250 = pneg %p135
      %p251 = pneg %p132
      %p252 = pneg %p163
      %p253 = pneg %p160
      %s254 = smul.u32 12, %s23
      %p255 = scmp.lt.s32.totalorder %s22, 1
      %s256 = scalar_select %p255, %s22, 1
      %p257 = scmp.lt.s32.totalorder %s254, 11
      %s258 = scalar_select %p257, %s254, 11
      %s259 = smul.addr %s258, 2
      %s260 = smul.addr %s256, 24
      %s261 = sadd.s32 %s259, %s260
      %s262 = smul.addr %s261, 8
      %s263 = scalar_lea.vmem %s5, %s262
      %p264 = pneg %p191
      %p265 = pneg %p188
      %p266 = scmp.lt.s32.totalorder %s22, 1
      %s267 = scalar_select %p266, %s22, 1
      %p268 = scmp.lt.s32.totalorder %s23, 0
      %s269 = scalar_select %p268, %s23, 0
      %s270 = sadd.s32 %s269, %s267
      %s271 = smul.addr %s270, 8
      %s272 = scalar_lea.vmem %s6, %s271
      %p273 = scmp.lt.s32.totalorder %s22, 1
      %s274 = scalar_select %p273, %s22, 1
      %s275 = smul.addr %s274, 42
      %s276 = smul.addr %s275, 8
      %s277 = scalar_lea.vmem %s0, %s276
      %s278 = smul.u32 12, %s23
      %p279 = scmp.lt.s32.totalorder %s22, 1
      %s280 = scalar_select %p279, %s22, 1
      %p281 = scmp.lt.s32.totalorder %s278, 11
      %s282 = scalar_select %p281, %s278, 11
      %s283 = smul.addr %s282, 2
      %s284 = smul.addr %s280, 24
      %s285 = sadd.s32 %s283, %s284
      %s286 = smul.addr %s285, 8
      %s287 = scalar_lea.vmem %s5, %s286
      %s288 = smul.u32 12, %s23
      %p289 = scmp.lt.s32.totalorder %s22, 1
      %s290 = scalar_select %p289, %s22, 1
      %p291 = scmp.lt.s32.totalorder %s23, 0
      %s292 = scalar_select %p291, %s23, 0
      %s293 = sadd.s32 %s292, %s290
      %s294 = smul.addr %s293, 8
      %s295 = scalar_lea.vmem %s6, %s294
      %s296 = smul.u32 %s23, 12
      %s297 = smul.u32 %s296, 24
      %s298 = scalar_lea.vmem %s277, %s297
      %v299 = vld [vmem:[%s298] sm:$0xff]
      %v300 = vld [vmem:[%s298 + $0x8] sm:$0xff]
      %v301 = vld [vmem:[%s298 + $0x10] sm:$0x3]
      %v302 = vld [vmem:[%s298 + $0x18] sm:$0xff]
      %v303 = vld [vmem:[%s298 + $0x20] sm:$0xff]
      %v304 = vld [vmem:[%s298 + $0x28] sm:$0x3]
      %v305 = vld [vmem:[%s298 + $0x30] sm:$0xff]
      %v306 = vld [vmem:[%s298 + $0x38] sm:$0xff]
      %v307 = vld [vmem:[%s298 + $0x40] sm:$0x3]
      %v308 = vld [vmem:[%s298 + $0x48] sm:$0xff]
      %v309 = vld [vmem:[%s298 + $0x50] sm:$0xff]
      %v310 = vld [vmem:[%s298 + $0x58] sm:$0x3]
      %v311 = vld [vmem:[%s298 + $0x60] sm:$0xff]
      %v312 = vld [vmem:[%s298 + $0x68] sm:$0xff]
      %v313 = vld [vmem:[%s298 + $0x70] sm:$0x3]
      %v314 = vld [vmem:[%s298 + $0x78] sm:$0xff]
      %v315 = vld [vmem:[%s298 + $0x80] sm:$0xff]
      %v316 = vld [vmem:[%s298 + $0x88] sm:$0x3]
      %v317 = vld [vmem:[%s298 + $0x90] sm:$0xff]
      %v318 = vld [vmem:[%s298 + $0x98] sm:$0xff]
      %v319 = vld [vmem:[%s298 + $0xa0] sm:$0x3]
      %v320 = vld [vmem:[%s298 + $0xa8] sm:$0xff]
      %v321 = vld [vmem:[%s298 + $0xb0] sm:$0xff]
      %v322 = vld [vmem:[%s298 + $0xb8] sm:$0x3]
      %v323 = vld [vmem:[%s298 + $0xc0] sm:$0xff]
      %v324 = vld [vmem:[%s298 + $0xc8] sm:$0xff]
      %v325 = vld [vmem:[%s298 + $0xd0] sm:$0x3]
      %v326 = vld [vmem:[%s298 + $0xd8] sm:$0xff]
      %v327 = vld [vmem:[%s298 + $0xe0] sm:$0xff]
      %v328 = vld [vmem:[%s298 + $0xe8] sm:$0x3]
      %v329 = vld [vmem:[%s298 + $0xf0] sm:$0xff]
      %v330 = vld [vmem:[%s298 + $0xf8] sm:$0xff]
      %v331 = vld [vmem:[%s298 + $0x100] sm:$0x3]
      %v332 = vld [vmem:[%s298 + $0x108] sm:$0xff]
      %v333 = vld [vmem:[%s298 + $0x110] sm:$0xff]
      %v334 = vld [vmem:[%s298 + $0x118] sm:$0x3]
      %v335 = vld [vmem:[%s298 + $0x120] sm:$0xff]
      %v336 = vld [vmem:[%s298 + $0x128] sm:$0xff]
      %v337 = vld [vmem:[%s298 + $0x130] sm:$0x3]
      %v338 = vld [vmem:[%s298 + $0x138] sm:$0xff]
      %v339 = vld [vmem:[%s298 + $0x140] sm:$0xff]
      %v340 = vld [vmem:[%s298 + $0x148] sm:$0x3]
      %v341 = vld [vmem:[%s3] sm:$0x1]
      %v342 = vld [vmem:[%s4] sm:$0x1]
      %v344 = vlaneseq
      %v345 = vshrl.u32 %v344, 7
      %v346 = vsub.s32 0, %v345
      %v347 = vrot.slane %v341, %v346
      %v349 = vmul.f32 %v299, %v347
      %v350 = vmul.f32 %v300, %v347
      %v351 = vmul.f32 %v301, %v347
      %v352 = vmul.f32 %v302, %v347
      %v353 = vmul.f32 %v303, %v347
      %v354 = vmul.f32 %v304, %v347
      %v355 = vmul.f32 %v305, %v347
      %v356 = vmul.f32 %v306, %v347
      %v357 = vmul.f32 %v307, %v347
      %v358 = vmul.f32 %v308, %v347
      %v359 = vmul.f32 %v309, %v347
      %v360 = vmul.f32 %v310, %v347
      %v361 = vmul.f32 %v311, %v347
      %v362 = vmul.f32 %v312, %v347
      %v363 = vmul.f32 %v313, %v347
      %v364 = vmul.f32 %v314, %v347
      %v365 = vmul.f32 %v315, %v347
      %v366 = vmul.f32 %v316, %v347
      %v367 = vmul.f32 %v317, %v347
      %v368 = vmul.f32 %v318, %v347
      %v369 = vmul.f32 %v319, %v347
      %v370 = vmul.f32 %v320, %v347
      %v371 = vmul.f32 %v321, %v347
      %v372 = vmul.f32 %v322, %v347
      %v373 = vmul.f32 %v323, %v347
      %v374 = vmul.f32 %v324, %v347
      %v375 = vmul.f32 %v325, %v347
      %v376 = vmul.f32 %v326, %v347
      %v377 = vmul.f32 %v327, %v347
      %v378 = vmul.f32 %v328, %v347
      %v379 = vmul.f32 %v329, %v347
      %v380 = vmul.f32 %v330, %v347
      %v381 = vmul.f32 %v331, %v347
      %v382 = vmul.f32 %v332, %v347
      %v383 = vmul.f32 %v333, %v347
      %v384 = vmul.f32 %v334, %v347
      %v385 = vmul.f32 %v335, %v347
      %v386 = vmul.f32 %v336, %v347
      %v387 = vmul.f32 %v337, %v347
      %v388 = vmul.f32 %v338, %v347
      %v389 = vmul.f32 %v339, %v347
      %v390 = vmul.f32 %v340, %v347
      %v392 = vlaneseq
      %v393 = vshrl.u32 %v392, 7
      %v394 = vsub.s32 0, %v393
      %v395 = vrot.slane %v342, %v394
      %v397 = vadd.f32 %v349, %v395
      %v398 = vadd.f32 %v350, %v395
      %v399 = vadd.f32 %v351, %v395
      %v400 = vadd.f32 %v352, %v395
      %v401 = vadd.f32 %v353, %v395
      %v402 = vadd.f32 %v354, %v395
      %v403 = vadd.f32 %v355, %v395
      %v404 = vadd.f32 %v356, %v395
      %v405 = vadd.f32 %v357, %v395
      %v406 = vadd.f32 %v358, %v395
      %v407 = vadd.f32 %v359, %v395
      %v408 = vadd.f32 %v360, %v395
      %v409 = vadd.f32 %v361, %v395
      %v410 = vadd.f32 %v362, %v395
      %v411 = vadd.f32 %v363, %v395
      %v412 = vadd.f32 %v364, %v395
      %v413 = vadd.f32 %v365, %v395
      %v414 = vadd.f32 %v366, %v395
      %v415 = vadd.f32 %v367, %v395
      %v416 = vadd.f32 %v368, %v395
      %v417 = vadd.f32 %v369, %v395
      %v418 = vadd.f32 %v370, %v395
      %v419 = vadd.f32 %v371, %v395
      %v420 = vadd.f32 %v372, %v395
      %v421 = vadd.f32 %v373, %v395
      %v422 = vadd.f32 %v374, %v395
      %v423 = vadd.f32 %v375, %v395
      %v424 = vadd.f32 %v376, %v395
      %v425 = vadd.f32 %v377, %v395
      %v426 = vadd.f32 %v378, %v395
      %v427 = vadd.f32 %v379, %v395
      %v428 = vadd.f32 %v380, %v395
      %v429 = vadd.f32 %v381, %v395
      %v430 = vadd.f32 %v382, %v395
      %v431 = vadd.f32 %v383, %v395
      %v432 = vadd.f32 %v384, %v395
      %v433 = vadd.f32 %v385, %v395
      %v434 = vadd.f32 %v386, %v395
      %v435 = vadd.f32 %v387, %v395
      %v436 = vadd.f32 %v388, %v395
      %v437 = vadd.f32 %v389, %v395
      %v438 = vadd.f32 %v390, %v395
      %vm475 = vcmask 1046528
      %v476 = vrot.slane %v397, 1
      %v477 = vrot.slane %v398, 1
      %v478 = vsel %vm475, %v476, %v477
      %v479 = vrot.slane %v399, 1
      %v480 = vsel %vm475, %v477, %v479
      %v481 = vrot.slane %v400, 1
      %v482 = vrot.slane %v401, 1
      %v483 = vsel %vm475, %v481, %v482
      %v484 = vrot.slane %v402, 1
      %v485 = vsel %vm475, %v482, %v484
      %v486 = vrot.slane %v403, 1
      %v487 = vrot.slane %v404, 1
      %v488 = vsel %vm475, %v486, %v487
      %v489 = vrot.slane %v405, 1
      %v490 = vsel %vm475, %v487, %v489
      %v491 = vrot.slane %v406, 1
      %v492 = vrot.slane %v407, 1
      %v493 = vsel %vm475, %v491, %v492
      %v494 = vrot.slane %v408, 1
      %v495 = vsel %vm475, %v492, %v494
      %v496 = vrot.slane %v409, 1
      %v497 = vrot.slane %v410, 1
      %v498 = vsel %vm475, %v496, %v497
      %v499 = vrot.slane %v411, 1
      %v500 = vsel %vm475, %v497, %v499
      %v501 = vrot.slane %v412, 1
      %v502 = vrot.slane %v413, 1
      %v503 = vsel %vm475, %v501, %v502
      %v504 = vrot.slane %v414, 1
      %v505 = vsel %vm475, %v502, %v504
      %v506 = vrot.slane %v415, 1
      %v507 = vrot.slane %v416, 1
      %v508 = vsel %vm475, %v506, %v507
      %v509 = vrot.slane %v417, 1
      %v510 = vsel %vm475, %v507, %v509
      %v511 = vrot.slane %v418, 1
      %v512 = vrot.slane %v419, 1
      %v513 = vsel %vm475, %v511, %v512
      %v514 = vrot.slane %v420, 1
      %v515 = vsel %vm475, %v512, %v514
      %v516 = vrot.slane %v421, 1
      %v517 = vrot.slane %v422, 1
      %v518 = vsel %vm475, %v516, %v517
      %v519 = vrot.slane %v423, 1
      %v520 = vsel %vm475, %v517, %v519
      %v521 = vrot.slane %v424, 1
      %v522 = vrot.slane %v425, 1
      %v523 = vsel %vm475, %v521, %v522
      %v524 = vrot.slane %v426, 1
      %v525 = vsel %vm475, %v522, %v524
      %v526 = vrot.slane %v427, 1
      %v527 = vrot.slane %v428, 1
      %v528 = vsel %vm475, %v526, %v527
      %v529 = vrot.slane %v429, 1
      %v530 = vsel %vm475, %v527, %v529
      %v531 = vrot.slane %v430, 1
      %v532 = vrot.slane %v431, 1
      %v533 = vsel %vm475, %v531, %v532
      %v534 = vrot.slane %v432, 1
      %v535 = vsel %vm475, %v532, %v534
      %vm560 = vcmask 1045504
      %v561 = vrot.slane %v397, 2
      %v562 = vrot.slane %v398, 2
      %v563 = vsel %vm560, %v561, %v562
      %v564 = vrot.slane %v399, 2
      %v565 = vsel %vm560, %v562, %v564
      %v566 = vrot.slane %v400, 2
      %v567 = vrot.slane %v401, 2
      %v568 = vsel %vm560, %v566, %v567
      %v569 = vrot.slane %v402, 2
      %v570 = vsel %vm560, %v567, %v569
      %v571 = vrot.slane %v403, 2
      %v572 = vrot.slane %v404, 2
      %v573 = vsel %vm560, %v571, %v572
      %v574 = vrot.slane %v405, 2
      %v575 = vsel %vm560, %v572, %v574
      %v576 = vrot.slane %v406, 2
      %v577 = vrot.slane %v407, 2
      %v578 = vsel %vm560, %v576, %v577
      %v579 = vrot.slane %v408, 2
      %v580 = vsel %vm560, %v577, %v579
      %v581 = vrot.slane %v409, 2
      %v582 = vrot.slane %v410, 2
      %v583 = vsel %vm560, %v581, %v582
      %v584 = vrot.slane %v411, 2
      %v585 = vsel %vm560, %v582, %v584
      %v586 = vrot.slane %v412, 2
      %v587 = vrot.slane %v413, 2
      %v588 = vsel %vm560, %v586, %v587
      %v589 = vrot.slane %v414, 2
      %v590 = vsel %vm560, %v587, %v589
      %v591 = vrot.slane %v415, 2
      %v592 = vrot.slane %v416, 2
      %v593 = vsel %vm560, %v591, %v592
      %v594 = vrot.slane %v417, 2
      %v595 = vsel %vm560, %v592, %v594
      %v596 = vrot.slane %v418, 2
      %v597 = vrot.slane %v419, 2
      %v598 = vsel %vm560, %v596, %v597
      %v599 = vrot.slane %v420, 2
      %v600 = vsel %vm560, %v597, %v599
      %v601 = vrot.slane %v421, 2
      %v602 = vrot.slane %v422, 2
      %v603 = vsel %vm560, %v601, %v602
      %v604 = vrot.slane %v423, 2
      %v605 = vsel %vm560, %v602, %v604
      %v606 = vrot.slane %v424, 2
      %v607 = vrot.slane %v425, 2
      %v608 = vsel %vm560, %v606, %v607
      %v609 = vrot.slane %v426, 2
      %v610 = vsel %vm560, %v607, %v609
      %v611 = vrot.slane %v427, 2
      %v612 = vrot.slane %v428, 2
      %v613 = vsel %vm560, %v611, %v612
      %v614 = vrot.slane %v429, 2
      %v615 = vsel %vm560, %v612, %v614
      %v616 = vrot.slane %v430, 2
      %v617 = vrot.slane %v431, 2
      %v618 = vsel %vm560, %v616, %v617
      %v619 = vrot.slane %v432, 2
      %v620 = vsel %vm560, %v617, %v619
      %v648 = vrot.slane %v433, 1
      %v649 = vrot.slane %v434, 1
      %v650 = vsel %vm475, %v648, %v649
      %v651 = vrot.slane %v435, 1
      %v652 = vsel %vm475, %v649, %v651
      %v655 = vrot.slane %v433, 2
      %v656 = vrot.slane %v434, 2
      %v657 = vsel %vm560, %v655, %v656
      %v658 = vrot.slane %v435, 2
      %v659 = vsel %vm560, %v656, %v658
      %v665 = vrot.slane %v436, 1
      %v666 = vrot.slane %v437, 1
      %v667 = vsel %vm475, %v665, %v666
      %v668 = vrot.slane %v438, 1
      %v669 = vsel %vm475, %v666, %v668
      %v672 = vrot.slane %v436, 2
      %v673 = vrot.slane %v437, 2
      %v674 = vsel %vm560, %v672, %v673
      %v675 = vrot.slane %v438, 2
      %v676 = vsel %vm560, %v673, %v675
      %v679 = vld [vmem:[%s1] sm:$0xff]
      %v680 = vld [vmem:[%s1 + $0x8] sm:$0xff]
      %v681 = vld [vmem:[%s1 + $0x10] sm:$0xff]
      %v682 = vld [vmem:[%s1 + $0x18] sm:$0xff]
      %v683 = vld [vmem:[%s1 + $0x20] sm:$0xff]
      %v684 = vld [vmem:[%s1 + $0x28] sm:$0xff]
      %v685 = vld [vmem:[%s1 + $0x30] sm:$0xff]
      %v686 = vld [vmem:[%s1 + $0x38] sm:$0xff]
      %v687 = vld [vmem:[%s1 + $0x40] sm:$0xff]
      %v688 = vld [vmem:[%s1 + $0x48] sm:$0xff]
      %v689 = vld [vmem:[%s1 + $0x50] sm:$0xff]
      %v690 = vld [vmem:[%s1 + $0x58] sm:$0xff]
      %v691 = vld [vmem:[%s1 + $0x60] sm:$0xff]
      %v692 = vld [vmem:[%s1 + $0x68] sm:$0xff]
      %v693 = vld [vmem:[%s1 + $0x70] sm:$0xff]
      %v694 = vld [vmem:[%s1 + $0x78] sm:$0xff]
      %v695 = vld [vmem:[%s1 + $0x80] sm:$0xff]
      %v696 = vld [vmem:[%s1 + $0x88] sm:$0xff]
      %v697 = vld [vmem:[%s1 + $0x90] sm:$0xff]
      %v698 = vld [vmem:[%s1 + $0x98] sm:$0xff]
      %v699 = vld [vmem:[%s1 + $0xa0] sm:$0xff]
      %v700 = vld [vmem:[%s1 + $0xa8] sm:$0xff]
      %v701 = vld [vmem:[%s1 + $0xb0] sm:$0xff]
      %v702 = vld [vmem:[%s1 + $0xb8] sm:$0xff]
      %v703 = vld [vmem:[%s1 + $0xc0] sm:$0xff]
      %v704 = vld [vmem:[%s1 + $0xc8] sm:$0xff]
      %v705 = vld [vmem:[%s1 + $0xd0] sm:$0xff]
      %v706 = vld [vmem:[%s1 + $0xd8] sm:$0xff]
      %v707 = vld [vmem:[%s1 + $0xe0] sm:$0xff]
      %v708 = vld [vmem:[%s1 + $0xe8] sm:$0xff]
      %v709 = vld [vmem:[%s1 + $0xf0] sm:$0xff]
      %v710 = vld [vmem:[%s1 + $0xf8] sm:$0xff]
      %v711 = vld [vmem:[%s1 + $0x100] sm:$0xff]
      %v712 = vld [vmem:[%s1 + $0x108] sm:$0xff]
      %v713 = vld [vmem:[%s1 + $0x110] sm:$0xff]
      %v714 = vld [vmem:[%s1 + $0x118] sm:$0xff]
      %v715 = vld [vmem:[%s1 + $0x120] sm:$0xff]
      %v716 = vld [vmem:[%s1 + $0x128] sm:$0xff]
      %v717 = vld [vmem:[%s1 + $0x130] sm:$0xff]
      %v718 = vld [vmem:[%s1 + $0x138] sm:$0xff]
      %v719 = vld [vmem:[%s1 + $0x140] sm:$0xff]
      %v720 = vld [vmem:[%s1 + $0x148] sm:$0xff]
      %v721 = vld [vmem:[%s1 + $0x150] sm:$0xff]
      %v722 = vld [vmem:[%s1 + $0x158] sm:$0xff]
      %v723 = vld [vmem:[%s1 + $0x160] sm:$0xff]
      %v724 = vld [vmem:[%s1 + $0x168] sm:$0xff]
      %v725 = vld [vmem:[%s1 + $0x170] sm:$0xff]
      %v726 = vld [vmem:[%s1 + $0x178] sm:$0xff]
      %v727 = vld [vmem:[%s1 + $0x180] sm:$0xff]
      %v728 = vld [vmem:[%s1 + $0x188] sm:$0xff]
      %v729 = vld [vmem:[%s1 + $0x190] sm:$0xff]
      %v730 = vld [vmem:[%s1 + $0x198] sm:$0xff]
      %v731 = vld [vmem:[%s1 + $0x1a0] sm:$0xff]
      %v732 = vld [vmem:[%s1 + $0x1a8] sm:$0xff]
      %v733 = vld [vmem:[%s1 + $0x1b0] sm:$0xff]
      %v734 = vld [vmem:[%s1 + $0x1b8] sm:$0xff]
      %v735 = vld [vmem:[%s1 + $0x1c0] sm:$0xff]
      %v736 = vld [vmem:[%s1 + $0x1c8] sm:$0xff]
      %v737 = vld [vmem:[%s1 + $0x1d0] sm:$0xff]
      %v738 = vld [vmem:[%s1 + $0x1d8] sm:$0xff]
      %v739 = vld [vmem:[%s1 + $0x1e0] sm:$0xff]
      %v740 = vld [vmem:[%s1 + $0x1e8] sm:$0xff]
      %v741 = vld [vmem:[%s1 + $0x1f0] sm:$0xff]
      %v742 = vld [vmem:[%s1 + $0x1f8] sm:$0xff]
      %v743 = vld [vmem:[%s1 + $0x200] sm:$0xff]
      %v744 = vld [vmem:[%s1 + $0x208] sm:$0xff]
      %v745 = vld [vmem:[%s1 + $0x210] sm:$0xff]
      %v746 = vld [vmem:[%s1 + $0x218] sm:$0xff]
      %v747 = vld [vmem:[%s1 + $0x220] sm:$0xff]
      %v748 = vld [vmem:[%s1 + $0x228] sm:$0xff]
      %v749 = vld [vmem:[%s1 + $0x230] sm:$0xff]
      %v750 = vld [vmem:[%s1 + $0x238] sm:$0xff]
      %v751 = vld [vmem:[%s1 + $0x240] sm:$0xff]
      %v752 = vld [vmem:[%s1 + $0x248] sm:$0xff]
      %v753 = vld [vmem:[%s1 + $0x250] sm:$0xff]
      %v754 = vld [vmem:[%s1 + $0x258] sm:$0xff]
      %v755 = vld [vmem:[%s1 + $0x260] sm:$0xff]
      %v756 = vld [vmem:[%s1 + $0x268] sm:$0xff]
      %v757 = vld [vmem:[%s1 + $0x270] sm:$0xff]
      %v758 = vld [vmem:[%s1 + $0x278] sm:$0xff]
      %v759 = vld [vmem:[%s1 + $0x280] sm:$0xff]
      %v760 = vld [vmem:[%s1 + $0x288] sm:$0xff]
      %v761 = vld [vmem:[%s1 + $0x290] sm:$0xff]
      %v762 = vld [vmem:[%s1 + $0x298] sm:$0xff]
      %v763 = vld [vmem:[%s1 + $0x2a0] sm:$0xff]
      %v764 = vld [vmem:[%s1 + $0x2a8] sm:$0xff]
      %v765 = vld [vmem:[%s1 + $0x2b0] sm:$0xff]
      %v766 = vld [vmem:[%s1 + $0x2b8] sm:$0xff]
      %v767 = vld [vmem:[%s1 + $0x2c0] sm:$0xff]
      %v768 = vld [vmem:[%s1 + $0x2c8] sm:$0xff]
      %v769 = vld [vmem:[%s1 + $0x2d0] sm:$0xff]
      %v770 = vld [vmem:[%s1 + $0x2d8] sm:$0xff]
      %v771 = vld [vmem:[%s1 + $0x2e0] sm:$0xff]
      %v772 = vld [vmem:[%s1 + $0x2e8] sm:$0xff]
      %v773 = vld [vmem:[%s1 + $0x2f0] sm:$0xff]
      %v774 = vld [vmem:[%s1 + $0x2f8] sm:$0xff]
      %v775 = vld [vmem:[%s1 + $0x300] sm:$0xff]
      %v776 = vld [vmem:[%s1 + $0x308] sm:$0xff]
      %v777 = vld [vmem:[%s1 + $0x310] sm:$0xff]
      %v778 = vld [vmem:[%s1 + $0x318] sm:$0xff]
      %v779 = vld [vmem:[%s1 + $0x320] sm:$0xff]
      %v780 = vld [vmem:[%s1 + $0x328] sm:$0xff]
      %v781 = vld [vmem:[%s1 + $0x330] sm:$0xff]
      %v782 = vld [vmem:[%s1 + $0x338] sm:$0xff]
      %v783 = vld [vmem:[%s1 + $0x340] sm:$0xff]
      %v784 = vld [vmem:[%s1 + $0x348] sm:$0xff]
      %v785 = vld [vmem:[%s1 + $0x350] sm:$0xff]
      %v786 = vld [vmem:[%s1 + $0x358] sm:$0xff]
      %v787 = vld [vmem:[%s1 + $0x360] sm:$0xff]
      %v788 = vld [vmem:[%s1 + $0x368] sm:$0xff]
      %v789 = vld [vmem:[%s1 + $0x370] sm:$0xff]
      %v790 = vld [vmem:[%s1 + $0x378] sm:$0xff]
      %v791 = vld [vmem:[%s1 + $0x380] sm:$0xff]
      %v792 = vld [vmem:[%s1 + $0x388] sm:$0xff]
      %v793 = vld [vmem:[%s1 + $0x390] sm:$0xff]
      %v794 = vld [vmem:[%s1 + $0x398] sm:$0xff]
      %v795 = vld [vmem:[%s1 + $0x3a0] sm:$0xff]
      %v796 = vld [vmem:[%s1 + $0x3a8] sm:$0xff]
      %v797 = vld [vmem:[%s1 + $0x3b0] sm:$0xff]
      %v798 = vld [vmem:[%s1 + $0x3b8] sm:$0xff]
      %v799 = vld [vmem:[%s1 + $0x3c0] sm:$0xff]
      %v800 = vld [vmem:[%s1 + $0x3c8] sm:$0xff]
      %v801 = vld [vmem:[%s1 + $0x3d0] sm:$0xff]
      %v802 = vld [vmem:[%s1 + $0x3d8] sm:$0xff]
      %v803 = vld [vmem:[%s1 + $0x3e0] sm:$0xff]
      %v804 = vld [vmem:[%s1 + $0x3e8] sm:$0xff]
      %v805 = vld [vmem:[%s1 + $0x3f0] sm:$0xff]
      %v806 = vld [vmem:[%s1 + $0x3f8] sm:$0xff]
      %v807 = vld [vmem:[%s1 + $0x400] sm:$0xff]
      %v808 = vld [vmem:[%s1 + $0x408] sm:$0xff]
      %v809 = vld [vmem:[%s1 + $0x410] sm:$0xff]
      %v810 = vld [vmem:[%s1 + $0x418] sm:$0xff]
      %v811 = vld [vmem:[%s1 + $0x420] sm:$0xff]
      %v812 = vld [vmem:[%s1 + $0x428] sm:$0xff]
      %v813 = vld [vmem:[%s1 + $0x430] sm:$0xff]
      %v814 = vld [vmem:[%s1 + $0x438] sm:$0xff]
      %v815 = vld [vmem:[%s1 + $0x440] sm:$0xff]
      %v816 = vld [vmem:[%s1 + $0x448] sm:$0xff]
      %v817 = vld [vmem:[%s1 + $0x450] sm:$0xff]
      %v818 = vld [vmem:[%s1 + $0x458] sm:$0xff]
      %v819 = vld [vmem:[%s1 + $0x460] sm:$0xff]
      %v820 = vld [vmem:[%s1 + $0x468] sm:$0xff]
      %v821 = vld [vmem:[%s1 + $0x470] sm:$0xff]
      %v822 = vld [vmem:[%s1 + $0x478] sm:$0xff]
      %v823 = vld [vmem:[%s2] sm:$0x1]
      %v825 = vlaneseq
      %v826 = vshrl.u32 %v825, 7
      %v827 = vsub.s32 0, %v826
      %v828 = vrot.slane %v823, %v827
      %830 = vmatprep.subr.mxu0 0.0
      %831 = vmatpush1.msra.mxu0 %v694
      %832 = vmatprep.subr.mxu0 0.0
      %833 = vmatpush1.msra.mxu0 %v693
      %834 = vmatprep.subr.mxu0 0.0
      %835 = vmatpush1.msra.mxu0 %v692
      %836 = vmatprep.subr.mxu0 0.0
      %837 = vmatpush1.msra.mxu0 %v691
      %838 = vmatprep.subr.mxu0 0.0
      %839 = vmatpush1.msra.mxu0 %v690
      %840 = vmatprep.subr.mxu0 0.0
      %841 = vmatpush1.msra.mxu0 %v689
      %842 = vmatprep.subr.mxu0 0.0
      %843 = vmatpush1.msra.mxu0 %v688
      %844 = vmatprep.subr.mxu0 0.0
      %845 = vmatpush1.msra.mxu0 %v687
      %846 = vmatprep.subr.mxu0 0.0
      %847 = vmatpush1.msra.mxu0 %v686
      %848 = vmatprep.subr.mxu0 0.0
      %849 = vmatpush1.msra.mxu0 %v685
      %850 = vmatprep.subr.mxu0 0.0
      %851 = vmatpush1.msra.mxu0 %v684
      %852 = vmatprep.subr.mxu0 0.0
      %853 = vmatpush1.msra.mxu0 %v683
      %854 = vmatprep.subr.mxu0 0.0
      %855 = vmatpush1.msra.mxu0 %v682
      %856 = vmatprep.subr.mxu0 0.0
      %857 = vmatpush1.msra.mxu0 %v681
      %858 = vmatprep.subr.mxu0 0.0
      %859 = vmatpush1.msra.mxu0 %v680
      %860 = vmatprep.subr.mxu0 0.0
      %861 = vmatpush1.msra.mxu0 %v679
      %862 = vmatprep.subr.mxu0 0.0
      %863 = vmatpush2.msra.mxu0 %v710
      %864 = vmatprep.subr.mxu0 0.0
      %865 = vmatpush2.msra.mxu0 %v709
      %866 = vmatprep.subr.mxu0 0.0
      %867 = vmatpush2.msra.mxu0 %v708
      %868 = vmatprep.subr.mxu0 0.0
      %869 = vmatpush2.msra.mxu0 %v707
      %870 = vmatprep.subr.mxu0 0.0
      %871 = vmatpush2.msra.mxu0 %v706
      %872 = vmatprep.subr.mxu0 0.0
      %873 = vmatpush2.msra.mxu0 %v705
      %874 = vmatprep.subr.mxu0 0.0
      %875 = vmatpush2.msra.mxu0 %v704
      %876 = vmatprep.subr.mxu0 0.0
      %877 = vmatpush2.msra.mxu0 %v703
      %878 = vmatprep.subr.mxu0 0.0
      %879 = vmatpush2.msra.mxu0 %v702
      %880 = vmatprep.subr.mxu0 0.0
      %881 = vmatpush2.msra.mxu0 %v701
      %882 = vmatprep.subr.mxu0 0.0
      %883 = vmatpush2.msra.mxu0 %v700
      %884 = vmatprep.subr.mxu0 0.0
      %885 = vmatpush2.msra.mxu0 %v699
      %886 = vmatprep.subr.mxu0 0.0
      %887 = vmatpush2.msra.mxu0 %v698
      %888 = vmatprep.subr.mxu0 0.0
      %889 = vmatpush2.msra.mxu0 %v697
      %890 = vmatprep.subr.mxu0 0.0
      %891 = vmatpush2.msra.mxu0 %v696
      %892 = vmatprep.subr.mxu0 0.0
      %893 = vmatpush2.msra.mxu0 %v695
      %894 = vmatprep.mubr.f32.mxu0 %v478
      %895 = vmatmul.mubr.f32.gmra.mxu0 %v397
      %v896 = vpop.f32.mrf.mxu0
      %v897 = vadd.f32 %v828, %v896
      %v898 = vpop.f32.mrf.mxu0
      %899 = vmatprep.mubr.f32.mxu0 %v480
      %900 = vmatmul.mubr.f32.gmra.mxu0 %v398
      %v901 = vpop.f32.mrf.mxu0
      %v902 = vadd.f32 %v828, %v901
      %v903 = vpop.f32.mrf.mxu0
      %904 = vmatprep.mubr.f32.mxu0 %v483
      %905 = vmatmul.mubr.f32.gmra.mxu0 %v400
      %v906 = vpop.f32.mrf.mxu0
      %v907 = vadd.f32 %v828, %v906
      %v908 = vpop.f32.mrf.mxu0
      %909 = vmatprep.mubr.f32.mxu0 %v485
      %910 = vmatmul.mubr.f32.gmra.mxu0 %v401
      %v911 = vpop.f32.mrf.mxu0
      %v912 = vadd.f32 %v828, %v911
      %v913 = vpop.f32.mrf.mxu0
      %914 = vmatprep.mubr.f32.mxu0 %v488
      %915 = vmatmul.mubr.f32.gmra.mxu0 %v403
      %v916 = vpop.f32.mrf.mxu0
      %v917 = vadd.f32 %v828, %v916
      %v918 = vpop.f32.mrf.mxu0
      %919 = vmatprep.mubr.f32.mxu0 %v490
      %920 = vmatmul.mubr.f32.gmra.mxu0 %v404
      %v921 = vpop.f32.mrf.mxu0
      %v922 = vadd.f32 %v828, %v921
      %v923 = vpop.f32.mrf.mxu0
      %924 = vmatprep.mubr.f32.mxu0 %v493
      %925 = vmatmul.mubr.f32.gmra.mxu0 %v406
      %v926 = vpop.f32.mrf.mxu0
      %v927 = vadd.f32 %v828, %v926
      %v928 = vpop.f32.mrf.mxu0
      %929 = vmatprep.mubr.f32.mxu0 %v495
      %930 = vmatmul.mubr.f32.gmra.mxu0 %v407
      %v931 = vpop.f32.mrf.mxu0
      %v932 = vadd.f32 %v828, %v931
      %v933 = vpop.f32.mrf.mxu0
      %934 = vmatprep.mubr.f32.mxu0 %v498
      %935 = vmatmul.mubr.f32.gmra.mxu0 %v409
      %v936 = vpop.f32.mrf.mxu0
      %v937 = vadd.f32 %v828, %v936
      %v938 = vpop.f32.mrf.mxu0
      %939 = vmatprep.mubr.f32.mxu0 %v500
      %940 = vmatmul.mubr.f32.gmra.mxu0 %v410
      %v941 = vpop.f32.mrf.mxu0
      %v942 = vadd.f32 %v828, %v941
      %v943 = vpop.f32.mrf.mxu0
      %944 = vmatprep.mubr.f32.mxu0 %v503
      %945 = vmatmul.mubr.f32.gmra.mxu0 %v412
      %v946 = vpop.f32.mrf.mxu0
      %v947 = vadd.f32 %v828, %v946
      %v948 = vpop.f32.mrf.mxu0
      %949 = vmatprep.mubr.f32.mxu0 %v505
      %950 = vmatmul.mubr.f32.gmra.mxu0 %v413
      %v951 = vpop.f32.mrf.mxu0
      %v952 = vadd.f32 %v828, %v951
      %v953 = vpop.f32.mrf.mxu0
      %954 = vmatprep.mubr.f32.mxu0 %v508
      %955 = vmatmul.mubr.f32.gmra.mxu0 %v415
      %v956 = vpop.f32.mrf.mxu0
      %v957 = vadd.f32 %v828, %v956
      %v958 = vpop.f32.mrf.mxu0
      %959 = vmatprep.mubr.f32.mxu0 %v510
      %960 = vmatmul.mubr.f32.gmra.mxu0 %v416
      %v961 = vpop.f32.mrf.mxu0
      %v962 = vadd.f32 %v828, %v961
      %v963 = vpop.f32.mrf.mxu0
      %964 = vmatprep.mubr.f32.mxu0 %v513
      %965 = vmatmul.mubr.f32.gmra.mxu0 %v418
      %v966 = vpop.f32.mrf.mxu0
      %v967 = vadd.f32 %v828, %v966
      %v968 = vpop.f32.mrf.mxu0
      %969 = vmatprep.mubr.f32.mxu0 %v515
      %970 = vmatmul.mubr.f32.gmra.mxu0 %v419
      %v971 = vpop.f32.mrf.mxu0
      %v972 = vadd.f32 %v828, %v971
      %v973 = vpop.f32.mrf.mxu0
      %974 = vmatprep.mubr.f32.mxu0 %v518
      %975 = vmatmul.mubr.f32.gmra.mxu0 %v421
      %v976 = vpop.f32.mrf.mxu0
      %v977 = vadd.f32 %v828, %v976
      %v978 = vpop.f32.mrf.mxu0
      %979 = vmatprep.mubr.f32.mxu0 %v520
      %980 = vmatmul.mubr.f32.gmra.mxu0 %v422
      %v981 = vpop.f32.mrf.mxu0
      %v982 = vadd.f32 %v828, %v981
      %v983 = vpop.f32.mrf.mxu0
      %984 = vmatprep.mubr.f32.mxu0 %v523
      %985 = vmatmul.mubr.f32.gmra.mxu0 %v424
      %v986 = vpop.f32.mrf.mxu0
      %v987 = vadd.f32 %v828, %v986
      %v988 = vpop.f32.mrf.mxu0
      %989 = vmatprep.mubr.f32.mxu0 %v525
      %990 = vmatmul.mubr.f32.gmra.mxu0 %v425
      %v991 = vpop.f32.mrf.mxu0
      %v992 = vadd.f32 %v828, %v991
      %v993 = vpop.f32.mrf.mxu0
      %994 = vmatprep.mubr.f32.mxu0 %v528
      %995 = vmatmul.mubr.f32.gmra.mxu0 %v427
      %v996 = vpop.f32.mrf.mxu0
      %v997 = vadd.f32 %v828, %v996
      %v998 = vpop.f32.mrf.mxu0
      %999 = vmatprep.mubr.f32.mxu0 %v530
      %1000 = vmatmul.mubr.f32.gmra.mxu0 %v428
      %v1001 = vpop.f32.mrf.mxu0
      %v1002 = vadd.f32 %v828, %v1001
      %v1003 = vpop.f32.mrf.mxu0
      %1004 = vmatprep.mubr.f32.mxu0 %v533
      %1005 = vmatmul.mubr.f32.gmra.mxu0 %v430
      %v1006 = vpop.f32.mrf.mxu0
      %v1007 = vadd.f32 %v828, %v1006
      %v1008 = vpop.f32.mrf.mxu0
      %1009 = vmatprep.mubr.f32.mxu0 %v535
      %1010 = vmatmul.mubr.f32.gmra.mxu0 %v431
      %v1011 = vpop.f32.mrf.mxu0
      %v1012 = vadd.f32 %v828, %v1011
      %v1013 = vpop.f32.mrf.mxu0
      %1014 = vdwg.mxu0
      %1015 = vmatprep.subr.mxu0 0.0
      %1016 = vmatpush1.msra.mxu0 %v726
      %1017 = vmatprep.subr.mxu0 0.0
      %1018 = vmatpush1.msra.mxu0 %v725
      %1019 = vmatprep.subr.mxu0 0.0
      %1020 = vmatpush1.msra.mxu0 %v724
      %1021 = vmatprep.subr.mxu0 0.0
      %1022 = vmatpush1.msra.mxu0 %v723
      %1023 = vmatprep.subr.mxu0 0.0
      %1024 = vmatpush1.msra.mxu0 %v722
      %1025 = vmatprep.subr.mxu0 0.0
      %1026 = vmatpush1.msra.mxu0 %v721
      %1027 = vmatprep.subr.mxu0 0.0
      %1028 = vmatpush1.msra.mxu0 %v720
      %1029 = vmatprep.subr.mxu0 0.0
      %1030 = vmatpush1.msra.mxu0 %v719
      %1031 = vmatprep.subr.mxu0 0.0
      %1032 = vmatpush1.msra.mxu0 %v718
      %1033 = vmatprep.subr.mxu0 0.0
      %1034 = vmatpush1.msra.mxu0 %v717
      %1035 = vmatprep.subr.mxu0 0.0
      %1036 = vmatpush1.msra.mxu0 %v716
      %1037 = vmatprep.subr.mxu0 0.0
      %1038 = vmatpush1.msra.mxu0 %v715
      %1039 = vmatprep.subr.mxu0 0.0
      %1040 = vmatpush1.msra.mxu0 %v714
      %1041 = vmatprep.subr.mxu0 0.0
      %1042 = vmatpush1.msra.mxu0 %v713
      %1043 = vmatprep.subr.mxu0 0.0
      %1044 = vmatpush1.msra.mxu0 %v712
      %1045 = vmatprep.subr.mxu0 0.0
      %1046 = vmatpush1.msra.mxu0 %v711
      %1047 = vmatprep.subr.mxu0 0.0
      %1048 = vmatpush2.msra.mxu0 %v742
      %1049 = vmatprep.subr.mxu0 0.0
      %1050 = vmatpush2.msra.mxu0 %v741
      %1051 = vmatprep.subr.mxu0 0.0
      %1052 = vmatpush2.msra.mxu0 %v740
      %1053 = vmatprep.subr.mxu0 0.0
      %1054 = vmatpush2.msra.mxu0 %v739
      %1055 = vmatprep.subr.mxu0 0.0
      %1056 = vmatpush2.msra.mxu0 %v738
      %1057 = vmatprep.subr.mxu0 0.0
      %1058 = vmatpush2.msra.mxu0 %v737
      %1059 = vmatprep.subr.mxu0 0.0
      %1060 = vmatpush2.msra.mxu0 %v736
      %1061 = vmatprep.subr.mxu0 0.0
      %1062 = vmatpush2.msra.mxu0 %v735
      %1063 = vmatprep.subr.mxu0 0.0
      %1064 = vmatpush2.msra.mxu0 %v734
      %1065 = vmatprep.subr.mxu0 0.0
      %1066 = vmatpush2.msra.mxu0 %v733
      %1067 = vmatprep.subr.mxu0 0.0
      %1068 = vmatpush2.msra.mxu0 %v732
      %1069 = vmatprep.subr.mxu0 0.0
      %1070 = vmatpush2.msra.mxu0 %v731
      %1071 = vmatprep.subr.mxu0 0.0
      %1072 = vmatpush2.msra.mxu0 %v730
      %1073 = vmatprep.subr.mxu0 0.0
      %1074 = vmatpush2.msra.mxu0 %v729
      %1075 = vmatprep.subr.mxu0 0.0
      %1076 = vmatpush2.msra.mxu0 %v728
      %1077 = vmatprep.subr.mxu0 0.0
      %1078 = vmatpush2.msra.mxu0 %v727
      %1079 = vmatprep.mubr.f32.mxu0 %v400
      %1080 = vmatmul.mubr.f32.gmra.mxu0 %v563
      %v1081 = vpop.f32.mrf.mxu0
      %v1082 = vadd.f32 %v897, %v1081
      %v1083 = vpop.f32.mrf.mxu0
      %1084 = vmatprep.mubr.f32.mxu0 %v401
      %1085 = vmatmul.mubr.f32.gmra.mxu0 %v565
      %v1086 = vpop.f32.mrf.mxu0
      %v1087 = vadd.f32 %v902, %v1086
      %v1088 = vpop.f32.mrf.mxu0
      %1089 = vmatprep.mubr.f32.mxu0 %v403
      %1090 = vmatmul.mubr.f32.gmra.mxu0 %v568
      %v1091 = vpop.f32.mrf.mxu0
      %v1092 = vadd.f32 %v907, %v1091
      %v1093 = vpop.f32.mrf.mxu0
      %1094 = vmatprep.mubr.f32.mxu0 %v404
      %1095 = vmatmul.mubr.f32.gmra.mxu0 %v570
      %v1096 = vpop.f32.mrf.mxu0
      %v1097 = vadd.f32 %v912, %v1096
      %v1098 = vpop.f32.mrf.mxu0
      %1099 = vmatprep.mubr.f32.mxu0 %v406
      %1100 = vmatmul.mubr.f32.gmra.mxu0 %v573
      %v1101 = vpop.f32.mrf.mxu0
      %v1102 = vadd.f32 %v917, %v1101
      %v1103 = vpop.f32.mrf.mxu0
      %1104 = vmatprep.mubr.f32.mxu0 %v407
      %1105 = vmatmul.mubr.f32.gmra.mxu0 %v575
      %v1106 = vpop.f32.mrf.mxu0
      %v1107 = vadd.f32 %v922, %v1106
      %v1108 = vpop.f32.mrf.mxu0
      %1109 = vmatprep.mubr.f32.mxu0 %v409
      %1110 = vmatmul.mubr.f32.gmra.mxu0 %v578
      %v1111 = vpop.f32.mrf.mxu0
      %v1112 = vadd.f32 %v927, %v1111
      %v1113 = vpop.f32.mrf.mxu0
      %1114 = vmatprep.mubr.f32.mxu0 %v410
      %1115 = vmatmul.mubr.f32.gmra.mxu0 %v580
      %v1116 = vpop.f32.mrf.mxu0
      %v1117 = vadd.f32 %v932, %v1116
      %v1118 = vpop.f32.mrf.mxu0
      %1119 = vmatprep.mubr.f32.mxu0 %v412
      %1120 = vmatmul.mubr.f32.gmra.mxu0 %v583
      %v1121 = vpop.f32.mrf.mxu0
      %v1122 = vadd.f32 %v937, %v1121
      %v1123 = vpop.f32.mrf.mxu0
      %1124 = vmatprep.mubr.f32.mxu0 %v413
      %1125 = vmatmul.mubr.f32.gmra.mxu0 %v585
      %v1126 = vpop.f32.mrf.mxu0
      %v1127 = vadd.f32 %v942, %v1126
      %v1128 = vpop.f32.mrf.mxu0
      %1129 = vmatprep.mubr.f32.mxu0 %v415
      %1130 = vmatmul.mubr.f32.gmra.mxu0 %v588
      %v1131 = vpop.f32.mrf.mxu0
      %v1132 = vadd.f32 %v947, %v1131
      %v1133 = vpop.f32.mrf.mxu0
      %1134 = vmatprep.mubr.f32.mxu0 %v416
      %1135 = vmatmul.mubr.f32.gmra.mxu0 %v590
      %v1136 = vpop.f32.mrf.mxu0
      %v1137 = vadd.f32 %v952, %v1136
      %v1138 = vpop.f32.mrf.mxu0
      %1139 = vmatprep.mubr.f32.mxu0 %v418
      %1140 = vmatmul.mubr.f32.gmra.mxu0 %v593
      %v1141 = vpop.f32.mrf.mxu0
      %v1142 = vadd.f32 %v957, %v1141
      %v1143 = vpop.f32.mrf.mxu0
      %1144 = vmatprep.mubr.f32.mxu0 %v419
      %1145 = vmatmul.mubr.f32.gmra.mxu0 %v595
      %v1146 = vpop.f32.mrf.mxu0
      %v1147 = vadd.f32 %v962, %v1146
      %v1148 = vpop.f32.mrf.mxu0
      %1149 = vmatprep.mubr.f32.mxu0 %v421
      %1150 = vmatmul.mubr.f32.gmra.mxu0 %v598
      %v1151 = vpop.f32.mrf.mxu0
      %v1152 = vadd.f32 %v967, %v1151
      %v1153 = vpop.f32.mrf.mxu0
      %1154 = vmatprep.mubr.f32.mxu0 %v422
      %1155 = vmatmul.mubr.f32.gmra.mxu0 %v600
      %v1156 = vpop.f32.mrf.mxu0
      %v1157 = vadd.f32 %v972, %v1156
      %v1158 = vpop.f32.mrf.mxu0
      %1159 = vmatprep.mubr.f32.mxu0 %v424
      %1160 = vmatmul.mubr.f32.gmra.mxu0 %v603
      %v1161 = vpop.f32.mrf.mxu0
      %v1162 = vadd.f32 %v977, %v1161
      %v1163 = vpop.f32.mrf.mxu0
      %1164 = vmatprep.mubr.f32.mxu0 %v425
      %1165 = vmatmul.mubr.f32.gmra.mxu0 %v605
      %v1166 = vpop.f32.mrf.mxu0
      %v1167 = vadd.f32 %v982, %v1166
      %v1168 = vpop.f32.mrf.mxu0
      %1169 = vmatprep.mubr.f32.mxu0 %v427
      %1170 = vmatmul.mubr.f32.gmra.mxu0 %v608
      %v1171 = vpop.f32.mrf.mxu0
      %v1172 = vadd.f32 %v987, %v1171
      %v1173 = vpop.f32.mrf.mxu0
      %1174 = vmatprep.mubr.f32.mxu0 %v428
      %1175 = vmatmul.mubr.f32.gmra.mxu0 %v610
      %v1176 = vpop.f32.mrf.mxu0
      %v1177 = vadd.f32 %v992, %v1176
      %v1178 = vpop.f32.mrf.mxu0
      %1179 = vmatprep.mubr.f32.mxu0 %v430
      %1180 = vmatmul.mubr.f32.gmra.mxu0 %v613
      %v1181 = vpop.f32.mrf.mxu0
      %v1182 = vadd.f32 %v997, %v1181
      %v1183 = vpop.f32.mrf.mxu0
      %1184 = vmatprep.mubr.f32.mxu0 %v431
      %1185 = vmatmul.mubr.f32.gmra.mxu0 %v615
      %v1186 = vpop.f32.mrf.mxu0
      %v1187 = vadd.f32 %v1002, %v1186
      %v1188 = vpop.f32.mrf.mxu0
      %1189 = vmatprep.mubr.f32.mxu0 %v433
      %1190 = vmatmul.mubr.f32.gmra.mxu0 %v618
      %v1191 = vpop.f32.mrf.mxu0
      %v1192 = vadd.f32 %v1007, %v1191
      %v1193 = vpop.f32.mrf.mxu0
      %1194 = vmatprep.mubr.f32.mxu0 %v434
      %1195 = vmatmul.mubr.f32.gmra.mxu0 %v620
      %v1196 = vpop.f32.mrf.mxu0
      %v1197 = vadd.f32 %v1012, %v1196
      %v1198 = vpop.f32.mrf.mxu0
      %1199 = vdwg.mxu0
      %1200 = vmatprep.subr.mxu0 0.0
      %1201 = vmatpush1.msra.mxu0 %v758
      %1202 = vmatprep.subr.mxu0 0.0
      %1203 = vmatpush1.msra.mxu0 %v757
      %1204 = vmatprep.subr.mxu0 0.0
      %1205 = vmatpush1.msra.mxu0 %v756
      %1206 = vmatprep.subr.mxu0 0.0
      %1207 = vmatpush1.msra.mxu0 %v755
      %1208 = vmatprep.subr.mxu0 0.0
      %1209 = vmatpush1.msra.mxu0 %v754
      %1210 = vmatprep.subr.mxu0 0.0
      %1211 = vmatpush1.msra.mxu0 %v753
      %1212 = vmatprep.subr.mxu0 0.0
      %1213 = vmatpush1.msra.mxu0 %v752
      %1214 = vmatprep.subr.mxu0 0.0
      %1215 = vmatpush1.msra.mxu0 %v751
      %1216 = vmatprep.subr.mxu0 0.0
      %1217 = vmatpush1.msra.mxu0 %v750
      %1218 = vmatprep.subr.mxu0 0.0
      %1219 = vmatpush1.msra.mxu0 %v749
      %1220 = vmatprep.subr.mxu0 0.0
      %1221 = vmatpush1.msra.mxu0 %v748
      %1222 = vmatprep.subr.mxu0 0.0
      %1223 = vmatpush1.msra.mxu0 %v747
      %1224 = vmatprep.subr.mxu0 0.0
      %1225 = vmatpush1.msra.mxu0 %v746
      %1226 = vmatprep.subr.mxu0 0.0
      %1227 = vmatpush1.msra.mxu0 %v745
      %1228 = vmatprep.subr.mxu0 0.0
      %1229 = vmatpush1.msra.mxu0 %v744
      %1230 = vmatprep.subr.mxu0 0.0
      %1231 = vmatpush1.msra.mxu0 %v743
      %1232 = vmatprep.subr.mxu0 0.0
      %1233 = vmatpush2.msra.mxu0 %v774
      %1234 = vmatprep.subr.mxu0 0.0
      %1235 = vmatpush2.msra.mxu0 %v773
      %1236 = vmatprep.subr.mxu0 0.0
      %1237 = vmatpush2.msra.mxu0 %v772
      %1238 = vmatprep.subr.mxu0 0.0
      %1239 = vmatpush2.msra.mxu0 %v771
      %1240 = vmatprep.subr.mxu0 0.0
      %1241 = vmatpush2.msra.mxu0 %v770
      %1242 = vmatprep.subr.mxu0 0.0
      %1243 = vmatpush2.msra.mxu0 %v769
      %1244 = vmatprep.subr.mxu0 0.0
      %1245 = vmatpush2.msra.mxu0 %v768
      %1246 = vmatprep.subr.mxu0 0.0
      %1247 = vmatpush2.msra.mxu0 %v767
      %1248 = vmatprep.subr.mxu0 0.0
      %1249 = vmatpush2.msra.mxu0 %v766
      %1250 = vmatprep.subr.mxu0 0.0
      %1251 = vmatpush2.msra.mxu0 %v765
      %1252 = vmatprep.subr.mxu0 0.0
      %1253 = vmatpush2.msra.mxu0 %v764
      %1254 = vmatprep.subr.mxu0 0.0
      %1255 = vmatpush2.msra.mxu0 %v763
      %1256 = vmatprep.subr.mxu0 0.0
      %1257 = vmatpush2.msra.mxu0 %v762
      %1258 = vmatprep.subr.mxu0 0.0
      %1259 = vmatpush2.msra.mxu0 %v761
      %1260 = vmatprep.subr.mxu0 0.0
      %1261 = vmatpush2.msra.mxu0 %v760
      %1262 = vmatprep.subr.mxu0 0.0
      %1263 = vmatpush2.msra.mxu0 %v759
      %1264 = vmatprep.mubr.f32.mxu0 %v568
      %1265 = vmatmul.mubr.f32.gmra.mxu0 %v483
      %v1266 = vpop.f32.mrf.mxu0
      %v1267 = vadd.f32 %v1082, %v1266
      %v1268 = vpop.f32.mrf.mxu0
      %1269 = vmatprep.mubr.f32.mxu0 %v570
      %1270 = vmatmul.mubr.f32.gmra.mxu0 %v485
      %v1271 = vpop.f32.mrf.mxu0
      %v1272 = vadd.f32 %v1087, %v1271
      %v1273 = vpop.f32.mrf.mxu0
      %1274 = vmatprep.mubr.f32.mxu0 %v573
      %1275 = vmatmul.mubr.f32.gmra.mxu0 %v488
      %v1276 = vpop.f32.mrf.mxu0
      %v1277 = vadd.f32 %v1092, %v1276
      %v1278 = vpop.f32.mrf.mxu0
      %1279 = vmatprep.mubr.f32.mxu0 %v575
      %1280 = vmatmul.mubr.f32.gmra.mxu0 %v490
      %v1281 = vpop.f32.mrf.mxu0
      %v1282 = vadd.f32 %v1097, %v1281
      %v1283 = vpop.f32.mrf.mxu0
      %1284 = vmatprep.mubr.f32.mxu0 %v578
      %1285 = vmatmul.mubr.f32.gmra.mxu0 %v493
      %v1286 = vpop.f32.mrf.mxu0
      %v1287 = vadd.f32 %v1102, %v1286
      %v1288 = vpop.f32.mrf.mxu0
      %1289 = vmatprep.mubr.f32.mxu0 %v580
      %1290 = vmatmul.mubr.f32.gmra.mxu0 %v495
      %v1291 = vpop.f32.mrf.mxu0
      %v1292 = vadd.f32 %v1107, %v1291
      %v1293 = vpop.f32.mrf.mxu0
      %1294 = vmatprep.mubr.f32.mxu0 %v583
      %1295 = vmatmul.mubr.f32.gmra.mxu0 %v498
      %v1296 = vpop.f32.mrf.mxu0
      %v1297 = vadd.f32 %v1112, %v1296
      %v1298 = vpop.f32.mrf.mxu0
      %1299 = vmatprep.mubr.f32.mxu0 %v585
      %1300 = vmatmul.mubr.f32.gmra.mxu0 %v500
      %v1301 = vpop.f32.mrf.mxu0
      %v1302 = vadd.f32 %v1117, %v1301
      %v1303 = vpop.f32.mrf.mxu0
      %1304 = vmatprep.mubr.f32.mxu0 %v588
      %1305 = vmatmul.mubr.f32.gmra.mxu0 %v503
      %v1306 = vpop.f32.mrf.mxu0
      %v1307 = vadd.f32 %v1122, %v1306
      %v1308 = vpop.f32.mrf.mxu0
      %1309 = vmatprep.mubr.f32.mxu0 %v590
      %1310 = vmatmul.mubr.f32.gmra.mxu0 %v505
      %v1311 = vpop.f32.mrf.mxu0
      %v1312 = vadd.f32 %v1127, %v1311
      %v1313 = vpop.f32.mrf.mxu0
      %1314 = vmatprep.mubr.f32.mxu0 %v593
      %1315 = vmatmul.mubr.f32.gmra.mxu0 %v508
      %v1316 = vpop.f32.mrf.mxu0
      %v1317 = vadd.f32 %v1132, %v1316
      %v1318 = vpop.f32.mrf.mxu0
      %1319 = vmatprep.mubr.f32.mxu0 %v595
      %1320 = vmatmul.mubr.f32.gmra.mxu0 %v510
      %v1321 = vpop.f32.mrf.mxu0
      %v1322 = vadd.f32 %v1137, %v1321
      %v1323 = vpop.f32.mrf.mxu0
      %1324 = vmatprep.mubr.f32.mxu0 %v598
      %1325 = vmatmul.mubr.f32.gmra.mxu0 %v513
      %v1326 = vpop.f32.mrf.mxu0
      %v1327 = vadd.f32 %v1142, %v1326
      %v1328 = vpop.f32.mrf.mxu0
      %1329 = vmatprep.mubr.f32.mxu0 %v600
      %1330 = vmatmul.mubr.f32.gmra.mxu0 %v515
      %v1331 = vpop.f32.mrf.mxu0
      %v1332 = vadd.f32 %v1147, %v1331
      %v1333 = vpop.f32.mrf.mxu0
      %1334 = vmatprep.mubr.f32.mxu0 %v603
      %1335 = vmatmul.mubr.f32.gmra.mxu0 %v518
      %v1336 = vpop.f32.mrf.mxu0
      %v1337 = vadd.f32 %v1152, %v1336
      %v1338 = vpop.f32.mrf.mxu0
      %1339 = vmatprep.mubr.f32.mxu0 %v605
      %1340 = vmatmul.mubr.f32.gmra.mxu0 %v520
      %v1341 = vpop.f32.mrf.mxu0
      %v1342 = vadd.f32 %v1157, %v1341
      %v1343 = vpop.f32.mrf.mxu0
      %1344 = vmatprep.mubr.f32.mxu0 %v608
      %1345 = vmatmul.mubr.f32.gmra.mxu0 %v523
      %v1346 = vpop.f32.mrf.mxu0
      %v1347 = vadd.f32 %v1162, %v1346
      %v1348 = vpop.f32.mrf.mxu0
      %1349 = vmatprep.mubr.f32.mxu0 %v610
      %1350 = vmatmul.mubr.f32.gmra.mxu0 %v525
      %v1351 = vpop.f32.mrf.mxu0
      %v1352 = vadd.f32 %v1167, %v1351
      %v1353 = vpop.f32.mrf.mxu0
      %1354 = vmatprep.mubr.f32.mxu0 %v613
      %1355 = vmatmul.mubr.f32.gmra.mxu0 %v528
      %v1356 = vpop.f32.mrf.mxu0
      %v1357 = vadd.f32 %v1172, %v1356
      %v1358 = vpop.f32.mrf.mxu0
      %1359 = vmatprep.mubr.f32.mxu0 %v615
      %1360 = vmatmul.mubr.f32.gmra.mxu0 %v530
      %v1361 = vpop.f32.mrf.mxu0
      %v1362 = vadd.f32 %v1177, %v1361
      %v1363 = vpop.f32.mrf.mxu0
      %1364 = vmatprep.mubr.f32.mxu0 %v618
      %1365 = vmatmul.mubr.f32.gmra.mxu0 %v533
      %v1366 = vpop.f32.mrf.mxu0
      %v1367 = vadd.f32 %v1182, %v1366
      %v1368 = vpop.f32.mrf.mxu0
      %1369 = vmatprep.mubr.f32.mxu0 %v620
      %1370 = vmatmul.mubr.f32.gmra.mxu0 %v535
      %v1371 = vpop.f32.mrf.mxu0
      %v1372 = vadd.f32 %v1187, %v1371
      %v1373 = vpop.f32.mrf.mxu0
      %1374 = vmatprep.mubr.f32.mxu0 %v657
      %1375 = vmatmul.mubr.f32.gmra.mxu0 %v650
      %v1376 = vpop.f32.mrf.mxu0
      %v1377 = vadd.f32 %v1192, %v1376
      %v1378 = vpop.f32.mrf.mxu0
      %1379 = vmatprep.mubr.f32.mxu0 %v659
      %1380 = vmatmul.mubr.f32.gmra.mxu0 %v652
      %v1381 = vpop.f32.mrf.mxu0
      %v1382 = vadd.f32 %v1197, %v1381
      %v1383 = vpop.f32.mrf.mxu0
      %1384 = vdwg.mxu0
      %1385 = vmatprep.subr.mxu0 0.0
      %1386 = vmatpush1.msra.mxu0 %v790
      %1387 = vmatprep.subr.mxu0 0.0
      %1388 = vmatpush1.msra.mxu0 %v789
      %1389 = vmatprep.subr.mxu0 0.0
      %1390 = vmatpush1.msra.mxu0 %v788
      %1391 = vmatprep.subr.mxu0 0.0
      %1392 = vmatpush1.msra.mxu0 %v787
      %1393 = vmatprep.subr.mxu0 0.0
      %1394 = vmatpush1.msra.mxu0 %v786
      %1395 = vmatprep.subr.mxu0 0.0
      %1396 = vmatpush1.msra.mxu0 %v785
      %1397 = vmatprep.subr.mxu0 0.0
      %1398 = vmatpush1.msra.mxu0 %v784
      %1399 = vmatprep.subr.mxu0 0.0
      %1400 = vmatpush1.msra.mxu0 %v783
      %1401 = vmatprep.subr.mxu0 0.0
      %1402 = vmatpush1.msra.mxu0 %v782
      %1403 = vmatprep.subr.mxu0 0.0
      %1404 = vmatpush1.msra.mxu0 %v781
      %1405 = vmatprep.subr.mxu0 0.0
      %1406 = vmatpush1.msra.mxu0 %v780
      %1407 = vmatprep.subr.mxu0 0.0
      %1408 = vmatpush1.msra.mxu0 %v779
      %1409 = vmatprep.subr.mxu0 0.0
      %1410 = vmatpush1.msra.mxu0 %v778
      %1411 = vmatprep.subr.mxu0 0.0
      %1412 = vmatpush1.msra.mxu0 %v777
      %1413 = vmatprep.subr.mxu0 0.0
      %1414 = vmatpush1.msra.mxu0 %v776
      %1415 = vmatprep.subr.mxu0 0.0
      %1416 = vmatpush1.msra.mxu0 %v775
      %1417 = vmatprep.subr.mxu0 0.0
      %1418 = vmatpush2.msra.mxu0 %v806
      %1419 = vmatprep.subr.mxu0 0.0
      %1420 = vmatpush2.msra.mxu0 %v805
      %1421 = vmatprep.subr.mxu0 0.0
      %1422 = vmatpush2.msra.mxu0 %v804
      %1423 = vmatprep.subr.mxu0 0.0
      %1424 = vmatpush2.msra.mxu0 %v803
      %1425 = vmatprep.subr.mxu0 0.0
      %1426 = vmatpush2.msra.mxu0 %v802
      %1427 = vmatprep.subr.mxu0 0.0
      %1428 = vmatpush2.msra.mxu0 %v801
      %1429 = vmatprep.subr.mxu0 0.0
      %1430 = vmatpush2.msra.mxu0 %v800
      %1431 = vmatprep.subr.mxu0 0.0
      %1432 = vmatpush2.msra.mxu0 %v799
      %1433 = vmatprep.subr.mxu0 0.0
      %1434 = vmatpush2.msra.mxu0 %v798
      %1435 = vmatprep.subr.mxu0 0.0
      %1436 = vmatpush2.msra.mxu0 %v797
      %1437 = vmatprep.subr.mxu0 0.0
      %1438 = vmatpush2.msra.mxu0 %v796
      %1439 = vmatprep.subr.mxu0 0.0
      %1440 = vmatpush2.msra.mxu0 %v795
      %1441 = vmatprep.subr.mxu0 0.0
      %1442 = vmatpush2.msra.mxu0 %v794
      %1443 = vmatprep.subr.mxu0 0.0
      %1444 = vmatpush2.msra.mxu0 %v793
      %1445 = vmatprep.subr.mxu0 0.0
      %1446 = vmatpush2.msra.mxu0 %v792
      %1447 = vmatprep.subr.mxu0 0.0
      %1448 = vmatpush2.msra.mxu0 %v791
      %1449 = vmatprep.mubr.f32.mxu0 %v488
      %1450 = vmatmul.mubr.f32.gmra.mxu0 %v403
      %v1451 = vpop.f32.mrf.mxu0
      %v1452 = vadd.f32 %v1267, %v1451
      %v1453 = vpop.f32.mrf.mxu0
      %1454 = vmatprep.mubr.f32.mxu0 %v490
      %1455 = vmatmul.mubr.f32.gmra.mxu0 %v404
      %v1456 = vpop.f32.mrf.mxu0
      %v1457 = vadd.f32 %v1272, %v1456
      %v1458 = vpop.f32.mrf.mxu0
      %1459 = vmatprep.mubr.f32.mxu0 %v493
      %1460 = vmatmul.mubr.f32.gmra.mxu0 %v406
      %v1461 = vpop.f32.mrf.mxu0
      %v1462 = vadd.f32 %v1277, %v1461
      %v1463 = vpop.f32.mrf.mxu0
      %1464 = vmatprep.mubr.f32.mxu0 %v495
      %1465 = vmatmul.mubr.f32.gmra.mxu0 %v407
      %v1466 = vpop.f32.mrf.mxu0
      %v1467 = vadd.f32 %v1282, %v1466
      %v1468 = vpop.f32.mrf.mxu0
      %1469 = vmatprep.mubr.f32.mxu0 %v498
      %1470 = vmatmul.mubr.f32.gmra.mxu0 %v409
      %v1471 = vpop.f32.mrf.mxu0
      %v1472 = vadd.f32 %v1287, %v1471
      %v1473 = vpop.f32.mrf.mxu0
      %1474 = vmatprep.mubr.f32.mxu0 %v500
      %1475 = vmatmul.mubr.f32.gmra.mxu0 %v410
      %v1476 = vpop.f32.mrf.mxu0
      %v1477 = vadd.f32 %v1292, %v1476
      %v1478 = vpop.f32.mrf.mxu0
      %1479 = vmatprep.mubr.f32.mxu0 %v503
      %1480 = vmatmul.mubr.f32.gmra.mxu0 %v412
      %v1481 = vpop.f32.mrf.mxu0
      %v1482 = vadd.f32 %v1297, %v1481
      %v1483 = vpop.f32.mrf.mxu0
      %1484 = vmatprep.mubr.f32.mxu0 %v505
      %1485 = vmatmul.mubr.f32.gmra.mxu0 %v413
      %v1486 = vpop.f32.mrf.mxu0
      %v1487 = vadd.f32 %v1302, %v1486
      %v1488 = vpop.f32.mrf.mxu0
      %1489 = vmatprep.mubr.f32.mxu0 %v508
      %1490 = vmatmul.mubr.f32.gmra.mxu0 %v415
      %v1491 = vpop.f32.mrf.mxu0
      %v1492 = vadd.f32 %v1307, %v1491
      %v1493 = vpop.f32.mrf.mxu0
      %1494 = vmatprep.mubr.f32.mxu0 %v510
      %1495 = vmatmul.mubr.f32.gmra.mxu0 %v416
      %v1496 = vpop.f32.mrf.mxu0
      %v1497 = vadd.f32 %v1312, %v1496
      %v1498 = vpop.f32.mrf.mxu0
      %1499 = vmatprep.mubr.f32.mxu0 %v513
      %1500 = vmatmul.mubr.f32.gmra.mxu0 %v418
      %v1501 = vpop.f32.mrf.mxu0
      %v1502 = vadd.f32 %v1317, %v1501
      %v1503 = vpop.f32.mrf.mxu0
      %1504 = vmatprep.mubr.f32.mxu0 %v515
      %1505 = vmatmul.mubr.f32.gmra.mxu0 %v419
      %v1506 = vpop.f32.mrf.mxu0
      %v1507 = vadd.f32 %v1322, %v1506
      %v1508 = vpop.f32.mrf.mxu0
      %1509 = vmatprep.mubr.f32.mxu0 %v518
      %1510 = vmatmul.mubr.f32.gmra.mxu0 %v421
      %v1511 = vpop.f32.mrf.mxu0
      %v1512 = vadd.f32 %v1327, %v1511
      %v1513 = vpop.f32.mrf.mxu0
      %1514 = vmatprep.mubr.f32.mxu0 %v520
      %1515 = vmatmul.mubr.f32.gmra.mxu0 %v422
      %v1516 = vpop.f32.mrf.mxu0
      %v1517 = vadd.f32 %v1332, %v1516
      %v1518 = vpop.f32.mrf.mxu0
      %1519 = vmatprep.mubr.f32.mxu0 %v523
      %1520 = vmatmul.mubr.f32.gmra.mxu0 %v424
      %v1521 = vpop.f32.mrf.mxu0
      %v1522 = vadd.f32 %v1337, %v1521
      %v1523 = vpop.f32.mrf.mxu0
      %1524 = vmatprep.mubr.f32.mxu0 %v525
      %1525 = vmatmul.mubr.f32.gmra.mxu0 %v425
      %v1526 = vpop.f32.mrf.mxu0
      %v1527 = vadd.f32 %v1342, %v1526
      %v1528 = vpop.f32.mrf.mxu0
      %1529 = vmatprep.mubr.f32.mxu0 %v528
      %1530 = vmatmul.mubr.f32.gmra.mxu0 %v427
      %v1531 = vpop.f32.mrf.mxu0
      %v1532 = vadd.f32 %v1347, %v1531
      %v1533 = vpop.f32.mrf.mxu0
      %1534 = vmatprep.mubr.f32.mxu0 %v530
      %1535 = vmatmul.mubr.f32.gmra.mxu0 %v428
      %v1536 = vpop.f32.mrf.mxu0
      %v1537 = vadd.f32 %v1352, %v1536
      %v1538 = vpop.f32.mrf.mxu0
      %1539 = vmatprep.mubr.f32.mxu0 %v533
      %1540 = vmatmul.mubr.f32.gmra.mxu0 %v430
      %v1541 = vpop.f32.mrf.mxu0
      %v1542 = vadd.f32 %v1357, %v1541
      %v1543 = vpop.f32.mrf.mxu0
      %1544 = vmatprep.mubr.f32.mxu0 %v535
      %1545 = vmatmul.mubr.f32.gmra.mxu0 %v431
      %v1546 = vpop.f32.mrf.mxu0
      %v1547 = vadd.f32 %v1362, %v1546
      %v1548 = vpop.f32.mrf.mxu0
      %1549 = vmatprep.mubr.f32.mxu0 %v650
      %1550 = vmatmul.mubr.f32.gmra.mxu0 %v433
      %v1551 = vpop.f32.mrf.mxu0
      %v1552 = vadd.f32 %v1367, %v1551
      %v1553 = vpop.f32.mrf.mxu0
      %1554 = vmatprep.mubr.f32.mxu0 %v652
      %1555 = vmatmul.mubr.f32.gmra.mxu0 %v434
      %v1556 = vpop.f32.mrf.mxu0
      %v1557 = vadd.f32 %v1372, %v1556
      %v1558 = vpop.f32.mrf.mxu0
      %1559 = vmatprep.mubr.f32.mxu0 %v667
      %1560 = vmatmul.mubr.f32.gmra.mxu0 %v436
      %v1561 = vpop.f32.mrf.mxu0
      %v1562 = vadd.f32 %v1377, %v1561
      %v1563 = vpop.f32.mrf.mxu0
      %1564 = vmatprep.mubr.f32.mxu0 %v669
      %1565 = vmatmul.mubr.f32.gmra.mxu0 %v437
      %v1566 = vpop.f32.mrf.mxu0
      %v1567 = vadd.f32 %v1382, %v1566
      %v1568 = vpop.f32.mrf.mxu0
      %1569 = vdwg.mxu0
      %1570 = vmatprep.subr.mxu0 0.0
      %1571 = vmatpush1.msra.mxu0 %v822
      %1572 = vmatprep.subr.mxu0 0.0
      %1573 = vmatpush1.msra.mxu0 %v821
      %1574 = vmatprep.subr.mxu0 0.0
      %1575 = vmatpush1.msra.mxu0 %v820
      %1576 = vmatprep.subr.mxu0 0.0
      %1577 = vmatpush1.msra.mxu0 %v819
      %1578 = vmatprep.subr.mxu0 0.0
      %1579 = vmatpush1.msra.mxu0 %v818
      %1580 = vmatprep.subr.mxu0 0.0
      %1581 = vmatpush1.msra.mxu0 %v817
      %1582 = vmatprep.subr.mxu0 0.0
      %1583 = vmatpush1.msra.mxu0 %v816
      %1584 = vmatprep.subr.mxu0 0.0
      %1585 = vmatpush1.msra.mxu0 %v815
      %1586 = vmatprep.subr.mxu0 0.0
      %1587 = vmatpush1.msra.mxu0 %v814
      %1588 = vmatprep.subr.mxu0 0.0
      %1589 = vmatpush1.msra.mxu0 %v813
      %1590 = vmatprep.subr.mxu0 0.0
      %1591 = vmatpush1.msra.mxu0 %v812
      %1592 = vmatprep.subr.mxu0 0.0
      %1593 = vmatpush1.msra.mxu0 %v811
      %1594 = vmatprep.subr.mxu0 0.0
      %1595 = vmatpush1.msra.mxu0 %v810
      %1596 = vmatprep.subr.mxu0 0.0
      %1597 = vmatpush1.msra.mxu0 %v809
      %1598 = vmatprep.subr.mxu0 0.0
      %1599 = vmatpush1.msra.mxu0 %v808
      %1600 = vmatprep.subr.mxu0 0.0
      %1601 = vmatpush1.msra.mxu0 %v807
      %1602 = vmatprep.subr.mxu0 0.0
      %1603 = vmatpush2.msra.mxu0 0.0
      %1604 = vmatprep.subr.mxu0 0.0
      %1605 = vmatpush2.msra.mxu0 0.0
      %1606 = vmatprep.subr.mxu0 0.0
      %1607 = vmatpush2.msra.mxu0 0.0
      %1608 = vmatprep.subr.mxu0 0.0
      %1609 = vmatpush2.msra.mxu0 0.0
      %1610 = vmatprep.subr.mxu0 0.0
      %1611 = vmatpush2.msra.mxu0 0.0
      %1612 = vmatprep.subr.mxu0 0.0
      %1613 = vmatpush2.msra.mxu0 0.0
      %1614 = vmatprep.subr.mxu0 0.0
      %1615 = vmatpush2.msra.mxu0 0.0
      %1616 = vmatprep.subr.mxu0 0.0
      %1617 = vmatpush2.msra.mxu0 0.0
      %1618 = vmatprep.subr.mxu0 0.0
      %1619 = vmatpush2.msra.mxu0 0.0
      %1620 = vmatprep.subr.mxu0 0.0
      %1621 = vmatpush2.msra.mxu0 0.0
      %1622 = vmatprep.subr.mxu0 0.0
      %1623 = vmatpush2.msra.mxu0 0.0
      %1624 = vmatprep.subr.mxu0 0.0
      %1625 = vmatpush2.msra.mxu0 0.0
      %1626 = vmatprep.subr.mxu0 0.0
      %1627 = vmatpush2.msra.mxu0 0.0
      %1628 = vmatprep.subr.mxu0 0.0
      %1629 = vmatpush2.msra.mxu0 0.0
      %1630 = vmatprep.subr.mxu0 0.0
      %1631 = vmatpush2.msra.mxu0 0.0
      %1632 = vmatprep.subr.mxu0 0.0
      %1633 = vmatpush2.msra.mxu0 0.0
      %1634 = vmatprep.mubr.f32.mxu0 0.0
      %1635 = vmatmul.mubr.f32.gmra.mxu0 %v573
      %v1636 = vpop.f32.mrf.mxu0
      %v1637 = vadd.f32 %v1452, %v1636
      %v1638 = vpop.f32.mrf.mxu0
      %1639 = vmatprep.mubr.f32.mxu0 0.0
      %1640 = vmatmul.mubr.f32.gmra.mxu0 %v575
      %v1641 = vpop.f32.mrf.mxu0
      %v1642 = vadd.f32 %v1457, %v1641
      %v1643 = vpop.f32.mrf.mxu0
      %1644 = vmatprep.mubr.f32.mxu0 0.0
      %1645 = vmatmul.mubr.f32.gmra.mxu0 %v578
      %v1646 = vpop.f32.mrf.mxu0
      %v1647 = vadd.f32 %v1462, %v1646
      %v1648 = vpop.f32.mrf.mxu0
      %1649 = vmatprep.mubr.f32.mxu0 0.0
      %1650 = vmatmul.mubr.f32.gmra.mxu0 %v580
      %v1651 = vpop.f32.mrf.mxu0
      %v1652 = vadd.f32 %v1467, %v1651
      %v1653 = vpop.f32.mrf.mxu0
      %1654 = vmatprep.mubr.f32.mxu0 0.0
      %1655 = vmatmul.mubr.f32.gmra.mxu0 %v583
      %v1656 = vpop.f32.mrf.mxu0
      %v1657 = vadd.f32 %v1472, %v1656
      %v1658 = vpop.f32.mrf.mxu0
      %1659 = vmatprep.mubr.f32.mxu0 0.0
      %1660 = vmatmul.mubr.f32.gmra.mxu0 %v585
      %v1661 = vpop.f32.mrf.mxu0
      %v1662 = vadd.f32 %v1477, %v1661
      %v1663 = vpop.f32.mrf.mxu0
      %1664 = vmatprep.mubr.f32.mxu0 0.0
      %1665 = vmatmul.mubr.f32.gmra.mxu0 %v588
      %v1666 = vpop.f32.mrf.mxu0
      %v1667 = vadd.f32 %v1482, %v1666
      %v1668 = vpop.f32.mrf.mxu0
      %1669 = vmatprep.mubr.f32.mxu0 0.0
      %1670 = vmatmul.mubr.f32.gmra.mxu0 %v590
      %v1671 = vpop.f32.mrf.mxu0
      %v1672 = vadd.f32 %v1487, %v1671
      %v1673 = vpop.f32.mrf.mxu0
      %1674 = vmatprep.mubr.f32.mxu0 0.0
      %1675 = vmatmul.mubr.f32.gmra.mxu0 %v593
      %v1676 = vpop.f32.mrf.mxu0
      %v1677 = vadd.f32 %v1492, %v1676
      %v1678 = vpop.f32.mrf.mxu0
      %1679 = vmatprep.mubr.f32.mxu0 0.0
      %1680 = vmatmul.mubr.f32.gmra.mxu0 %v595
      %v1681 = vpop.f32.mrf.mxu0
      %v1682 = vadd.f32 %v1497, %v1681
      %v1683 = vpop.f32.mrf.mxu0
      %1684 = vmatprep.mubr.f32.mxu0 0.0
      %1685 = vmatmul.mubr.f32.gmra.mxu0 %v598
      %v1686 = vpop.f32.mrf.mxu0
      %v1687 = vadd.f32 %v1502, %v1686
      %v1688 = vpop.f32.mrf.mxu0
      %1689 = vmatprep.mubr.f32.mxu0 0.0
      %1690 = vmatmul.mubr.f32.gmra.mxu0 %v600
      %v1691 = vpop.f32.mrf.mxu0
      %v1692 = vadd.f32 %v1507, %v1691
      %v1693 = vpop.f32.mrf.mxu0
      %1694 = vmatprep.mubr.f32.mxu0 0.0
      %1695 = vmatmul.mubr.f32.gmra.mxu0 %v603
      %v1696 = vpop.f32.mrf.mxu0
      %v1697 = vadd.f32 %v1512, %v1696
      %v1698 = vpop.f32.mrf.mxu0
      %1699 = vmatprep.mubr.f32.mxu0 0.0
      %1700 = vmatmul.mubr.f32.gmra.mxu0 %v605
      %v1701 = vpop.f32.mrf.mxu0
      %v1702 = vadd.f32 %v1517, %v1701
      %v1703 = vpop.f32.mrf.mxu0
      %1704 = vmatprep.mubr.f32.mxu0 0.0
      %1705 = vmatmul.mubr.f32.gmra.mxu0 %v608
      %v1706 = vpop.f32.mrf.mxu0
      %v1707 = vadd.f32 %v1522, %v1706
      %v1708 = vpop.f32.mrf.mxu0
      %1709 = vmatprep.mubr.f32.mxu0 0.0
      %1710 = vmatmul.mubr.f32.gmra.mxu0 %v610
      %v1711 = vpop.f32.mrf.mxu0
      %v1712 = vadd.f32 %v1527, %v1711
      %v1713 = vpop.f32.mrf.mxu0
      %1714 = vmatprep.mubr.f32.mxu0 0.0
      %1715 = vmatmul.mubr.f32.gmra.mxu0 %v613
      %v1716 = vpop.f32.mrf.mxu0
      %v1717 = vadd.f32 %v1532, %v1716
      %v1718 = vpop.f32.mrf.mxu0
      %1719 = vmatprep.mubr.f32.mxu0 0.0
      %1720 = vmatmul.mubr.f32.gmra.mxu0 %v615
      %v1721 = vpop.f32.mrf.mxu0
      %v1722 = vadd.f32 %v1537, %v1721
      %v1723 = vpop.f32.mrf.mxu0
      %1724 = vmatprep.mubr.f32.mxu0 0.0
      %1725 = vmatmul.mubr.f32.gmra.mxu0 %v618
      %v1726 = vpop.f32.mrf.mxu0
      %v1727 = vadd.f32 %v1542, %v1726
      %v1728 = vpop.f32.mrf.mxu0
      %1729 = vmatprep.mubr.f32.mxu0 0.0
      %1730 = vmatmul.mubr.f32.gmra.mxu0 %v620
      %v1731 = vpop.f32.mrf.mxu0
      %v1732 = vadd.f32 %v1547, %v1731
      %v1733 = vpop.f32.mrf.mxu0
      %1734 = vmatprep.mubr.f32.mxu0 0.0
      %1735 = vmatmul.mubr.f32.gmra.mxu0 %v657
      %v1736 = vpop.f32.mrf.mxu0
      %v1737 = vadd.f32 %v1552, %v1736
      %v1738 = vpop.f32.mrf.mxu0
      %1739 = vmatprep.mubr.f32.mxu0 0.0
      %1740 = vmatmul.mubr.f32.gmra.mxu0 %v659
      %v1741 = vpop.f32.mrf.mxu0
      %v1742 = vadd.f32 %v1557, %v1741
      %v1743 = vpop.f32.mrf.mxu0
      %1744 = vmatprep.mubr.f32.mxu0 0.0
      %1745 = vmatmul.mubr.f32.gmra.mxu0 %v674
      %v1746 = vpop.f32.mrf.mxu0
      %v1747 = vadd.f32 %v1562, %v1746
      %v1748 = vpop.f32.mrf.mxu0
      %1749 = vmatprep.mubr.f32.mxu0 0.0
      %1750 = vmatmul.mubr.f32.gmra.mxu0 %v676
      %v1751 = vpop.f32.mrf.mxu0
      %v1752 = vadd.f32 %v1567, %v1751
      %v1753 = vpop.f32.mrf.mxu0
      %1754 = vdwg.mxu0
      %v1755 = vmax.f32 %v1637, 0.0
      %v1756 = vmax.f32 %v1642, 0.0
      %v1757 = vmax.f32 %v1647, 0.0
      %v1758 = vmax.f32 %v1652, 0.0
      %v1759 = vmax.f32 %v1657, 0.0
      %v1760 = vmax.f32 %v1662, 0.0
      %v1761 = vmax.f32 %v1667, 0.0
      %v1762 = vmax.f32 %v1672, 0.0
      %v1763 = vmax.f32 %v1677, 0.0
      %v1764 = vmax.f32 %v1682, 0.0
      %v1765 = vmax.f32 %v1687, 0.0
      %v1766 = vmax.f32 %v1692, 0.0
      %v1767 = vmax.f32 %v1697, 0.0
      %v1768 = vmax.f32 %v1702, 0.0
      %v1769 = vmax.f32 %v1707, 0.0
      %v1770 = vmax.f32 %v1712, 0.0
      %v1771 = vmax.f32 %v1717, 0.0
      %v1772 = vmax.f32 %v1722, 0.0
      %v1773 = vmax.f32 %v1727, 0.0
      %v1774 = vmax.f32 %v1732, 0.0
      %v1775 = vmax.f32 %v1737, 0.0
      %v1776 = vmax.f32 %v1742, 0.0
      %v1777 = vmax.f32 %v1747, 0.0
      %v1778 = vmax.f32 %v1752, 0.0
      %v1779 = vlaneseq
      %v1780 = vshrl.u32 %v1779, 7
      %v1781 = vadd.s32 %v1780, 8
      %v1782 = vadd.s32 %v1780, 16
      %v1783 = vadd.s32 %v1780, 24
      %v1784 = vadd.s32 %v1780, 32
      %v1785 = vadd.s32 %v1780, 40
      %v1786 = vadd.s32 %v1780, 48
      %v1787 = vadd.s32 %v1780, 56
      %v1788 = vadd.s32 %v1780, 64
      %v1789 = vadd.s32 %v1780, 72
      %v1790 = vadd.s32 %v1780, 80
      %v1791 = vadd.s32 %v1780, 88
      %v1792 = vadd.s32 %v1780, 96
      %v1793 = vadd.s32 %v1780, 104
      %v1794 = vadd.s32 %v1780, 112
      %v1795 = vadd.s32 %v1780, 120
      %v1796 = vadd.s32 %v1780, 128
      %v1797 = vadd.s32 %v1780, 136
      %v1798 = vadd.s32 %v1780, 144
      %v1799 = vadd.s32 %v1780, 152
      %v1800 = vadd.s32 %v1780, 160
      %v1801 = vadd.s32 %v1780, 168
      %v1802 = vadd.s32 %v1780, 176
      %v1803 = vadd.s32 %v1780, 184
      %vm1804 = vcmp.lt.s32.totalorder %v1780, 0
      %v1805 = vsub.s32 0, %v1780
      %v1806 = vsel %vm1804, %v1805, %v1780
      %v1807 = vshrl.u32 %v1806, 4
      %v1808 = vand.u32 %v1806, 15
      %v1809 = vsub.s32 0, %v1808
      %v1810 = vsel %vm1804, %v1809, %v1808
      %vm1811 = vcmp.lt.s32.totalorder %v1781, 0
      %v1812 = vsub.s32 0, %v1781
      %v1813 = vsel %vm1811, %v1812, %v1781
      %v1814 = vshrl.u32 %v1813, 4
      %v1815 = vand.u32 %v1813, 15
      %v1816 = vsub.s32 0, %v1815
      %v1817 = vsel %vm1811, %v1816, %v1815
      %vm1818 = vcmp.lt.s32.totalorder %v1782, 0
      %v1819 = vsub.s32 0, %v1782
      %v1820 = vsel %vm1818, %v1819, %v1782
      %v1821 = vshrl.u32 %v1820, 4
      %v1822 = vand.u32 %v1820, 15
      %v1823 = vsub.s32 0, %v1822
      %v1824 = vsel %vm1818, %v1823, %v1822
      %vm1825 = vcmp.lt.s32.totalorder %v1783, 0
      %v1826 = vsub.s32 0, %v1783
      %v1827 = vsel %vm1825, %v1826, %v1783
      %v1828 = vshrl.u32 %v1827, 4
      %v1829 = vand.u32 %v1827, 15
      %v1830 = vsub.s32 0, %v1829
      %v1831 = vsel %vm1825, %v1830, %v1829
      %vm1832 = vcmp.lt.s32.totalorder %v1784, 0
      %v1833 = vsub.s32 0, %v1784
      %v1834 = vsel %vm1832, %v1833, %v1784
      %v1835 = vshrl.u32 %v1834, 4
      %v1836 = vand.u32 %v1834, 15
      %v1837 = vsub.s32 0, %v1836
      %v1838 = vsel %vm1832, %v1837, %v1836
      %vm1839 = vcmp.lt.s32.totalorder %v1785, 0
      %v1840 = vsub.s32 0, %v1785
      %v1841 = vsel %vm1839, %v1840, %v1785
      %v1842 = vshrl.u32 %v1841, 4
      %v1843 = vand.u32 %v1841, 15
      %v1844 = vsub.s32 0, %v1843
      %v1845 = vsel %vm1839, %v1844, %v1843
      %vm1846 = vcmp.lt.s32.totalorder %v1786, 0
      %v1847 = vsub.s32 0, %v1786
      %v1848 = vsel %vm1846, %v1847, %v1786
      %v1849 = vshrl.u32 %v1848, 4
      %v1850 = vand.u32 %v1848, 15
      %v1851 = vsub.s32 0, %v1850
      %v1852 = vsel %vm1846, %v1851, %v1850
      %vm1853 = vcmp.lt.s32.totalorder %v1787, 0
      %v1854 = vsub.s32 0, %v1787
      %v1855 = vsel %vm1853, %v1854, %v1787
      %v1856 = vshrl.u32 %v1855, 4
      %v1857 = vand.u32 %v1855, 15
      %v1858 = vsub.s32 0, %v1857
      %v1859 = vsel %vm1853, %v1858, %v1857
      %vm1860 = vcmp.lt.s32.totalorder %v1788, 0
      %v1861 = vsub.s32 0, %v1788
      %v1862 = vsel %vm1860, %v1861, %v1788
      %v1863 = vshrl.u32 %v1862, 4
      %v1864 = vand.u32 %v1862, 15
      %v1865 = vsub.s32 0, %v1864
      %v1866 = vsel %vm1860, %v1865, %v1864
      %vm1867 = vcmp.lt.s32.totalorder %v1789, 0
      %v1868 = vsub.s32 0, %v1789
      %v1869 = vsel %vm1867, %v1868, %v1789
      %v1870 = vshrl.u32 %v1869, 4
      %v1871 = vand.u32 %v1869, 15
      %v1872 = vsub.s32 0, %v1871
      %v1873 = vsel %vm1867, %v1872, %v1871
      %vm1874 = vcmp.lt.s32.totalorder %v1790, 0
      %v1875 = vsub.s32 0, %v1790
      %v1876 = vsel %vm1874, %v1875, %v1790
      %v1877 = vshrl.u32 %v1876, 4
      %v1878 = vand.u32 %v1876, 15
      %v1879 = vsub.s32 0, %v1878
      %v1880 = vsel %vm1874, %v1879, %v1878
      %vm1881 = vcmp.lt.s32.totalorder %v1791, 0
      %v1882 = vsub.s32 0, %v1791
      %v1883 = vsel %vm1881, %v1882, %v1791
      %v1884 = vshrl.u32 %v1883, 4
      %v1885 = vand.u32 %v1883, 15
      %v1886 = vsub.s32 0, %v1885
      %v1887 = vsel %vm1881, %v1886, %v1885
      %vm1888 = vcmp.lt.s32.totalorder %v1792, 0
      %v1889 = vsub.s32 0, %v1792
      %v1890 = vsel %vm1888, %v1889, %v1792
      %v1891 = vshrl.u32 %v1890, 4
      %v1892 = vand.u32 %v1890, 15
      %v1893 = vsub.s32 0, %v1892
      %v1894 = vsel %vm1888, %v1893, %v1892
      %vm1895 = vcmp.lt.s32.totalorder %v1793, 0
      %v1896 = vsub.s32 0, %v1793
      %v1897 = vsel %vm1895, %v1896, %v1793
      %v1898 = vshrl.u32 %v1897, 4
      %v1899 = vand.u32 %v1897, 15
      %v1900 = vsub.s32 0, %v1899
      %v1901 = vsel %vm1895, %v1900, %v1899
      %vm1902 = vcmp.lt.s32.totalorder %v1794, 0
      %v1903 = vsub.s32 0, %v1794
      %v1904 = vsel %vm1902, %v1903, %v1794
      %v1905 = vshrl.u32 %v1904, 4
      %v1906 = vand.u32 %v1904, 15
      %v1907 = vsub.s32 0, %v1906
      %v1908 = vsel %vm1902, %v1907, %v1906
      %vm1909 = vcmp.lt.s32.totalorder %v1795, 0
      %v1910 = vsub.s32 0, %v1795
      %v1911 = vsel %vm1909, %v1910, %v1795
      %v1912 = vshrl.u32 %v1911, 4
      %v1913 = vand.u32 %v1911, 15
      %v1914 = vsub.s32 0, %v1913
      %v1915 = vsel %vm1909, %v1914, %v1913
      %vm1916 = vcmp.lt.s32.totalorder %v1796, 0
      %v1917 = vsub.s32 0, %v1796
      %v1918 = vsel %vm1916, %v1917, %v1796
      %v1919 = vshrl.u32 %v1918, 4
      %v1920 = vand.u32 %v1918, 15
      %v1921 = vsub.s32 0, %v1920
      %v1922 = vsel %vm1916, %v1921, %v1920
      %vm1923 = vcmp.lt.s32.totalorder %v1797, 0
      %v1924 = vsub.s32 0, %v1797
      %v1925 = vsel %vm1923, %v1924, %v1797
      %v1926 = vshrl.u32 %v1925, 4
      %v1927 = vand.u32 %v1925, 15
      %v1928 = vsub.s32 0, %v1927
      %v1929 = vsel %vm1923, %v1928, %v1927
      %vm1930 = vcmp.lt.s32.totalorder %v1798, 0
      %v1931 = vsub.s32 0, %v1798
      %v1932 = vsel %vm1930, %v1931, %v1798
      %v1933 = vshrl.u32 %v1932, 4
      %v1934 = vand.u32 %v1932, 15
      %v1935 = vsub.s32 0, %v1934
      %v1936 = vsel %vm1930, %v1935, %v1934
      %vm1937 = vcmp.lt.s32.totalorder %v1799, 0
      %v1938 = vsub.s32 0, %v1799
      %v1939 = vsel %vm1937, %v1938, %v1799
      %v1940 = vshrl.u32 %v1939, 4
      %v1941 = vand.u32 %v1939, 15
      %v1942 = vsub.s32 0, %v1941
      %v1943 = vsel %vm1937, %v1942, %v1941
      %vm1944 = vcmp.lt.s32.totalorder %v1800, 0
      %v1945 = vsub.s32 0, %v1800
      %v1946 = vsel %vm1944, %v1945, %v1800
      %v1947 = vshrl.u32 %v1946, 4
      %v1948 = vand.u32 %v1946, 15
      %v1949 = vsub.s32 0, %v1948
      %v1950 = vsel %vm1944, %v1949, %v1948
      %vm1951 = vcmp.lt.s32.totalorder %v1801, 0
      %v1952 = vsub.s32 0, %v1801
      %v1953 = vsel %vm1951, %v1952, %v1801
      %v1954 = vshrl.u32 %v1953, 4
      %v1955 = vand.u32 %v1953, 15
      %v1956 = vsub.s32 0, %v1955
      %v1957 = vsel %vm1951, %v1956, %v1955
      %vm1958 = vcmp.lt.s32.totalorder %v1802, 0
      %v1959 = vsub.s32 0, %v1802
      %v1960 = vsel %vm1958, %v1959, %v1802
      %v1961 = vshrl.u32 %v1960, 4
      %v1962 = vand.u32 %v1960, 15
      %v1963 = vsub.s32 0, %v1962
      %v1964 = vsel %vm1958, %v1963, %v1962
      %vm1965 = vcmp.lt.s32.totalorder %v1803, 0
      %v1966 = vsub.s32 0, %v1803
      %v1967 = vsel %vm1965, %v1966, %v1803
      %v1968 = vshrl.u32 %v1967, 4
      %v1969 = vand.u32 %v1967, 15
      %v1970 = vsub.s32 0, %v1969
      %v1971 = vsel %vm1965, %v1970, %v1969
      %vm1972 = vcmp.ne.s32.totalorder %v1810, 0
      %vm1973 = vcmp.ne.s32.totalorder %v1817, 0
      %vm1974 = vcmp.ne.s32.totalorder %v1824, 0
      %vm1975 = vcmp.ne.s32.totalorder %v1831, 0
      %vm1976 = vcmp.ne.s32.totalorder %v1838, 0
      %vm1977 = vcmp.ne.s32.totalorder %v1845, 0
      %vm1978 = vcmp.ne.s32.totalorder %v1852, 0
      %vm1979 = vcmp.ne.s32.totalorder %v1859, 0
      %vm1980 = vcmp.ne.s32.totalorder %v1866, 0
      %vm1981 = vcmp.ne.s32.totalorder %v1873, 0
      %vm1982 = vcmp.ne.s32.totalorder %v1880, 0
      %vm1983 = vcmp.ne.s32.totalorder %v1887, 0
      %vm1984 = vcmp.ne.s32.totalorder %v1894, 0
      %vm1985 = vcmp.ne.s32.totalorder %v1901, 0
      %vm1986 = vcmp.ne.s32.totalorder %v1908, 0
      %vm1987 = vcmp.ne.s32.totalorder %v1915, 0
      %vm1988 = vcmp.ne.s32.totalorder %v1922, 0
      %vm1989 = vcmp.ne.s32.totalorder %v1929, 0
      %vm1990 = vcmp.ne.s32.totalorder %v1936, 0
      %vm1991 = vcmp.ne.s32.totalorder %v1943, 0
      %vm1992 = vcmp.ne.s32.totalorder %v1950, 0
      %vm1993 = vcmp.ne.s32.totalorder %v1957, 0
      %vm1994 = vcmp.ne.s32.totalorder %v1964, 0
      %vm1995 = vcmp.ne.s32.totalorder %v1971, 0
      %vm1996 = vcmp.lt.s32.totalorder %v1810, 0
      %vm1997 = vcmp.lt.s32.totalorder %v1817, 0
      %vm1998 = vcmp.lt.s32.totalorder %v1824, 0
      %vm1999 = vcmp.lt.s32.totalorder %v1831, 0
      %vm2000 = vcmp.lt.s32.totalorder %v1838, 0
      %vm2001 = vcmp.lt.s32.totalorder %v1845, 0
      %vm2002 = vcmp.lt.s32.totalorder %v1852, 0
      %vm2003 = vcmp.lt.s32.totalorder %v1859, 0
      %vm2004 = vcmp.lt.s32.totalorder %v1866, 0
      %vm2005 = vcmp.lt.s32.totalorder %v1873, 0
      %vm2006 = vcmp.lt.s32.totalorder %v1880, 0
      %vm2007 = vcmp.lt.s32.totalorder %v1887, 0
      %vm2008 = vcmp.lt.s32.totalorder %v1894, 0
      %vm2009 = vcmp.lt.s32.totalorder %v1901, 0
      %vm2010 = vcmp.lt.s32.totalorder %v1908, 0
      %vm2011 = vcmp.lt.s32.totalorder %v1915, 0
      %vm2012 = vcmp.lt.s32.totalorder %v1922, 0
      %vm2013 = vcmp.lt.s32.totalorder %v1929, 0
      %vm2014 = vcmp.lt.s32.totalorder %v1936, 0
      %vm2015 = vcmp.lt.s32.totalorder %v1943, 0
      %vm2016 = vcmp.lt.s32.totalorder %v1950, 0
      %vm2017 = vcmp.lt.s32.totalorder %v1957, 0
      %vm2018 = vcmp.lt.s32.totalorder %v1964, 0
      %vm2019 = vcmp.lt.s32.totalorder %v1971, 0
      %vm2020 = vmand %vm1996, %vm1972
      %vm2021 = vmand %vm1997, %vm1973
      %vm2022 = vmand %vm1998, %vm1974
      %vm2023 = vmand %vm1999, %vm1975
      %vm2024 = vmand %vm2000, %vm1976
      %vm2025 = vmand %vm2001, %vm1977
      %vm2026 = vmand %vm2002, %vm1978
      %vm2027 = vmand %vm2003, %vm1979
      %vm2028 = vmand %vm2004, %vm1980
      %vm2029 = vmand %vm2005, %vm1981
      %vm2030 = vmand %vm2006, %vm1982
      %vm2031 = vmand %vm2007, %vm1983
      %vm2032 = vmand %vm2008, %vm1984
      %vm2033 = vmand %vm2009, %vm1985
      %vm2034 = vmand %vm2010, %vm1986
      %vm2035 = vmand %vm2011, %vm1987
      %vm2036 = vmand %vm2012, %vm1988
      %vm2037 = vmand %vm2013, %vm1989
      %vm2038 = vmand %vm2014, %vm1990
      %vm2039 = vmand %vm2015, %vm1991
      %vm2040 = vmand %vm2016, %vm1992
      %vm2041 = vmand %vm2017, %vm1993
      %vm2042 = vmand %vm2018, %vm1994
      %vm2043 = vmand %vm2019, %vm1995
      %v2044 = vadd.s32 %v1810, 16
      %v2045 = vadd.s32 %v1817, 16
      %v2046 = vadd.s32 %v1824, 16
      %v2047 = vadd.s32 %v1831, 16
      %v2048 = vadd.s32 %v1838, 16
      %v2049 = vadd.s32 %v1845, 16
      %v2050 = vadd.s32 %v1852, 16
      %v2051 = vadd.s32 %v1859, 16
      %v2052 = vadd.s32 %v1866, 16
      %v2053 = vadd.s32 %v1873, 16
      %v2054 = vadd.s32 %v1880, 16
      %v2055 = vadd.s32 %v1887, 16
      %v2056 = vadd.s32 %v1894, 16
      %v2057 = vadd.s32 %v1901, 16
      %v2058 = vadd.s32 %v1908, 16
      %v2059 = vadd.s32 %v1915, 16
      %v2060 = vadd.s32 %v1922, 16
      %v2061 = vadd.s32 %v1929, 16
      %v2062 = vadd.s32 %v1936, 16
      %v2063 = vadd.s32 %v1943, 16
      %v2064 = vadd.s32 %v1950, 16
      %v2065 = vadd.s32 %v1957, 16
      %v2066 = vadd.s32 %v1964, 16
      %v2067 = vadd.s32 %v1971, 16
      %v2068 = vsel %vm2020, %v2044, %v1810
      %v2069 = vsel %vm2021, %v2045, %v1817
      %v2070 = vsel %vm2022, %v2046, %v1824
      %v2071 = vsel %vm2023, %v2047, %v1831
      %v2072 = vsel %vm2024, %v2048, %v1838
      %v2073 = vsel %vm2025, %v2049, %v1845
      %v2074 = vsel %vm2026, %v2050, %v1852
      %v2075 = vsel %vm2027, %v2051, %v1859
      %v2076 = vsel %vm2028, %v2052, %v1866
      %v2077 = vsel %vm2029, %v2053, %v1873
      %v2078 = vsel %vm2030, %v2054, %v1880
      %v2079 = vsel %vm2031, %v2055, %v1887
      %v2080 = vsel %vm2032, %v2056, %v1894
      %v2081 = vsel %vm2033, %v2057, %v1901
      %v2082 = vsel %vm2034, %v2058, %v1908
      %v2083 = vsel %vm2035, %v2059, %v1915
      %v2084 = vsel %vm2036, %v2060, %v1922
      %v2085 = vsel %vm2037, %v2061, %v1929
      %v2086 = vsel %vm2038, %v2062, %v1936
      %v2087 = vsel %vm2039, %v2063, %v1943
      %v2088 = vsel %vm2040, %v2064, %v1950
      %v2089 = vsel %vm2041, %v2065, %v1957
      %v2090 = vsel %vm2042, %v2066, %v1964
      %v2091 = vsel %vm2043, %v2067, %v1971
      %vm2092 = vcmp.lt.s32.totalorder %v2068, 12
      %vm2093 = vcmp.lt.s32.totalorder %v2069, 12
      %vm2094 = vcmp.lt.s32.totalorder %v2070, 12
      %vm2095 = vcmp.lt.s32.totalorder %v2071, 12
      %vm2096 = vcmp.lt.s32.totalorder %v2072, 12
      %vm2097 = vcmp.lt.s32.totalorder %v2073, 12
      %vm2098 = vcmp.lt.s32.totalorder %v2074, 12
      %vm2099 = vcmp.lt.s32.totalorder %v2075, 12
      %vm2100 = vcmp.lt.s32.totalorder %v2076, 12
      %vm2101 = vcmp.lt.s32.totalorder %v2077, 12
      %vm2102 = vcmp.lt.s32.totalorder %v2078, 12
      %vm2103 = vcmp.lt.s32.totalorder %v2079, 12
      %vm2104 = vcmp.lt.s32.totalorder %v2080, 12
      %vm2105 = vcmp.lt.s32.totalorder %v2081, 12
      %vm2106 = vcmp.lt.s32.totalorder %v2082, 12
      %vm2107 = vcmp.lt.s32.totalorder %v2083, 12
      %vm2108 = vcmp.lt.s32.totalorder %v2084, 12
      %vm2109 = vcmp.lt.s32.totalorder %v2085, 12
      %vm2110 = vcmp.lt.s32.totalorder %v2086, 12
      %vm2111 = vcmp.lt.s32.totalorder %v2087, 12
      %vm2112 = vcmp.lt.s32.totalorder %v2088, 12
      %vm2113 = vcmp.lt.s32.totalorder %v2089, 12
      %vm2114 = vcmp.lt.s32.totalorder %v2090, 12
      %vm2115 = vcmp.lt.s32.totalorder %v2091, 12
      %v2116 = vsel %vm2092, 1, 0
      %v2117 = vsel %vm2093, 1, 0
      %v2118 = vsel %vm2094, 1, 0
      %v2119 = vsel %vm2095, 1, 0
      %v2120 = vsel %vm2096, 1, 0
      %v2121 = vsel %vm2097, 1, 0
      %v2122 = vsel %vm2098, 1, 0
      %v2123 = vsel %vm2099, 1, 0
      %v2124 = vsel %vm2100, 1, 0
      %v2125 = vsel %vm2101, 1, 0
      %v2126 = vsel %vm2102, 1, 0
      %v2127 = vsel %vm2103, 1, 0
      %v2128 = vsel %vm2104, 1, 0
      %v2129 = vsel %vm2105, 1, 0
      %v2130 = vsel %vm2106, 1, 0
      %v2131 = vsel %vm2107, 1, 0
      %v2132 = vsel %vm2108, 1, 0
      %v2133 = vsel %vm2109, 1, 0
      %v2134 = vsel %vm2110, 1, 0
      %v2135 = vsel %vm2111, 1, 0
      %v2136 = vsel %vm2112, 1, 0
      %v2137 = vsel %vm2113, 1, 0
      %v2138 = vsel %vm2114, 1, 0
      %v2139 = vsel %vm2115, 1, 0
      %vm2140 = vcmp.eq.s32.totalorder %v2116, 1
      %vm2141 = vcmp.eq.s32.totalorder %v2117, 1
      %vm2142 = vcmp.eq.s32.totalorder %v2118, 1
      %vm2143 = vcmp.eq.s32.totalorder %v2119, 1
      %vm2144 = vcmp.eq.s32.totalorder %v2120, 1
      %vm2145 = vcmp.eq.s32.totalorder %v2121, 1
      %vm2146 = vcmp.eq.s32.totalorder %v2122, 1
      %vm2147 = vcmp.eq.s32.totalorder %v2123, 1
      %vm2148 = vcmp.eq.s32.totalorder %v2124, 1
      %vm2149 = vcmp.eq.s32.totalorder %v2125, 1
      %vm2150 = vcmp.eq.s32.totalorder %v2126, 1
      %vm2151 = vcmp.eq.s32.totalorder %v2127, 1
      %vm2152 = vcmp.eq.s32.totalorder %v2128, 1
      %vm2153 = vcmp.eq.s32.totalorder %v2129, 1
      %vm2154 = vcmp.eq.s32.totalorder %v2130, 1
      %vm2155 = vcmp.eq.s32.totalorder %v2131, 1
      %vm2156 = vcmp.eq.s32.totalorder %v2132, 1
      %vm2157 = vcmp.eq.s32.totalorder %v2133, 1
      %vm2158 = vcmp.eq.s32.totalorder %v2134, 1
      %vm2159 = vcmp.eq.s32.totalorder %v2135, 1
      %vm2160 = vcmp.eq.s32.totalorder %v2136, 1
      %vm2161 = vcmp.eq.s32.totalorder %v2137, 1
      %vm2162 = vcmp.eq.s32.totalorder %v2138, 1
      %vm2163 = vcmp.eq.s32.totalorder %v2139, 1
      %v2164 = vsel %vm2140, %v1755, 0.0
      %v2165 = vsel %vm2141, %v1756, 0.0
      %v2166 = vsel %vm2142, %v1757, 0.0
      %v2167 = vsel %vm2143, %v1758, 0.0
      %v2168 = vsel %vm2144, %v1759, 0.0
      %v2169 = vsel %vm2145, %v1760, 0.0
      %v2170 = vsel %vm2146, %v1761, 0.0
      %v2171 = vsel %vm2147, %v1762, 0.0
      %v2172 = vsel %vm2148, %v1763, 0.0
      %v2173 = vsel %vm2149, %v1764, 0.0
      %v2174 = vsel %vm2150, %v1765, 0.0
      %v2175 = vsel %vm2151, %v1766, 0.0
      %v2176 = vsel %vm2152, %v1767, 0.0
      %v2177 = vsel %vm2153, %v1768, 0.0
      %v2178 = vsel %vm2154, %v1769, 0.0
      %v2179 = vsel %vm2155, %v1770, 0.0
      %v2180 = vsel %vm2156, %v1771, 0.0
      %v2181 = vsel %vm2157, %v1772, 0.0
      %v2182 = vsel %vm2158, %v1773, 0.0
      %v2183 = vsel %vm2159, %v1774, 0.0
      %v2184 = vsel %vm2160, %v1775, 0.0
      %v2185 = vsel %vm2161, %v1776, 0.0
      %v2186 = vsel %vm2162, %v1777, 0.0
      %v2187 = vsel %vm2163, %v1778, 0.0
      %v2188 = vadd.f32 %v2164, %v2165
      %v2189 = vadd.f32 %v2188, %v2166
      %v2190 = vadd.f32 %v2189, %v2167
      %v2191 = vadd.f32 %v2190, %v2168
      %v2192 = vadd.f32 %v2191, %v2169
      %v2193 = vadd.f32 %v2192, %v2170
      %v2194 = vadd.f32 %v2193, %v2171
      %v2195 = vadd.f32 %v2194, %v2172
      %v2196 = vadd.f32 %v2195, %v2173
      %v2197 = vadd.f32 %v2196, %v2174
      %v2198 = vadd.f32 %v2197, %v2175
      %v2199 = vadd.f32 %v2198, %v2176
      %v2200 = vadd.f32 %v2199, %v2177
      %v2201 = vadd.f32 %v2200, %v2178
      %v2202 = vadd.f32 %v2201, %v2179
      %v2203 = vadd.f32 %v2202, %v2180
      %v2204 = vadd.f32 %v2203, %v2181
      %v2205 = vadd.f32 %v2204, %v2182
      %v2206 = vadd.f32 %v2205, %v2183
      %v2207 = vadd.f32 %v2206, %v2184
      %v2208 = vadd.f32 %v2207, %v2185
      %v2209 = vadd.f32 %v2208, %v2186
      %v2210 = vadd.f32 %v2209, %v2187
      %v2211 = vrot.slane %v2210, 4
      %v2212 = vadd.f32 %v2210, %v2211
      %v2213 = vrot.slane %v2212, 2
      %v2214 = vadd.f32 %v2212, %v2213
      %v2215 = vrot.slane %v2214, 1
      %v2216 = vadd.f32 %v2214, %v2215
      %v2217 = vmul.f32 %v2164, %v2164
      %v2218 = vmul.f32 %v2165, %v2165
      %v2219 = vmul.f32 %v2166, %v2166
      %v2220 = vmul.f32 %v2167, %v2167
      %v2221 = vmul.f32 %v2168, %v2168
      %v2222 = vmul.f32 %v2169, %v2169
      %v2223 = vmul.f32 %v2170, %v2170
      %v2224 = vmul.f32 %v2171, %v2171
      %v2225 = vmul.f32 %v2172, %v2172
      %v2226 = vmul.f32 %v2173, %v2173
      %v2227 = vmul.f32 %v2174, %v2174
      %v2228 = vmul.f32 %v2175, %v2175
      %v2229 = vmul.f32 %v2176, %v2176
      %v2230 = vmul.f32 %v2177, %v2177
      %v2231 = vmul.f32 %v2178, %v2178
      %v2232 = vmul.f32 %v2179, %v2179
      %v2233 = vmul.f32 %v2180, %v2180
      %v2234 = vmul.f32 %v2181, %v2181
      %v2235 = vmul.f32 %v2182, %v2182
      %v2236 = vmul.f32 %v2183, %v2183
      %v2237 = vmul.f32 %v2184, %v2184
      %v2238 = vmul.f32 %v2185, %v2185
      %v2239 = vmul.f32 %v2186, %v2186
      %v2240 = vmul.f32 %v2187, %v2187
      %v2241 = vadd.f32 %v2217, %v2218
      %v2242 = vadd.f32 %v2241, %v2219
      %v2243 = vadd.f32 %v2242, %v2220
      %v2244 = vadd.f32 %v2243, %v2221
      %v2245 = vadd.f32 %v2244, %v2222
      %v2246 = vadd.f32 %v2245, %v2223
      %v2247 = vadd.f32 %v2246, %v2224
      %v2248 = vadd.f32 %v2247, %v2225
      %v2249 = vadd.f32 %v2248, %v2226
      %v2250 = vadd.f32 %v2249, %v2227
      %v2251 = vadd.f32 %v2250, %v2228
      %v2252 = vadd.f32 %v2251, %v2229
      %v2253 = vadd.f32 %v2252, %v2230
      %v2254 = vadd.f32 %v2253, %v2231
      %v2255 = vadd.f32 %v2254, %v2232
      %v2256 = vadd.f32 %v2255, %v2233
      %v2257 = vadd.f32 %v2256, %v2234
      %v2258 = vadd.f32 %v2257, %v2235
      %v2259 = vadd.f32 %v2258, %v2236
      %v2260 = vadd.f32 %v2259, %v2237
      %v2261 = vadd.f32 %v2260, %v2238
      %v2262 = vadd.f32 %v2261, %v2239
      %v2263 = vadd.f32 %v2262, %v2240
      %v2264 = vrot.slane %v2263, 4
      %v2265 = vadd.f32 %v2263, %v2264
      %v2266 = vrot.slane %v2265, 2
      %v2267 = vadd.f32 %v2265, %v2266
      %v2268 = vrot.slane %v2267, 1
      %v2269 = vadd.f32 %v2267, %v2268
      %vm2270 = vcmp.eq.s32.totalorder %v1780, 0
      %v2271 = vsel %vm2270, %v2216, 0.0
      %vm2272 = vcmp.eq.s32.totalorder %v1780, 1
      %v2273 = vsel %vm2272, %v2269, 0.0
      %v2274 = vadd.f32 %v2271, %v2273
      %2275 = vst [vmem:[%s295] sm:$0xff] %v2274
      %2276 = vst [vmem:[%s287] sm:$0xff] %v1755
      %2277 = vst [vmem:[%s287 + $0x8] sm:$0xf] %v1756
      %2278 = vst [vmem:[%s287 + $0x10] sm:$0xff] %v1757
      %2279 = vst [vmem:[%s287 + $0x18] sm:$0xf] %v1758
      %2280 = vst [vmem:[%s287 + $0x20] sm:$0xff] %v1759
      %2281 = vst [vmem:[%s287 + $0x28] sm:$0xf] %v1760
      %2282 = vst [vmem:[%s287 + $0x30] sm:$0xff] %v1761
      %2283 = vst [vmem:[%s287 + $0x38] sm:$0xf] %v1762
      %2284 = vst [vmem:[%s287 + $0x40] sm:$0xff] %v1763
      %2285 = vst [vmem:[%s287 + $0x48] sm:$0xf] %v1764
      %2286 = vst [vmem:[%s287 + $0x50] sm:$0xff] %v1765
      %2287 = vst [vmem:[%s287 + $0x58] sm:$0xf] %v1766
      %2288 = vst [vmem:[%s287 + $0x60] sm:$0xff] %v1767
      %2289 = vst [vmem:[%s287 + $0x68] sm:$0xf] %v1768
      %2290 = vst [vmem:[%s287 + $0x70] sm:$0xff] %v1769
      %2291 = vst [vmem:[%s287 + $0x78] sm:$0xf] %v1770
      %2292 = vst [vmem:[%s287 + $0x80] sm:$0xff] %v1771
      %2293 = vst [vmem:[%s287 + $0x88] sm:$0xf] %v1772
      %2294 = vst [vmem:[%s287 + $0x90] sm:$0xff] %v1773
      %2295 = vst [vmem:[%s287 + $0x98] sm:$0xf] %v1774
      %2296 = vst [vmem:[%s287 + $0xa0] sm:$0xff] %v1775
      %2297 = vst [vmem:[%s287 + $0xa8] sm:$0xf] %v1776
      %2298 = vst [vmem:[%s287 + $0xb0] sm:$0xff] %v1777
      %2299 = vst [vmem:[%s287 + $0xb8] sm:$0xf] %v1778
      %s2300 = smul.u32 12, %s23
      %p2301 = scmp.lt.s32.totalorder %s22, 1
      %s2302 = scalar_select %p2301, %s22, 1
      %p2303 = scmp.lt.s32.totalorder %s2300, 11
      %s2304 = scalar_select %p2303, %s2300, 11
      %s2305 = smul.addr %s2304, 2
      %s2306 = smul.addr %s2302, 24
      %s2307 = sadd.s32 %s2305, %s2306
      %s2308 = smul.addr %s2307, 8
      %s2309 = scalar_lea.vmem %s5, %s2308
      %p2310 = scmp.lt.s32.totalorder %s22, 1
      %s2311 = scalar_select %p2310, %s22, 1
      %p2312 = scmp.lt.s32.totalorder %s23, 0
      %s2313 = scalar_select %p2312, %s23, 0
      %s2314 = sadd.s32 %s2313, %s2311
      %s2315 = smul.addr %s2314, 8
      %s2316 = scalar_lea.vmem %s6, %s2315
      // Predicated region
      $region41: #{conv3x3_forward.4} parent=39 // pred_check
        %p2317 = pneg %p160
      $region42: #{conv3x3_forward.4} parent=39 // pred_check_branch
        %2319 = sbr.rel (%p2317) target = $region44
      $region43: #{conv3x3_forward.4} parent=39 // pred_region
        %s2320 = smul.u32 12, %s23
      $region44: #{conv3x3_forward.4} parent=39 // pred_fallthru
        _
      // Predicated region
      $region45: #{conv3x3_forward.4} parent=39 // pred_check
        %p2321 = pneg %p188
      $region46: #{conv3x3_forward.4} parent=39 // pred_check_branch
        %2323 = sbr.rel (%p2321) target = $region48
      $region47: #{conv3x3_forward.4} parent=39 // pred_region
        _
      $region48: #{conv3x3_forward.4} parent=39 // pred_fallthru
        _
    $region40: #{conv3x3_forward.4} parent=5 // pred_fallthru
      _
    %p2324 = scmp.le.s32.totalorder 2, %s13
    // Predicated region
    $region49: #{conv3x3_forward.4} parent=5 // pred_check
      %p2325 = pneg %p2324
    $region50: #{conv3x3_forward.4} parent=5 // pred_check_branch
      %2327 = sbr.rel (%p2325) target = $region52
    $region51: #{conv3x3_forward.4} parent=5 // pred_region
      %s2328 = ssub.s32 %s13, 2
      // Predicated region
      $region53: #{conv3x3_forward.4} parent=51 // pred_check
        %p2329 = pneg %p166
      $region54: #{conv3x3_forward.4} parent=51 // pred_check_branch
        %2331 = sbr.rel (%p2329) target = $region56
      $region55: #{conv3x3_forward.4} parent=51 // pred_region
        %s2332 = smul.u32 12, %s25
        %p2333 = scmp.lt.s32.totalorder %s24, 1
        %s2334 = scalar_select %p2333, %s24, 1
        %p2335 = scmp.lt.s32.totalorder %s2332, 11
        %s2336 = scalar_select %p2335, %s2332, 11
        %s2337 = smul.addr %s2336, 2
        %s2338 = smul.addr %s2334, 24
        %s2339 = sadd.s32 %s2337, %s2338
        %s2340 = smul.addr %s2339, 8
        %s2341 = scalar_lea.vmem %s5, %s2340
      $region56: #{conv3x3_forward.4} parent=51 // pred_fallthru
        _
      // Predicated region
      $region57: #{conv3x3_forward.4} parent=51 // pred_check
        %p2342 = pneg %p194
      $region58: #{conv3x3_forward.4} parent=51 // pred_check_branch
        %2344 = sbr.rel (%p2342) target = $region60
      $region59: #{conv3x3_forward.4} parent=51 // pred_region
        %p2345 = scmp.lt.s32.totalorder %s24, 1
        %s2346 = scalar_select %p2345, %s24, 1
        %p2347 = scmp.lt.s32.totalorder %s25, 0
        %s2348 = scalar_select %p2347, %s25, 0
        %s2349 = sadd.s32 %s2348, %s2346
        %s2350 = smul.addr %s2349, 8
        %s2351 = scalar_lea.vmem %s6, %s2350
      $region60: #{conv3x3_forward.4} parent=51 // pred_fallthru
        _
    $region52: #{conv3x3_forward.4} parent=5 // pred_fallthru
      _
  $region6: #{conv3x3_forward.4} parent=0 // loop_footer
    %s17 = sadd.s32 1, %s13
  $region7: #{conv3x3_forward.4} parent=0 // loop_footer_branch
    %12 = sbr.rel target = $region3
  $region8: #{conv3x3_forward.4} parent=0 // loop_exit
    _

// kernel: conv3x3_forward.3
$region0: #{conv3x3_forward.3}
  #allocation0 [shape = 'u32[]', space=smem, size = 0x4, offset = 0x4, fixed_abs, tag = 'smem constant byte address 0x4 - core index']
  #allocation1 [shape = 'u32[144,128]{1,0:T(1,128)}', space=vmem, size = 0x12000, scoped, tag = 'internal scratch']
  %s0 = inlined_call_operand.vmem [shape: f32[2,16,18,128], index: 0, kind: input, shape index: {}]
  %s1 = inlined_call_operand.vmem [shape: f32[1152,128], index: 1, kind: input, shape index: {}]
  %s2 = inlined_call_operand.vmem [shape: f32[1,128], index: 2, kind: input, shape index: {}]
  %s3 = inlined_call_operand.vmem [shape: f32[1,128], index: 3, kind: input, shape index: {}]
  %s4 = inlined_call_operand.vmem [shape: f32[1,128], index: 4, kind: input, shape index: {}]
  %s5 = inlined_call_operand.vmem [shape: f32[2,14,14,128], index: 5, kind: output, shape index: {0}]
  %s6 = inlined_call_operand.vmem [shape: f32[2,1,8,128], index: 6, kind: output, shape index: {1}]
  %7 = xla_tuple %s5, %s6
  %s8 = sld [smem:[#allocation0]]
  $region61: #{conv3x3_forward.3} parent=0
    _
  %s10 = ssub.s32 1, %s8
  %s11 = scalar_select 0, %s10, %s8
  loop: start=0, step=1, limit=4
  $region2: #{conv3x3_forward.3} parent=0 // loop_pre_header
    _
  $region3: #{conv3x3_forward.3} parent=0 // loop_header
    %s13 = sphi 0, %s17
    %p14 = scmp.ge.s32.totalorder %s13, 4
    %s20 = sphi 0, %s32
    %s21 = sphi 0, %s28
    %s22 = sphi 0, %s20
    %s23 = sphi 0, %s21
    %s24 = sphi 0, %s22
    %s25 = sphi 0, %s23
    %s35 = sphi 0, %s37
    %s38 = sphi 0, %s35
    %s39 = sphi 0, %s38
    %s55 = sphi 0, %s39
    %s59 = sphi 0, %s59
    %s61 = sphi 0, %s59
    %s62 = sphi 0, %s61
    %s76 = sphi 0, %s62
    %s80 = sphi 0, %s80
    %s82 = sphi 0, %s80
    %s83 = sphi 0, %s82
    %s97 = sphi 0, %s83
    %s101 = sphi 0, %s101
    %s103 = sphi 0, %s101
    %s104 = sphi 0, %s103
    %s118 = sphi 0, %s104
    %s122 = sphi 0, %s122
    %s124 = sphi 0, %s122
    %s125 = sphi 0, %s124
    %s139 = sphi 0, %s125
    %s147 = sphi 0, %s149
    %s150 = sphi 0, %s147
    %s151 = sphi 0, %s150
    %s167 = sphi 0, %s151
    %s175 = sphi 0, %s177
    %s178 = sphi 0, %s175
    %s179 = sphi 0, %s178
    %s195 = sphi 0, %s179
  $region4: #{conv3x3_forward.3} parent=0 // loop_header_branch
    %16 = sbr.rel (%p14) target = $region8
  $region5: #{conv3x3_forward.3} parent=0 // loop_body
    %s18 = ssub.s32 %s13, 1
    %s19 = ssub.s32 %s13, 2
    %s26 = sadd.s32 1, %s21
    %p27 = scmp.ge.s32.totalorder %s26, 1
    %s28 = scalar_select %p27, 0, %s26
    %s29 = sadd.s32 1, %s20
    %s30 = scalar_select %p27, %s29, %s20
    %p31 = scmp.ge.s32.totalorder %s30, 2
    %s32 = scalar_select %p31, 0, %s30
    %s33 = ssub.s32 %s20, %s32
    %p34 = scmp.eq.s32.totalorder %s33, 0
    %s36 = sadd.s32 %s35, 1
    %s37 = scalar_select %p34, %s35, %s36
    %p40 = pneg %p34
    %p41 = scmp.eq.s32.totalorder %s13, 1
    %p42 = por %p40, %p41
    %p43 = scmp.ne.s32.totalorder %s35, %s38
    %p44 = scmp.eq.s32.totalorder %s13, 0
    %p45 = por %p43, %p44
    %p46 = scmp.ne.s32.totalorder %s35, %s38
    %p47 = scmp.eq.s32.totalorder %s18, 1
    %p48 = por %p46, %p47
    %p49 = scmp.ne.s32.totalorder %s38, %s39
    %p50 = scmp.eq.s32.totalorder %s18, 0
    %p51 = por %p49, %p50
    %p52 = scmp.ne.s32.totalorder %s38, %s39
    %p53 = scmp.eq.s32.totalorder %s19, 1
    %p54 = por %p52, %p53
    %p56 = scmp.ne.s32.totalorder %s39, %s55
    %p57 = scmp.eq.s32.totalorder %s19, 0
    %p58 = por %p56, %p57
    %s60 = sadd.s32 %s59, 1
    %p63 = scmp.eq.s32.totalorder %s13, 1
    %p64 = scmp.ne.s32.totalorder %s59, %s61
    %p65 = scmp.eq.s32.totalorder %s13, 0
    %p66 = por %p64, %p65
    %p67 = scmp.ne.s32.totalorder %s59, %s61
    %p68 = scmp.eq.s32.totalorder %s18, 1
    %p69 = por %p67, %p68
    %p70 = scmp.ne.s32.totalorder %s61, %s62
    %p71 = scmp.eq.s32.totalorder %s18, 0
    %p72 = por %p70, %p71
    %p73 = scmp.ne.s32.totalorder %s61, %s62
    %p74 = scmp.eq.s32.totalorder %s19, 1
    %p75 = por %p73, %p74
    %p77 = scmp.ne.s32.totalorder %s62, %s76
    %p78 = scmp.eq.s32.totalorder %s19, 0
    %p79 = por %p77, %p78
    %s81 = sadd.s32 %s80, 1
    %p84 = scmp.eq.s32.totalorder %s13, 1
    %p85 = scmp.ne.s32.totalorder %s80, %s82
    %p86 = scmp.eq.s32.totalorder %s13, 0
    %p87 = por %p85, %p86
    %p88 = scmp.ne.s32.totalorder %s80, %s82
    %p89 = scmp.eq.s32.totalorder %s18, 1
    %p90 = por %p88, %p89
    %p91 = scmp.ne.s32.totalorder %s82, %s83
    %p92 = scmp.eq.s32.totalorder %s18, 0
    %p93 = por %p91, %p92
    %p94 = scmp.ne.s32.totalorder %s82, %s83
    %p95 = scmp.eq.s32.totalorder %s19, 1
    %p96 = por %p94, %p95
    %p98 = scmp.ne.s32.totalorder %s83, %s97
    %p99 = scmp.eq.s32.totalorder %s19, 0
    %p100 = por %p98, %p99
    %s102 = sadd.s32 %s101, 1
    %p105 = scmp.eq.s32.totalorder %s13, 1
    %p106 = scmp.ne.s32.totalorder %s101, %s103
    %p107 = scmp.eq.s32.totalorder %s13, 0
    %p108 = por %p106, %p107
    %p109 = scmp.ne.s32.totalorder %s101, %s103
    %p110 = scmp.eq.s32.totalorder %s18, 1
    %p111 = por %p109, %p110
    %p112 = scmp.ne.s32.totalorder %s103, %s104
    %p113 = scmp.eq.s32.totalorder %s18, 0
    %p114 = por %p112, %p113
    %p115 = scmp.ne.s32.totalorder %s103, %s104
    %p116 = scmp.eq.s32.totalorder %s19, 1
    %p117 = por %p115, %p116
    %p119 = scmp.ne.s32.totalorder %s104, %s118
    %p120 = scmp.eq.s32.totalorder %s19, 0
    %p121 = por %p119, %p120
    %s123 = sadd.s32 %s122, 1
    %p126 = scmp.eq.s32.totalorder %s13, 1
    %p127 = scmp.ne.s32.totalorder %s122, %s124
    %p128 = scmp.eq.s32.totalorder %s13, 0
    %p129 = por %p127, %p128
    %p130 = scmp.ne.s32.totalorder %s122, %s124
    %p131 = scmp.eq.s32.totalorder %s18, 1
    %p132 = por %p130, %p131
    %p133 = scmp.ne.s32.totalorder %s124, %s125
    %p134 = scmp.eq.s32.totalorder %s18, 0
    %p135 = por %p133, %p134
    %p136 = scmp.ne.s32.totalorder %s124, %s125
    %p137 = scmp.eq.s32.totalorder %s19, 1
    %p138 = por %p136, %p137
    %p140 = scmp.ne.s32.totalorder %s125, %s139
    %p141 = scmp.eq.s32.totalorder %s19, 0
    %p142 = por %p140, %p141
    %s143 = ssub.s32 %s20, %s32
    %s144 = ssub.s32 %s21, %s28
    %s145 = sor.u32 %s143, %s144
    %p146 = scmp.eq.s32.totalorder %s145, 0
    %s148 = sadd.s32 %s147, 1
    %s149 = scalar_select %p146, %s147, %s148
    %p152 = pneg %p146
    %p153 = scmp.eq.s32.totalorder %s13, 1
    %p154 = por %p152, %p153
    %p155 = scmp.ne.s32.totalorder %s147, %s150
    %p156 = scmp.eq.s32.totalorder %s13, 0
    %p157 = por %p155, %p156
    %p158 = scmp.ne.s32.totalorder %s147, %s150
    %p159 = scmp.eq.s32.totalorder %s18, 1
    %p160 = por %p158, %p159
    %p161 = scmp.ne.s32.totalorder %s150, %s151
    %p162 = scmp.eq.s32.totalorder %s18, 0
    %p163 = por %p161, %p162
    %p164 = scmp.ne.s32.totalorder %s150, %s151
    %p165 = scmp.eq.s32.totalorder %s19, 1
    %p166 = por %p164, %p165
    %p168 = scmp.ne.s32.totalorder %s151, %s167
    %p169 = scmp.eq.s32.totalorder %s19, 0
    %p170 = por %p168, %p169
    %s171 = ssub.s32 %s20, %s32
    %s172 = ssub.s32 %s21, %s28
    %s173 = sor.u32 %s171, %s172
    %p174 = scmp.eq.s32.totalorder %s173, 0
    %s176 = sadd.s32 %s175, 1
    %s177 = scalar_select %p174, %s175, %s176
    %p180 = pneg %p174
    %p181 = scmp.eq.s32.totalorder %s13, 1
    %p182 = por %p180, %p181
    %p183 = scmp.ne.s32.totalorder %s175, %s178
    %p184 = scmp.eq.s32.totalorder %s13, 0
    %p185 = por %p183, %p184
    %p186 = scmp.ne.s32.totalorder %s175, %s178
    %p187 = scmp.eq.s32.totalorder %s18, 1
    %p188 = por %p186, %p187
    %p189 = scmp.ne.s32.totalorder %s178, %s179
    %p190 = scmp.eq.s32.totalorder %s18, 0
    %p191 = por %p189, %p190
    %p192 = scmp.ne.s32.totalorder %s178, %s179
    %p193 = scmp.eq.s32.totalorder %s19, 1
    %p194 = por %p192, %p193
    %p196 = scmp.ne.s32.totalorder %s179, %s195
    %p197 = scmp.eq.s32.totalorder %s19, 0
    %p198 = por %p196, %p197
    %p199 = scmp.le.s32.totalorder 1, %s13
    %p200 = scmp.lt.s32.totalorder %s13, 3
    %p201 = pnand %p199, %p200
    %p202 = pneg %p201
    // Predicated region
    $region9: #{conv3x3_forward.3} parent=5 // pred_check
      _
    $region10: #{conv3x3_forward.3} parent=5 // pred_check_branch
      %204 = sbr.rel (%p201) target = $region12
    $region11: #{conv3x3_forward.3} parent=5 // pred_region
      %s205 = ssub.s32 %s13, 1
      // Predicated region
      $region13: #{conv3x3_forward.3} parent=11 // pred_check
        %p206 = pneg %p72
      $region14: #{conv3x3_forward.3} parent=11 // pred_check_branch
        %208 = sbr.rel (%p206) target = $region16
      $region15: #{conv3x3_forward.3} parent=11 // pred_region
        _
      $region16: #{conv3x3_forward.3} parent=11 // pred_fallthru
        _
      // Predicated region
      $region17: #{conv3x3_forward.3} parent=11 // pred_check
        %p209 = pneg %p93
      $region18: #{conv3x3_forward.3} parent=11 // pred_check_branch
        %211 = sbr.rel (%p209) target = $region20
      $region19: #{conv3x3_forward.3} parent=11 // pred_region
        _
      $region20: #{conv3x3_forward.3} parent=11 // pred_fallthru
        _
      // Predicated region
      $region21: #{conv3x3_forward.3} parent=11 // pred_check
        %p212 = pneg %p114
      $region22: #{conv3x3_forward.3} parent=11 // pred_check_branch
        %214 = sbr.rel (%p212) target = $region24
      $region23: #{conv3x3_forward.3} parent=11 // pred_region
        _
      $region24: #{conv3x3_forward.3} parent=11 // pred_fallthru
        _
      // Predicated region
      $region25: #{conv3x3_forward.3} parent=11 // pred_check
        %p215 = pneg %p135
      $region26: #{conv3x3_forward.3} parent=11 // pred_check_branch
        %217 = sbr.rel (%p215) target = $region28
      $region27: #{conv3x3_forward.3} parent=11 // pred_region
        _
      $region28: #{conv3x3_forward.3} parent=11 // pred_fallthru
        _
    $region12: #{conv3x3_forward.3} parent=5 // pred_fallthru
      _
    %p218 = scmp.lt.s32.totalorder %s13, 2
    // Predicated region
    $region29: #{conv3x3_forward.3} parent=5 // pred_check
      %p219 = pneg %p218
    $region30: #{conv3x3_forward.3} parent=5 // pred_check_branch
      %221 = sbr.rel (%p219) target = $region32
    $region31: #{conv3x3_forward.3} parent=5 // pred_region
      // Predicated region
      $region33: #{conv3x3_forward.3} parent=31 // pred_check
        %p222 = pneg %p45
      $region34: #{conv3x3_forward.3} parent=31 // pred_check_branch
        %224 = sbr.rel (%p222) target = $region36
      $region35: #{conv3x3_forward.3} parent=31 // pred_region
        %p225 = scmp.lt.s32.totalorder %s20, 1
        %s226 = scalar_select %p225, %s20, 1
        %s227 = smul.addr %s226, 48
        %s228 = smul.addr %s227, 8
        %s229 = scalar_lea.vmem %s0, %s228
      $region36: #{conv3x3_forward.3} parent=31 // pred_fallthru
        _
    $region32: #{conv3x3_forward.3} parent=5 // pred_fallthru
      _
    %p230 = scmp.le.s32.totalorder 1, %s13
    %p231 = scmp.lt.s32.totalorder %s13, 3
    %p232 = pnand %p230, %p231
    %p233 = pneg %p232
    // Predicated region
    $region37: #{conv3x3_forward.3} parent=5 // pred_check
      _
    $region38: #{conv3x3_forward.3} parent=5 // pred_check_branch
      %235 = sbr.rel (%p232) target = $region40
    $region39: #{conv3x3_forward.3} parent=5 // pred_region
      %s236 = ssub.s32 %s13, 1
      %p237 = scmp.lt.s32.totalorder %s22, 1
      %s238 = scalar_select %p237, %s22, 1
      %s239 = smul.addr %s238, 48
      %s240 = smul.addr %s239, 8
      %s241 = scalar_lea.vmem %s0, %s240
      %p242 = pneg %p51
      %p243 = pneg %p48
      %p244 = pneg %p72
      %p245 = pneg %p69
      %p246 = pneg %p93
      %p247 = pneg %p90
      %p248 = pneg %p114
      %p249 = pneg %p111
      %p250 = pneg %p135
      %p251 = pneg %p132
      %p252 = pneg %p163
      %p253 = pneg %p160
      %s254 = smul.u32 14, %s23
      %p255 = scmp.lt.s32.totalorder %s22, 1
      %s256 = scalar_select %p255, %s22, 1
      %p257 = scmp.lt.s32.totalorder %s254, 13
      %s258 = scalar_select %p257, %s254, 13
      %s259 = smul.addr %s258, 2
      %s260 = smul.addr %s256, 28
      %s261 = sadd.s32 %s259, %s260
      %s262 = smul.addr %s261, 8
      %s263 = scalar_lea.vmem %s5, %s262
      %p264 = pneg %p191
      %p265 = pneg %p188
      %p266 = scmp.lt.s32.totalorder %s22, 1
      %s267 = scalar_select %p266, %s22, 1
      %p268 = scmp.lt.s32.totalorder %s23, 0
      %s269 = scalar_select %p268, %s23, 0
      %s270 = sadd.s32 %s269, %s267
      %s271 = smul.addr %s270, 8
      %s272 = scalar_lea.vmem %s6, %s271
      %p273 = scmp.lt.s32.totalorder %s22, 1
      %s274 = scalar_select %p273, %s22, 1
      %s275 = smul.addr %s274, 48
      %s276 = smul.addr %s275, 8
      %s277 = scalar_lea.vmem %s0, %s276
      %s278 = smul.u32 14, %s23
      %p279 = scmp.lt.s32.totalorder %s22, 1
      %s280 = scalar_select %p279, %s22, 1
      %p281 = scmp.lt.s32.totalorder %s278, 13
      %s282 = scalar_select %p281, %s278, 13
      %s283 = smul.addr %s282, 2
      %s284 = smul.addr %s280, 28
      %s285 = sadd.s32 %s283, %s284
      %s286 = smul.addr %s285, 8
      %s287 = scalar_lea.vmem %s5, %s286
      %s288 = smul.u32 14, %s23
      %p289 = scmp.lt.s32.totalorder %s22, 1
      %s290 = scalar_select %p289, %s22, 1
      %p291 = scmp.lt.s32.totalorder %s23, 0
      %s292 = scalar_select %p291, %s23, 0
      %s293 = sadd.s32 %s292, %s290
      %s294 = smul.addr %s293, 8
      %s295 = scalar_lea.vmem %s6, %s294
      %s296 = smul.u32 %s23, 14
      %s297 = smul.u32 %s296, 24
      %s298 = scalar_lea.vmem %s277, %s297
      %v299 = vld [vmem:[%s298] sm:$0xff]
      %v300 = vld [vmem:[%s298 + $0x8] sm:$0xff]
      %v301 = vld [vmem:[%s298 + $0x10] sm:$0x3]
      %v302 = vld [vmem:[%s298 + $0x18] sm:$0xff]
      %v303 = vld [vmem:[%s298 + $0x20] sm:$0xff]
      %v304 = vld [vmem:[%s298 + $0x28] sm:$0x3]
      %v305 = vld [vmem:[%s298 + $0x30] sm:$0xff]
      %v306 = vld [vmem:[%s298 + $0x38] sm:$0xff]
      %v307 = vld [vmem:[%s298 + $0x40] sm:$0x3]
      %v308 = vld [vmem:[%s298 + $0x48] sm:$0xff]
      %v309 = vld [vmem:[%s298 + $0x50] sm:$0xff]
      %v310 = vld [vmem:[%s298 + $0x58] sm:$0x3]
      %v311 = vld [vmem:[%s298 + $0x60] sm:$0xff]
      %v312 = vld [vmem:[%s298 + $0x68] sm:$0xff]
      %v313 = vld [vmem:[%s298 + $0x70] sm:$0x3]
      %v314 = vld [vmem:[%s298 + $0x78] sm:$0xff]
      %v315 = vld [vmem:[%s298 + $0x80] sm:$0xff]
      %v316 = vld [vmem:[%s298 + $0x88] sm:$0x3]
      %v317 = vld [vmem:[%s298 + $0x90] sm:$0xff]
      %v318 = vld [vmem:[%s298 + $0x98] sm:$0xff]
      %v319 = vld [vmem:[%s298 + $0xa0] sm:$0x3]
      %v320 = vld [vmem:[%s298 + $0xa8] sm:$0xff]
      %v321 = vld [vmem:[%s298 + $0xb0] sm:$0xff]
      %v322 = vld [vmem:[%s298 + $0xb8] sm:$0x3]
      %v323 = vld [vmem:[%s298 + $0xc0] sm:$0xff]
      %v324 = vld [vmem:[%s298 + $0xc8] sm:$0xff]
      %v325 = vld [vmem:[%s298 + $0xd0] sm:$0x3]
      %v326 = vld [vmem:[%s298 + $0xd8] sm:$0xff]
      %v327 = vld [vmem:[%s298 + $0xe0] sm:$0xff]
      %v328 = vld [vmem:[%s298 + $0xe8] sm:$0x3]
      %v329 = vld [vmem:[%s298 + $0xf0] sm:$0xff]
      %v330 = vld [vmem:[%s298 + $0xf8] sm:$0xff]
      %v331 = vld [vmem:[%s298 + $0x100] sm:$0x3]
      %v332 = vld [vmem:[%s298 + $0x108] sm:$0xff]
      %v333 = vld [vmem:[%s298 + $0x110] sm:$0xff]
      %v334 = vld [vmem:[%s298 + $0x118] sm:$0x3]
      %v335 = vld [vmem:[%s298 + $0x120] sm:$0xff]
      %v336 = vld [vmem:[%s298 + $0x128] sm:$0xff]
      %v337 = vld [vmem:[%s298 + $0x130] sm:$0x3]
      %v338 = vld [vmem:[%s298 + $0x138] sm:$0xff]
      %v339 = vld [vmem:[%s298 + $0x140] sm:$0xff]
      %v340 = vld [vmem:[%s298 + $0x148] sm:$0x3]
      %v341 = vld [vmem:[%s298 + $0x150] sm:$0xff]
      %v342 = vld [vmem:[%s298 + $0x158] sm:$0xff]
      %v343 = vld [vmem:[%s298 + $0x160] sm:$0x3]
      %v344 = vld [vmem:[%s298 + $0x168] sm:$0xff]
      %v345 = vld [vmem:[%s298 + $0x170] sm:$0xff]
      %v346 = vld [vmem:[%s298 + $0x178] sm:$0x3]
      %v347 = vld [vmem:[%s3] sm:$0x1]
      %v348 = vld [vmem:[%s4] sm:$0x1]
      %v350 = vlaneseq
      %v351 = vshrl.u32 %v350, 7
      %v352 = vsub.s32 0, %v351
      %v353 = vrot.slane %v347, %v352
      %v355 = vmul.f32 %v299, %v353
      %v356 = vmul.f32 %v300, %v353
      %v357 = vmul.f32 %v301, %v353
      %v358 = vmul.f32 %v302, %v353
      %v359 = vmul.f32 %v303, %v353
      %v360 = vmul.f32 %v304, %v353
      %v361 = vmul.f32 %v305, %v353
      %v362 = vmul.f32 %v306, %v353
      %v363 = vmul.f32 %v307, %v353
      %v364 = vmul.f32 %v308, %v353
      %v365 = vmul.f32 %v309, %v353
      %v366 = vmul.f32 %v310, %v353
      %v367 = vmul.f32 %v311, %v353
      %v368 = vmul.f32 %v312, %v353
      %v369 = vmul.f32 %v313, %v353
      %v370 = vmul.f32 %v314, %v353
      %v371 = vmul.f32 %v315, %v353
      %v372 = vmul.f32 %v316, %v353
      %v373 = vmul.f32 %v317, %v353
      %v374 = vmul.f32 %v318, %v353
      %v375 = vmul.f32 %v319, %v353
      %v376 = vmul.f32 %v320, %v353
      %v377 = vmul.f32 %v321, %v353
      %v378 = vmul.f32 %v322, %v353
      %v379 = vmul.f32 %v323, %v353
      %v380 = vmul.f32 %v324, %v353
      %v381 = vmul.f32 %v325, %v353
      %v382 = vmul.f32 %v326, %v353
      %v383 = vmul.f32 %v327, %v353
      %v384 = vmul.f32 %v328, %v353
      %v385 = vmul.f32 %v329, %v353
      %v386 = vmul.f32 %v330, %v353
      %v387 = vmul.f32 %v331, %v353
      %v388 = vmul.f32 %v332, %v353
      %v389 = vmul.f32 %v333, %v353
      %v390 = vmul.f32 %v334, %v353
      %v391 = vmul.f32 %v335, %v353
      %v392 = vmul.f32 %v336, %v353
      %v393 = vmul.f32 %v337, %v353
      %v394 = vmul.f32 %v338, %v353
      %v395 = vmul.f32 %v339, %v353
      %v396 = vmul.f32 %v340, %v353
      %v397 = vmul.f32 %v341, %v353
      %v398 = vmul.f32 %v342, %v353
      %v399 = vmul.f32 %v343, %v353
      %v400 = vmul.f32 %v344, %v353
      %v401 = vmul.f32 %v345, %v353
      %v402 = vmul.f32 %v346, %v353
      %v404 = vlaneseq
      %v405 = vshrl.u32 %v404, 7
      %v406 = vsub.s32 0, %v405
      %v407 = vrot.slane %v348, %v406
      %v409 = vadd.f32 %v355, %v407
      %v410 = vadd.f32 %v356, %v407
      %v411 = vadd.f32 %v357, %v407
      %v412 = vadd.f32 %v358, %v407
      %v413 = vadd.f32 %v359, %v407
      %v414 = vadd.f32 %v360, %v407
      %v415 = vadd.f32 %v361, %v407
      %v416 = vadd.f32 %v362, %v407
      %v417 = vadd.f32 %v363, %v407
      %v418 = vadd.f32 %v364, %v407
      %v419 = vadd.f32 %v365, %v407
      %v420 = vadd.f32 %v366, %v407
      %v421 = vadd.f32 %v367, %v407
      %v422 = vadd.f32 %v368, %v407
      %v423 = vadd.f32 %v369, %v407
      %v424 = vadd.f32 %v370, %v407
      %v425 = vadd.f32 %v371, %v407
      %v426 = vadd.f32 %v372, %v407
      %v427 = vadd.f32 %v373, %v407
      %v428 = vadd.f32 %v374, %v407
      %v429 = vadd.f32 %v375, %v407
      %v430 = vadd.f32 %v376, %v407
      %v431 = vadd.f32 %v377, %v407
      %v432 = vadd.f32 %v378, %v407
      %v433 = vadd.f32 %v379, %v407
      %v434 = vadd.f32 %v380, %v407
      %v435 = vadd.f32 %v381, %v407
      %v436 = vadd.f32 %v382, %v407
      %v437 = vadd.f32 %v383, %v407
      %v438 = vadd.f32 %v384, %v407
      %v439 = vadd.f32 %v385, %v407
      %v440 = vadd.f32 %v386, %v407
      %v441 = vadd.f32 %v387, %v407
      %v442 = vadd.f32 %v388, %v407
      %v443 = vadd.f32 %v389, %v407
      %v444 = vadd.f32 %v390, %v407
      %v445 = vadd.f32 %v391, %v407
      %v446 = vadd.f32 %v392, %v407
      %v447 = vadd.f32 %v393, %v407
      %v448 = vadd.f32 %v394, %v407
      %v449 = vadd.f32 %v395, %v407
      %v450 = vadd.f32 %v396, %v407
      %v451 = vadd.f32 %v397, %v407
      %v452 = vadd.f32 %v398, %v407
      %v453 = vadd.f32 %v399, %v407
      %v454 = vadd.f32 %v400, %v407
      %v455 = vadd.f32 %v401, %v407
      %v456 = vadd.f32 %v402, %v407
      %vm499 = vcmask 1046528
      %v500 = vrot.slane %v409, 1
      %v501 = vrot.slane %v410, 1
      %v502 = vsel %vm499, %v500, %v501
      %v503 = vrot.slane %v411, 1
      %v504 = vsel %vm499, %v501, %v503
      %v505 = vrot.slane %v412, 1
      %v506 = vrot.slane %v413, 1
      %v507 = vsel %vm499, %v505, %v506
      %v508 = vrot.slane %v414, 1
      %v509 = vsel %vm499, %v506, %v508
      %v510 = vrot.slane %v415, 1
      %v511 = vrot.slane %v416, 1
      %v512 = vsel %vm499, %v510, %v511
      %v513 = vrot.slane %v417, 1
      %v514 = vsel %vm499, %v511, %v513
      %v515 = vrot.slane %v418, 1
      %v516 = vrot.slane %v419, 1
      %v517 = vsel %vm499, %v515, %v516
      %v518 = vrot.slane %v420, 1
      %v519 = vsel %vm499, %v516, %v518
      %v520 = vrot.slane %v421, 1
      %v521 = vrot.slane %v422, 1
      %v522 = vsel %vm499, %v520, %v521
      %v523 = vrot.slane %v423, 1
      %v524 = vsel %vm499, %v521, %v523
      %v525 = vrot.slane %v424, 1
      %v526 = vrot.slane %v425, 1
      %v527 = vsel %vm499, %v525, %v526
      %v528 = vrot.slane %v426, 1
      %v529 = vsel %vm499, %v526, %v528
      %v530 = vrot.slane %v427, 1
      %v531 = vrot.slane %v428, 1
      %v532 = vsel %vm499, %v530, %v531
      %v533 = vrot.slane %v429, 1
      %v534 = vsel %vm499, %v531, %v533
      %v535 = vrot.slane %v430, 1
      %v536 = vrot.slane %v431, 1
      %v537 = vsel %vm499, %v535, %v536
      %v538 = vrot.slane %v432, 1
      %v539 = vsel %vm499, %v536, %v538
      %v540 = vrot.slane %v433, 1
      %v541 = vrot.slane %v434, 1
      %v542 = vsel %vm499, %v540, %v541
      %v543 = vrot.slane %v435, 1
      %v544 = vsel %vm499, %v541, %v543
      %v545 = vrot.slane %v436, 1
      %v546 = vrot.slane %v437, 1
      %v547 = vsel %vm499, %v545, %v546
      %v548 = vrot.slane %v438, 1
      %v549 = vsel %vm499, %v546, %v548
      %v550 = vrot.slane %v439, 1
      %v551 = vrot.slane %v440, 1
      %v552 = vsel %vm499, %v550, %v551
      %v553 = vrot.slane %v441, 1
      %v554 = vsel %vm499, %v551, %v553
      %v555 = vrot.slane %v442, 1
      %v556 = vrot.slane %v443, 1
      %v557 = vsel %vm499, %v555, %v556
      %v558 = vrot.slane %v444, 1
      %v559 = vsel %vm499, %v556, %v558
      %v560 = vrot.slane %v445, 1
      %v561 = vrot.slane %v446, 1
      %v562 = vsel %vm499, %v560, %v561
      %v563 = vrot.slane %v447, 1
      %v564 = vsel %vm499, %v561, %v563
      %v565 = vrot.slane %v448, 1
      %v566 = vrot.slane %v449, 1
      %v567 = vsel %vm499, %v565, %v566
      %v568 = vrot.slane %v450, 1
      %v569 = vsel %vm499, %v566, %v568
      %vm598 = vcmask 1045504
      %v599 = vrot.slane %v409, 2
      %v600 = vrot.slane %v410, 2
      %v601 = vsel %vm598, %v599, %v600
      %v602 = vrot.slane %v411, 2
      %v603 = vsel %vm598, %v600, %v602
      %v604 = vrot.slane %v412, 2
      %v605 = vrot.slane %v413, 2
      %v606 = vsel %vm598, %v604, %v605
      %v607 = vrot.slane %v414, 2
      %v608 = vsel %vm598, %v605, %v607
      %v609 = vrot.slane %v415, 2
      %v610 = vrot.slane %v416, 2
      %v611 = vsel %vm598, %v609, %v610
      %v612 = vrot.slane %v417, 2
      %v613 = vsel %vm598, %v610, %v612
      %v614 = vrot.slane %v418, 2
      %v615 = vrot.slane %v419, 2
      %v616 = vsel %vm598, %v614, %v615
      %v617 = vrot.slane %v420, 2
      %v618 = vsel %vm598, %v615, %v617
      %v619 = vrot.slane %v421, 2
      %v620 = vrot.slane %v422, 2
      %v621 = vsel %vm598, %v619, %v620
      %v622 = vrot.slane %v423, 2
      %v623 = vsel %vm598, %v620, %v622
      %v624 = vrot.slane %v424, 2
      %v625 = vrot.slane %v425, 2
      %v626 = vsel %vm598, %v624, %v625
      %v627 = vrot.slane %v426, 2
      %v628 = vsel %vm598, %v625, %v627
      %v629 = vrot.slane %v427, 2
      %v630 = vrot.slane %v428, 2
      %v631 = vsel %vm598, %v629, %v630
      %v632 = vrot.slane %v429, 2
      %v633 = vsel %vm598, %v630, %v632
      %v634 = vrot.slane %v430, 2
      %v635 = vrot.slane %v431, 2
      %v636 = vsel %vm598, %v634, %v635
      %v637 = vrot.slane %v432, 2
      %v638 = vsel %vm598, %v635, %v637
      %v639 = vrot.slane %v433, 2
      %v640 = vrot.slane %v434, 2
      %v641 = vsel %vm598, %v639, %v640
      %v642 = vrot.slane %v435, 2
      %v643 = vsel %vm598, %v640, %v642
      %v644 = vrot.slane %v436, 2
      %v645 = vrot.slane %v437, 2
      %v646 = vsel %vm598, %v644, %v645
      %v647 = vrot.slane %v438, 2
      %v648 = vsel %vm598, %v645, %v647
      %v649 = vrot.slane %v439, 2
      %v650 = vrot.slane %v440, 2
      %v651 = vsel %vm598, %v649, %v650
      %v652 = vrot.slane %v441, 2
      %v653 = vsel %vm598, %v650, %v652
      %v654 = vrot.slane %v442, 2
      %v655 = vrot.slane %v443, 2
      %v656 = vsel %vm598, %v654, %v655
      %v657 = vrot.slane %v444, 2
      %v658 = vsel %vm598, %v655, %v657
      %v659 = vrot.slane %v445, 2
      %v660 = vrot.slane %v446, 2
      %v661 = vsel %vm598, %v659, %v660
      %v662 = vrot.slane %v447, 2
      %v663 = vsel %vm598, %v660, %v662
      %v664 = vrot.slane %v448, 2
      %v665 = vrot.slane %v449, 2
      %v666 = vsel %vm598, %v664, %v665
      %v667 = vrot.slane %v450, 2
      %v668 = vsel %vm598, %v665, %v667
      %v700 = vrot.slane %v451, 1
      %v701 = vrot.slane %v452, 1
      %v702 = vsel %vm499, %v700, %v701
      %v703 = vrot.slane %v453, 1
      %v704 = vsel %vm499, %v701, %v703
      %v707 = vrot.slane %v451, 2
      %v708 = vrot.slane %v452, 2
      %v709 = vsel %vm598, %v707, %v708
      %v710 = vrot.slane %v453, 2
      %v711 = vsel %vm598, %v708, %v710
      %v717 = vrot.slane %v454, 1
      %v718 = vrot.slane %v455, 1
      %v719 = vsel %vm499, %v717, %v718
      %v720 = vrot.slane %v456, 1
      %v721 = vsel %vm499, %v718, %v720
      %v724 = vrot.slane %v454, 2
      %v725 = vrot.slane %v455, 2
      %v726 = vsel %vm598, %v724, %v725
      %v727 = vrot.slane %v456, 2
      %v728 = vsel %vm598, %v725, %v727
      %v731 = vld [vmem:[%s1] sm:$0xff]
      %v732 = vld [vmem:[%s1 + $0x8] sm:$0xff]
      %v733 = vld [vmem:[%s1 + $0x10] sm:$0xff]
      %v734 = vld [vmem:[%s1 + $0x18] sm:$0xff]
      %v735 = vld [vmem:[%s1 + $0x20] sm:$0xff]
      %v736 = vld [vmem:[%s1 + $0x28] sm:$0xff]
      %v737 = vld [vmem:[%s1 + $0x30] sm:$0xff]
      %v738 = vld [vmem:[%s1 + $0x38] sm:$0xff]
      %v739 = vld [vmem:[%s1 + $0x40] sm:$0xff]
      %v740 = vld [vmem:[%s1 + $0x48] sm:$0xff]
      %v741 = vld [vmem:[%s1 + $0x50] sm:$0xff]
      %v742 = vld [vmem:[%s1 + $0x58] sm:$0xff]
      %v743 = vld [vmem:[%s1 + $0x60] sm:$0xff]
      %v744 = vld [vmem:[%s1 + $0x68] sm:$0xff]
      %v745 = vld [vmem:[%s1 + $0x70] sm:$0xff]
      %v746 = vld [vmem:[%s1 + $0x78] sm:$0xff]
      %v747 = vld [vmem:[%s1 + $0x80] sm:$0xff]
      %v748 = vld [vmem:[%s1 + $0x88] sm:$0xff]
      %v749 = vld [vmem:[%s1 + $0x90] sm:$0xff]
      %v750 = vld [vmem:[%s1 + $0x98] sm:$0xff]
      %v751 = vld [vmem:[%s1 + $0xa0] sm:$0xff]
      %v752 = vld [vmem:[%s1 + $0xa8] sm:$0xff]
      %v753 = vld [vmem:[%s1 + $0xb0] sm:$0xff]
      %v754 = vld [vmem:[%s1 + $0xb8] sm:$0xff]
      %v755 = vld [vmem:[%s1 + $0xc0] sm:$0xff]
      %v756 = vld [vmem:[%s1 + $0xc8] sm:$0xff]
      %v757 = vld [vmem:[%s1 + $0xd0] sm:$0xff]
      %v758 = vld [vmem:[%s1 + $0xd8] sm:$0xff]
      %v759 = vld [vmem:[%s1 + $0xe0] sm:$0xff]
      %v760 = vld [vmem:[%s1 + $0xe8] sm:$0xff]
      %v761 = vld [vmem:[%s1 + $0xf0] sm:$0xff]
      %v762 = vld [vmem:[%s1 + $0xf8] sm:$0xff]
      %v763 = vld [vmem:[%s1 + $0x100] sm:$0xff]
      %v764 = vld [vmem:[%s1 + $0x108] sm:$0xff]
      %v765 = vld [vmem:[%s1 + $0x110] sm:$0xff]
      %v766 = vld [vmem:[%s1 + $0x118] sm:$0xff]
      %v767 = vld [vmem:[%s1 + $0x120] sm:$0xff]
      %v768 = vld [vmem:[%s1 + $0x128] sm:$0xff]
      %v769 = vld [vmem:[%s1 + $0x130] sm:$0xff]
      %v770 = vld [vmem:[%s1 + $0x138] sm:$0xff]
      %v771 = vld [vmem:[%s1 + $0x140] sm:$0xff]
      %v772 = vld [vmem:[%s1 + $0x148] sm:$0xff]
      %v773 = vld [vmem:[%s1 + $0x150] sm:$0xff]
      %v774 = vld [vmem:[%s1 + $0x158] sm:$0xff]
      %v775 = vld [vmem:[%s1 + $0x160] sm:$0xff]
      %v776 = vld [vmem:[%s1 + $0x168] sm:$0xff]
      %v777 = vld [vmem:[%s1 + $0x170] sm:$0xff]
      %v778 = vld [vmem:[%s1 + $0x178] sm:$0xff]
      %v779 = vld [vmem:[%s1 + $0x180] sm:$0xff]
      %v780 = vld [vmem:[%s1 + $0x188] sm:$0xff]
      %v781 = vld [vmem:[%s1 + $0x190] sm:$0xff]
      %v782 = vld [vmem:[%s1 + $0x198] sm:$0xff]
      %v783 = vld [vmem:[%s1 + $0x1a0] sm:$0xff]
      %v784 = vld [vmem:[%s1 + $0x1a8] sm:$0xff]
      %v785 = vld [vmem:[%s1 + $0x1b0] sm:$0xff]
      %v786 = vld [vmem:[%s1 + $0x1b8] sm:$0xff]
      %v787 = vld [vmem:[%s1 + $0x1c0] sm:$0xff]
      %v788 = vld [vmem:[%s1 + $0x1c8] sm:$0xff]
      %v789 = vld [vmem:[%s1 + $0x1d0] sm:$0xff]
      %v790 = vld [vmem:[%s1 + $0x1d8] sm:$0xff]
      %v791 = vld [vmem:[%s1 + $0x1e0] sm:$0xff]
      %v792 = vld [vmem:[%s1 + $0x1e8] sm:$0xff]
      %v793 = vld [vmem:[%s1 + $0x1f0] sm:$0xff]
      %v794 = vld [vmem:[%s1 + $0x1f8] sm:$0xff]
      %v795 = vld [vmem:[%s1 + $0x200] sm:$0xff]
      %v796 = vld [vmem:[%s1 + $0x208] sm:$0xff]
      %v797 = vld [vmem:[%s1 + $0x210] sm:$0xff]
      %v798 = vld [vmem:[%s1 + $0x218] sm:$0xff]
      %v799 = vld [vmem:[%s1 + $0x220] sm:$0xff]
      %v800 = vld [vmem:[%s1 + $0x228] sm:$0xff]
      %v801 = vld [vmem:[%s1 + $0x230] sm:$0xff]
      %v802 = vld [vmem:[%s1 + $0x238] sm:$0xff]
      %v803 = vld [vmem:[%s1 + $0x240] sm:$0xff]
      %v804 = vld [vmem:[%s1 + $0x248] sm:$0xff]
      %v805 = vld [vmem:[%s1 + $0x250] sm:$0xff]
      %v806 = vld [vmem:[%s1 + $0x258] sm:$0xff]
      %v807 = vld [vmem:[%s1 + $0x260] sm:$0xff]
      %v808 = vld [vmem:[%s1 + $0x268] sm:$0xff]
      %v809 = vld [vmem:[%s1 + $0x270] sm:$0xff]
      %v810 = vld [vmem:[%s1 + $0x278] sm:$0xff]
      %v811 = vld [vmem:[%s1 + $0x280] sm:$0xff]
      %v812 = vld [vmem:[%s1 + $0x288] sm:$0xff]
      %v813 = vld [vmem:[%s1 + $0x290] sm:$0xff]
      %v814 = vld [vmem:[%s1 + $0x298] sm:$0xff]
      %v815 = vld [vmem:[%s1 + $0x2a0] sm:$0xff]
      %v816 = vld [vmem:[%s1 + $0x2a8] sm:$0xff]
      %v817 = vld [vmem:[%s1 + $0x2b0] sm:$0xff]
      %v818 = vld [vmem:[%s1 + $0x2b8] sm:$0xff]
      %v819 = vld [vmem:[%s1 + $0x2c0] sm:$0xff]
      %v820 = vld [vmem:[%s1 + $0x2c8] sm:$0xff]
      %v821 = vld [vmem:[%s1 + $0x2d0] sm:$0xff]
      %v822 = vld [vmem:[%s1 + $0x2d8] sm:$0xff]
      %v823 = vld [vmem:[%s1 + $0x2e0] sm:$0xff]
      %v824 = vld [vmem:[%s1 + $0x2e8] sm:$0xff]
      %v825 = vld [vmem:[%s1 + $0x2f0] sm:$0xff]
      %v826 = vld [vmem:[%s1 + $0x2f8] sm:$0xff]
      %v827 = vld [vmem:[%s1 + $0x300] sm:$0xff]
      %v828 = vld [vmem:[%s1 + $0x308] sm:$0xff]
      %v829 = vld [vmem:[%s1 + $0x310] sm:$0xff]
      %v830 = vld [vmem:[%s1 + $0x318] sm:$0xff]
      %v831 = vld [vmem:[%s1 + $0x320] sm:$0xff]
      %v832 = vld [vmem:[%s1 + $0x328] sm:$0xff]
      %v833 = vld [vmem:[%s1 + $0x330] sm:$0xff]
      %v834 = vld [vmem:[%s1 + $0x338] sm:$0xff]
      %v835 = vld [vmem:[%s1 + $0x340] sm:$0xff]
      %v836 = vld [vmem:[%s1 + $0x348] sm:$0xff]
      %v837 = vld [vmem:[%s1 + $0x350] sm:$0xff]
      %v838 = vld [vmem:[%s1 + $0x358] sm:$0xff]
      %v839 = vld [vmem:[%s1 + $0x360] sm:$0xff]
      %v840 = vld [vmem:[%s1 + $0x368] sm:$0xff]
      %v841 = vld [vmem:[%s1 + $0x370] sm:$0xff]
      %v842 = vld [vmem:[%s1 + $0x378] sm:$0xff]
      %v843 = vld [vmem:[%s1 + $0x380] sm:$0xff]
      %v844 = vld [vmem:[%s1 + $0x388] sm:$0xff]
      %v845 = vld [vmem:[%s1 + $0x390] sm:$0xff]
      %v846 = vld [vmem:[%s1 + $0x398] sm:$0xff]
      %v847 = vld [vmem:[%s1 + $0x3a0] sm:$0xff]
      %v848 = vld [vmem:[%s1 + $0x3a8] sm:$0xff]
      %v849 = vld [vmem:[%s1 + $0x3b0] sm:$0xff]
      %v850 = vld [vmem:[%s1 + $0x3b8] sm:$0xff]
      %v851 = vld [vmem:[%s1 + $0x3c0] sm:$0xff]
      %v852 = vld [vmem:[%s1 + $0x3c8] sm:$0xff]
      %v853 = vld [vmem:[%s1 + $0x3d0] sm:$0xff]
      %v854 = vld [vmem:[%s1 + $0x3d8] sm:$0xff]
      %v855 = vld [vmem:[%s1 + $0x3e0] sm:$0xff]
      %v856 = vld [vmem:[%s1 + $0x3e8] sm:$0xff]
      %v857 = vld [vmem:[%s1 + $0x3f0] sm:$0xff]
      %v858 = vld [vmem:[%s1 + $0x3f8] sm:$0xff]
      %v859 = vld [vmem:[%s1 + $0x400] sm:$0xff]
      %v860 = vld [vmem:[%s1 + $0x408] sm:$0xff]
      %v861 = vld [vmem:[%s1 + $0x410] sm:$0xff]
      %v862 = vld [vmem:[%s1 + $0x418] sm:$0xff]
      %v863 = vld [vmem:[%s1 + $0x420] sm:$0xff]
      %v864 = vld [vmem:[%s1 + $0x428] sm:$0xff]
      %v865 = vld [vmem:[%s1 + $0x430] sm:$0xff]
      %v866 = vld [vmem:[%s1 + $0x438] sm:$0xff]
      %v867 = vld [vmem:[%s1 + $0x440] sm:$0xff]
      %v868 = vld [vmem:[%s1 + $0x448] sm:$0xff]
      %v869 = vld [vmem:[%s1 + $0x450] sm:$0xff]
      %v870 = vld [vmem:[%s1 + $0x458] sm:$0xff]
      %v871 = vld [vmem:[%s1 + $0x460] sm:$0xff]
      %v872 = vld [vmem:[%s1 + $0x468] sm:$0xff]
      %v873 = vld [vmem:[%s1 + $0x470] sm:$0xff]
      %v874 = vld [vmem:[%s1 + $0x478] sm:$0xff]
      %v875 = vld [vmem:[%s2] sm:$0x1]
      %v877 = vlaneseq
      %v878 = vshrl.u32 %v877, 7
      %v879 = vsub.s32 0, %v878
      %v880 = vrot.slane %v875, %v879
      %882 = vmatprep.subr.mxu0 0.0
      %883 = vmatpush1.msra.mxu0 %v746
      %884 = vmatprep.subr.mxu0 0.0
      %885 = vmatpush1.msra.mxu0 %v745
      %886 = vmatprep.subr.mxu0 0.0
      %887 = vmatpush1.msra.mxu0 %v744
      %888 = vmatprep.subr.mxu0 0.0
      %889 = vmatpush1.msra.mxu0 %v743
      %890 = vmatprep.subr.mxu0 0.0
      %891 = vmatpush1.msra.mxu0 %v742
      %892 = vmatprep.subr.mxu0 0.0
      %893 = vmatpush1.msra.mxu0 %v741
      %894 = vmatprep.subr.mxu0 0.0
      %895 = vmatpush1.msra.mxu0 %v740
      %896 = vmatprep.subr.mxu0 0.0
      %897 = vmatpush1.msra.mxu0 %v739
      %898 = vmatprep.subr.mxu0 0.0
      %899 = vmatpush1.msra.mxu0 %v738
      %900 = vmatprep.subr.mxu0 0.0
      %901 = vmatpush1.msra.mxu0 %v737
      %902 = vmatprep.subr.mxu0 0.0
      %903 = vmatpush1.msra.mxu0 %v736
      %904 = vmatprep.subr.mxu0 0.0
      %905 = vmatpush1.msra.mxu0 %v735
      %906 = vmatprep.subr.mxu0 0.0
      %907 = vmatpush1.msra.mxu0 %v734
      %908 = vmatprep.subr.mxu0 0.0
      %909 = vmatpush1.msra.mxu0 %v733
      %910 = vmatprep.subr.mxu0 0.0
      %911 = vmatpush1.msra.mxu0 %v732
      %912 = vmatprep.subr.mxu0 0.0
      %913 = vmatpush1.msra.mxu0 %v731
      %914 = vmatprep.subr.mxu0 0.0
      %915 = vmatpush2.msra.mxu0 %v762
      %916 = vmatprep.subr.mxu0 0.0
      %917 = vmatpush2.msra.mxu0 %v761
      %918 = vmatprep.subr.mxu0 0.0
      %919 = vmatpush2.msra.mxu0 %v760
      %920 = vmatprep.subr.mxu0 0.0
      %921 = vmatpush2.msra.mxu0 %v759
      %922 = vmatprep.subr.mxu0 0.0
      %923 = vmatpush2.msra.mxu0 %v758
      %924 = vmatprep.subr.mxu0 0.0
      %925 = vmatpush2.msra.mxu0 %v757
      %926 = vmatprep.subr.mxu0 0.0
      %927 = vmatpush2.msra.mxu0 %v756
      %928 = vmatprep.subr.mxu0 0.0
      %929 = vmatpush2.msra.mxu0 %v755
      %930 = vmatprep.subr.mxu0 0.0
      %931 = vmatpush2.msra.mxu0 %v754
      %932 = vmatprep.subr.mxu0 0.0
      %933 = vmatpush2.msra.mxu0 %v753
      %934 = vmatprep.subr.mxu0 0.0
      %935 = vmatpush2.msra.mxu0 %v752
      %936 = vmatprep.subr.mxu0 0.0
      %937 = vmatpush2.msra.mxu0 %v751
      %938 = vmatprep.subr.mxu0 0.0
      %939 = vmatpush2.msra.mxu0 %v750
      %940 = vmatprep.subr.mxu0 0.0
      %941 = vmatpush2.msra.mxu0 %v749
      %942 = vmatprep.subr.mxu0 0.0
      %943 = vmatpush2.msra.mxu0 %v748
      %944 = vmatprep.subr.mxu0 0.0
      %945 = vmatpush2.msra.mxu0 %v747
      %946 = vmatprep.mubr.f32.mxu0 %v502
      %947 = vmatmul.mubr.f32.gmra.mxu0 %v409
      %v948 = vpop.f32.mrf.mxu0
      %v949 = vadd.f32 %v880, %v948
      %v950 = vpop.f32.mrf.mxu0
      %951 = vmatprep.mubr.f32.mxu0 %v504
      %952 = vmatmul.mubr.f32.gmra.mxu0 %v410
      %v953 = vpop.f32.mrf.mxu0
      %v954 = vadd.f32 %v880, %v953
      %v955 = vpop.f32.mrf.mxu0
      %956 = vmatprep.mubr.f32.mxu0 %v507
      %957 = vmatmul.mubr.f32.gmra.mxu0 %v412
      %v958 = vpop.f32.mrf.mxu0
      %v959 = vadd.f32 %v880, %v958
      %v960 = vpop.f32.mrf.mxu0
      %961 = vmatprep.mubr.f32.mxu0 %v509
      %962 = vmatmul.mubr.f32.gmra.mxu0 %v413
      %v963 = vpop.f32.mrf.mxu0
      %v964 = vadd.f32 %v880, %v963
      %v965 = vpop.f32.mrf.mxu0
      %966 = vmatprep.mubr.f32.mxu0 %v512
      %967 = vmatmul.mubr.f32.gmra.mxu0 %v415
      %v968 = vpop.f32.mrf.mxu0
      %v969 = vadd.f32 %v880, %v968
      %v970 = vpop.f32.mrf.mxu0
      %971 = vmatprep.mubr.f32.mxu0 %v514
      %972 = vmatmul.mubr.f32.gmra.mxu0 %v416
      %v973 = vpop.f32.mrf.mxu0
      %v974 = vadd.f32 %v880, %v973
      %v975 = vpop.f32.mrf.mxu0
      %976 = vmatprep.mubr.f32.mxu0 %v517
      %977 = vmatmul.mubr.f32.gmra.mxu0 %v418
      %v978 = vpop.f32.mrf.mxu0
      %v979 = vadd.f32 %v880, %v978
      %v980 = vpop.f32.mrf.mxu0
      %981 = vmatprep.mubr.f32.mxu0 %v519
      %982 = vmatmul.mubr.f32.gmra.mxu0 %v419
      %v983 = vpop.f32.mrf.mxu0
      %v984 = vadd.f32 %v880, %v983
      %v985 = vpop.f32.mrf.mxu0
      %986 = vmatprep.mubr.f32.mxu0 %v522
      %987 = vmatmul.mubr.f32.gmra.mxu0 %v421
      %v988 = vpop.f32.mrf.mxu0
      %v989 = vadd.f32 %v880, %v988
      %v990 = vpop.f32.mrf.mxu0
      %991 = vmatprep.mubr.f32.mxu0 %v524
      %992 = vmatmul.mubr.f32.gmra.mxu0 %v422
      %v993 = vpop.f32.mrf.mxu0
      %v994 = vadd.f32 %v880, %v993
      %v995 = vpop.f32.mrf.mxu0
      %996 = vmatprep.mubr.f32.mxu0 %v527
      %997 = vmatmul.mubr.f32.gmra.mxu0 %v424
      %v998 = vpop.f32.mrf.mxu0
      %v999 = vadd.f32 %v880, %v998
      %v1000 = vpop.f32.mrf.mxu0
      %1001 = vmatprep.mubr.f32.mxu0 %v529
      %1002 = vmatmul.mubr.f32.gmra.mxu0 %v425
      %v1003 = vpop.f32.mrf.mxu0
      %v1004 = vadd.f32 %v880, %v1003
      %v1005 = vpop.f32.mrf.mxu0
      %1006 = vmatprep.mubr.f32.mxu0 %v532
      %1007 = vmatmul.mubr.f32.gmra.mxu0 %v427
      %v1008 = vpop.f32.mrf.mxu0
      %v1009 = vadd.f32 %v880, %v1008
      %v1010 = vpop.f32.mrf.mxu0
      %1011 = vmatprep.mubr.f32.mxu0 %v534
      %1012 = vmatmul.mubr.f32.gmra.mxu0 %v428
      %v1013 = vpop.f32.mrf.mxu0
      %v1014 = vadd.f32 %v880, %v1013
      %v1015 = vpop.f32.mrf.mxu0
      %1016 = vmatprep.mubr.f32.mxu0 %v537
      %1017 = vmatmul.mubr.f32.gmra.mxu0 %v430
      %v1018 = vpop.f32.mrf.mxu0
      %v1019 = vadd.f32 %v880, %v1018
      %v1020 = vpop.f32.mrf.mxu0
      %1021 = vmatprep.mubr.f32.mxu0 %v539
      %1022 = vmatmul.mubr.f32.gmra.mxu0 %v431
      %v1023 = vpop.f32.mrf.mxu0
      %v1024 = vadd.f32 %v880, %v1023
      %v1025 = vpop.f32.mrf.mxu0
      %1026 = vmatprep.mubr.f32.mxu0 %v542
      %1027 = vmatmul.mubr.f32.gmra.mxu0 %v433
      %v1028 = vpop.f32.mrf.mxu0
      %v1029 = vadd.f32 %v880, %v1028
      %v1030 = vpop.f32.mrf.mxu0
      %1031 = vmatprep.mubr.f32.mxu0 %v544
      %1032 = vmatmul.mubr.f32.gmra.mxu0 %v434
      %v1033 = vpop.f32.mrf.mxu0
      %v1034 = vadd.f32 %v880, %v1033
      %v1035 = vpop.f32.mrf.mxu0
      %1036 = vmatprep.mubr.f32.mxu0 %v547
      %1037 = vmatmul.mubr.f32.gmra.mxu0 %v436
      %v1038 = vpop.f32.mrf.mxu0
      %v1039 = vadd.f32 %v880, %v1038
      %v1040 = vpop.f32.mrf.mxu0
      %1041 = vmatprep.mubr.f32.mxu0 %v549
      %1042 = vmatmul.mubr.f32.gmra.mxu0 %v437
      %v1043 = vpop.f32.mrf.mxu0
      %v1044 = vadd.f32 %v880, %v1043
      %v1045 = vpop.f32.mrf.mxu0
      %1046 = vmatprep.mubr.f32.mxu0 %v552
      %1047 = vmatmul.mubr.f32.gmra.mxu0 %v439
      %v1048 = vpop.f32.mrf.mxu0
      %v1049 = vadd.f32 %v880, %v1048
      %v1050 = vpop.f32.mrf.mxu0
      %1051 = vmatprep.mubr.f32.mxu0 %v554
      %1052 = vmatmul.mubr.f32.gmra.mxu0 %v440
      %v1053 = vpop.f32.mrf.mxu0
      %v1054 = vadd.f32 %v880, %v1053
      %v1055 = vpop.f32.mrf.mxu0
      %1056 = vmatprep.mubr.f32.mxu0 %v557
      %1057 = vmatmul.mubr.f32.gmra.mxu0 %v442
      %v1058 = vpop.f32.mrf.mxu0
      %v1059 = vadd.f32 %v880, %v1058
      %v1060 = vpop.f32.mrf.mxu0
      %1061 = vmatprep.mubr.f32.mxu0 %v559
      %1062 = vmatmul.mubr.f32.gmra.mxu0 %v443
      %v1063 = vpop.f32.mrf.mxu0
      %v1064 = vadd.f32 %v880, %v1063
      %v1065 = vpop.f32.mrf.mxu0
      %1066 = vmatprep.mubr.f32.mxu0 %v562
      %1067 = vmatmul.mubr.f32.gmra.mxu0 %v445
      %v1068 = vpop.f32.mrf.mxu0
      %v1069 = vadd.f32 %v880, %v1068
      %v1070 = vpop.f32.mrf.mxu0
      %1071 = vmatprep.mubr.f32.mxu0 %v564
      %1072 = vmatmul.mubr.f32.gmra.mxu0 %v446
      %v1073 = vpop.f32.mrf.mxu0
      %v1074 = vadd.f32 %v880, %v1073
      %v1075 = vpop.f32.mrf.mxu0
      %1076 = vmatprep.mubr.f32.mxu0 %v567
      %1077 = vmatmul.mubr.f32.gmra.mxu0 %v448
      %v1078 = vpop.f32.mrf.mxu0
      %v1079 = vadd.f32 %v880, %v1078
      %v1080 = vpop.f32.mrf.mxu0
      %1081 = vmatprep.mubr.f32.mxu0 %v569
      %1082 = vmatmul.mubr.f32.gmra.mxu0 %v449
      %v1083 = vpop.f32.mrf.mxu0
      %v1084 = vadd.f32 %v880, %v1083
      %v1085 = vpop.f32.mrf.mxu0
      %1086 = vdwg.mxu0
      %1087 = vmatprep.subr.mxu0 0.0
      %1088 = vmatpush1.msra.mxu0 %v778
      %1089 = vmatprep.subr.mxu0 0.0
      %1090 = vmatpush1.msra.mxu0 %v777
      %1091 = vmatprep.subr.mxu0 0.0
      %1092 = vmatpush1.msra.mxu0 %v776
      %1093 = vmatprep.subr.mxu0 0.0
      %1094 = vmatpush1.msra.mxu0 %v775
      %1095 = vmatprep.subr.mxu0 0.0
      %1096 = vmatpush1.msra.mxu0 %v774
      %1097 = vmatprep.subr.mxu0 0.0
      %1098 = vmatpush1.msra.mxu0 %v773
      %1099 = vmatprep.subr.mxu0 0.0
      %1100 = vmatpush1.msra.mxu0 %v772
      %1101 = vmatprep.subr.mxu0 0.0
      %1102 = vmatpush1.msra.mxu0 %v771
      %1103 = vmatprep.subr.mxu0 0.0
      %1104 = vmatpush1.msra.mxu0 %v770
      %1105 = vmatprep.subr.mxu0 0.0
      %1106 = vmatpush1.msra.mxu0 %v769
      %1107 = vmatprep.subr.mxu0 0.0
      %1108 = vmatpush1.msra.mxu0 %v768
      %1109 = vmatprep.subr.mxu0 0.0
      %1110 = vmatpush1.msra.mxu0 %v767
      %1111 = vmatprep.subr.mxu0 0.0
      %1112 = vmatpush1.msra.mxu0 %v766
      %1113 = vmatprep.subr.mxu0 0.0
      %1114 = vmatpush1.msra.mxu0 %v765
      %1115 = vmatprep.subr.mxu0 0.0
      %1116 = vmatpush1.msra.mxu0 %v764
      %1117 = vmatprep.subr.mxu0 0.0
      %1118 = vmatpush1.msra.mxu0 %v763
      %1119 = vmatprep.subr.mxu0 0.0
      %1120 = vmatpush2.msra.mxu0 %v794
      %1121 = vmatprep.subr.mxu0 0.0
      %1122 = vmatpush2.msra.mxu0 %v793
      %1123 = vmatprep.subr.mxu0 0.0
      %1124 = vmatpush2.msra.mxu0 %v792
      %1125 = vmatprep.subr.mxu0 0.0
      %1126 = vmatpush2.msra.mxu0 %v791
      %1127 = vmatprep.subr.mxu0 0.0
      %1128 = vmatpush2.msra.mxu0 %v790
      %1129 = vmatprep.subr.mxu0 0.0
      %1130 = vmatpush2.msra.mxu0 %v789
      %1131 = vmatprep.subr.mxu0 0.0
      %1132 = vmatpush2.msra.mxu0 %v788
      %1133 = vmatprep.subr.mxu0 0.0
      %1134 = vmatpush2.msra.mxu0 %v787
      %1135 = vmatprep.subr.mxu0 0.0
      %1136 = vmatpush2.msra.mxu0 %v786
      %1137 = vmatprep.subr.mxu0 0.0
      %1138 = vmatpush2.msra.mxu0 %v785
      %1139 = vmatprep.subr.mxu0 0.0
      %1140 = vmatpush2.msra.mxu0 %v784
      %1141 = vmatprep.subr.mxu0 0.0
      %1142 = vmatpush2.msra.mxu0 %v783
      %1143 = vmatprep.subr.mxu0 0.0
      %1144 = vmatpush2.msra.mxu0 %v782
      %1145 = vmatprep.subr.mxu0 0.0
      %1146 = vmatpush2.msra.mxu0 %v781
      %1147 = vmatprep.subr.mxu0 0.0
      %1148 = vmatpush2.msra.mxu0 %v780
      %1149 = vmatprep.subr.mxu0 0.0
      %1150 = vmatpush2.msra.mxu0 %v779
      %1151 = vmatprep.mubr.f32.mxu0 %v412
      %1152 = vmatmul.mubr.f32.gmra.mxu0 %v601
      %v1153 = vpop.f32.mrf.mxu0
      %v1154 = vadd.f32 %v949, %v1153
      %v1155 = vpop.f32.mrf.mxu0
      %1156 = vmatprep.mubr.f32.mxu0 %v413
      %1157 = vmatmul.mubr.f32.gmra.mxu0 %v603
      %v1158 = vpop.f32.mrf.mxu0
      %v1159 = vadd.f32 %v954, %v1158
      %v1160 = vpop.f32.mrf.mxu0
      %1161 = vmatprep.mubr.f32.mxu0 %v415
      %1162 = vmatmul.mubr.f32.gmra.mxu0 %v606
      %v1163 = vpop.f32.mrf.mxu0
      %v1164 = vadd.f32 %v959, %v1163
      %v1165 = vpop.f32.mrf.mxu0
      %1166 = vmatprep.mubr.f32.mxu0 %v416
      %1167 = vmatmul.mubr.f32.gmra.mxu0 %v608
      %v1168 = vpop.f32.mrf.mxu0
      %v1169 = vadd.f32 %v964, %v1168
      %v1170 = vpop.f32.mrf.mxu0
      %1171 = vmatprep.mubr.f32.mxu0 %v418
      %1172 = vmatmul.mubr.f32.gmra.mxu0 %v611
      %v1173 = vpop.f32.mrf.mxu0
      %v1174 = vadd.f32 %v969, %v1173
      %v1175 = vpop.f32.mrf.mxu0
      %1176 = vmatprep.mubr.f32.mxu0 %v419
      %1177 = vmatmul.mubr.f32.gmra.mxu0 %v613
      %v1178 = vpop.f32.mrf.mxu0
      %v1179 = vadd.f32 %v974, %v1178
      %v1180 = vpop.f32.mrf.mxu0
      %1181 = vmatprep.mubr.f32.mxu0 %v421
      %1182 = vmatmul.mubr.f32.gmra.mxu0 %v616
      %v1183 = vpop.f32.mrf.mxu0
      %v1184 = vadd.f32 %v979, %v1183
      %v1185 = vpop.f32.mrf.mxu0
      %1186 = vmatprep.mubr.f32.mxu0 %v422
      %1187 = vmatmul.mubr.f32.gmra.mxu0 %v618
      %v1188 = vpop.f32.mrf.mxu0
      %v1189 = vadd.f32 %v984, %v1188
      %v1190 = vpop.f32.mrf.mxu0
      %1191 = vmatprep.mubr.f32.mxu0 %v424
      %1192 = vmatmul.mubr.f32.gmra.mxu0 %v621
      %v1193 = vpop.f32.mrf.mxu0
      %v1194 = vadd.f32 %v989, %v1193
      %v1195 = vpop.f32.mrf.mxu0
      %1196 = vmatprep.mubr.f32.mxu0 %v425
      %1197 = vmatmul.mubr.f32.gmra.mxu0 %v623
      %v1198 = vpop.f32.mrf.mxu0
      %v1199 = vadd.f32 %v994, %v1198
      %v1200 = vpop.f32.mrf.mxu0
      %1201 = vmatprep.mubr.f32.mxu0 %v427
      %1202 = vmatmul.mubr.f32.gmra.mxu0 %v626
      %v1203 = vpop.f32.mrf.mxu0
      %v1204 = vadd.f32 %v999, %v1203
      %v1205 = vpop.f32.mrf.mxu0
      %1206 = vmatprep.mubr.f32.mxu0 %v428
      %1207 = vmatmul.mubr.f32.gmra.mxu0 %v628
      %v1208 = vpop.f32.mrf.mxu0
      %v1209 = vadd.f32 %v1004, %v1208
      %v1210 = vpop.f32.mrf.mxu0
      %1211 = vmatprep.mubr.f32.mxu0 %v430
      %1212 = vmatmul.mubr.f32.gmra.mxu0 %v631
      %v1213 = vpop.f32.mrf.mxu0
      %v1214 = vadd.f32 %v1009, %v1213
      %v1215 = vpop.f32.mrf.mxu0
      %1216 = vmatprep.mubr.f32.mxu0 %v431
      %1217 = vmatmul.mubr.f32.gmra.mxu0 %v633
      %v1218 = vpop.f32.mrf.mxu0
      %v1219 = vadd.f32 %v1014, %v1218
      %v1220 = vpop.f32.mrf.mxu0
      %1221 = vmatprep.mubr.f32.mxu0 %v433
      %1222 = vmatmul.mubr.f32.gmra.mxu0 %v636
      %v1223 = vpop.f32.mrf.mxu0
      %v1224 = vadd.f32 %v1019, %v1223
      %v1225 = vpop.f32.mrf.mxu0
      %1226 = vmatprep.mubr.f32.mxu0 %v434
      %1227 = vmatmul.mubr.f32.gmra.mxu0 %v638
      %v1228 = vpop.f32.mrf.mxu0
      %v1229 = vadd.f32 %v1024, %v1228
      %v1230 = vpop.f32.mrf.mxu0
      %1231 = vmatprep.mubr.f32.mxu0 %v436
      %1232 = vmatmul.mubr.f32.gmra.mxu0 %v641
      %v1233 = vpop.f32.mrf.mxu0
      %v1234 = vadd.f32 %v1029, %v1233
      %v1235 = vpop.f32.mrf.mxu0
      %1236 = vmatprep.mubr.f32.mxu0 %v437
      %1237 = vmatmul.mubr.f32.gmra.mxu0 %v643
      %v1238 = vpop.f32.mrf.mxu0
      %v1239 = vadd.f32 %v1034, %v1238
      %v1240 = vpop.f32.mrf.mxu0
      %1241 = vmatprep.mubr.f32.mxu0 %v439
      %1242 = vmatmul.mubr.f32.gmra.mxu0 %v646
      %v1243 = vpop.f32.mrf.mxu0
      %v1244 = vadd.f32 %v1039, %v1243
      %v1245 = vpop.f32.mrf.mxu0
      %1246 = vmatprep.mubr.f32.mxu0 %v440
      %1247 = vmatmul.mubr.f32.gmra.mxu0 %v648
      %v1248 = vpop.f32.mrf.mxu0
      %v1249 = vadd.f32 %v1044, %v1248
      %v1250 = vpop.f32.mrf.mxu0
      %1251 = vmatprep.mubr.f32.mxu0 %v442
      %1252 = vmatmul.mubr.f32.gmra.mxu0 %v651
      %v1253 = vpop.f32.mrf.mxu0
      %v1254 = vadd.f32 %v1049, %v1253
      %v1255 = vpop.f32.mrf.mxu0
      %1256 = vmatprep.mubr.f32.mxu0 %v443
      %1257 = vmatmul.mubr.f32.gmra.mxu0 %v653
      %v1258 = vpop.f32.mrf.mxu0
      %v1259 = vadd.f32 %v1054, %v1258
      %v1260 = vpop.f32.mrf.mxu0
      %1261 = vmatprep.mubr.f32.mxu0 %v445
      %1262 = vmatmul.mubr.f32.gmra.mxu0 %v656
      %v1263 = vpop.f32.mrf.mxu0
      %v1264 = vadd.f32 %v1059, %v1263
      %v1265 = vpop.f32.mrf.mxu0
      %1266 = vmatprep.mubr.f32.mxu0 %v446
      %1267 = vmatmul.mubr.f32.gmra.mxu0 %v658
      %v1268 = vpop.f32.mrf.mxu0
      %v1269 = vadd.f32 %v1064, %v1268
      %v1270 = vpop.f32.mrf.mxu0
      %1271 = vmatprep.mubr.f32.mxu0 %v448
      %1272 = vmatmul.mubr.f32.gmra.mxu0 %v661
      %v1273 = vpop.f32.mrf.mxu0
      %v1274 = vadd.f32 %v1069, %v1273
      %v1275 = vpop.f32.mrf.mxu0
      %1276 = vmatprep.mubr.f32.mxu0 %v449
      %1277 = vmatmul.mubr.f32.gmra.mxu0 %v663
      %v1278 = vpop.f32.mrf.mxu0
      %v1279 = vadd.f32 %v1074, %v1278
      %v1280 = vpop.f32.mrf.mxu0
      %1281 = vmatprep.mubr.f32.mxu0 %v451
      %1282 = vmatmul.mubr.f32.gmra.mxu0 %v666
      %v1283 = vpop.f32.mrf.mxu0
      %v1284 = vadd.f32 %v1079, %v1283
      %v1285 = vpop.f32.mrf.mxu0
      %1286 = vmatprep.mubr.f32.mxu0 %v452
      %1287 = vmatmul.mubr.f32.gmra.mxu0 %v668
      %v1288 = vpop.f32.mrf.mxu0
      %v1289 = vadd.f32 %v1084, %v1288
      %v1290 = vpop.f32.mrf.mxu0
      %1291 = vdwg.mxu0
      %1292 = vmatprep.subr.mxu0 0.0
      %1293 = vmatpush1.msra.mxu0 %v810
      %1294 = vmatprep.subr.mxu0 0.0
      %1295 = vmatpush1.msra.mxu0 %v809
      %1296 = vmatprep.subr.mxu0 0.0
      %1297 = vmatpush1.msra.mxu0 %v808
      %1298 = vmatprep.subr.mxu0 0.0
      %1299 = vmatpush1.msra.mxu0 %v807
      %1300 = vmatprep.subr.mxu0 0.0
      %1301 = vmatpush1.msra.mxu0 %v806
      %1302 = vmatprep.subr.mxu0 0.0
      %1303 = vmatpush1.msra.mxu0 %v805
      %1304 = vmatprep.subr.mxu0 0.0
      %1305 = vmatpush1.msra.mxu0 %v804
      %1306 = vmatprep.subr.mxu0 0.0
      %1307 = vmatpush1.msra.mxu0 %v803
      %1308 = vmatprep.subr.mxu0 0.0
      %1309 = vmatpush1.msra.mxu0 %v802
      %1310 = vmatprep.subr.mxu0 0.0
      %1311 = vmatpush1.msra.mxu0 %v801
      %1312 = vmatprep.subr.mxu0 0.0
      %1313 = vmatpush1.msra.mxu0 %v800
      %1314 = vmatprep.subr.mxu0 0.0
      %1315 = vmatpush1.msra.mxu0 %v799
      %1316 = vmatprep.subr.mxu0 0.0
      %1317 = vmatpush1.msra.mxu0 %v798
      %1318 = vmatprep.subr.mxu0 0.0
      %1319 = vmatpush1.msra.mxu0 %v797
      %1320 = vmatprep.subr.mxu0 0.0
      %1321 = vmatpush1.msra.mxu0 %v796
      %1322 = vmatprep.subr.mxu0 0.0
      %1323 = vmatpush1.msra.mxu0 %v795
      %1324 = vmatprep.subr.mxu0 0.0
      %1325 = vmatpush2.msra.mxu0 %v826
      %1326 = vmatprep.subr.mxu0 0.0
      %1327 = vmatpush2.msra.mxu0 %v825
      %1328 = vmatprep.subr.mxu0 0.0
      %1329 = vmatpush2.msra.mxu0 %v824
      %1330 = vmatprep.subr.mxu0 0.0
      %1331 = vmatpush2.msra.mxu0 %v823
      %1332 = vmatprep.subr.mxu0 0.0
      %1333 = vmatpush2.msra.mxu0 %v822
      %1334 = vmatprep.subr.mxu0 0.0
      %1335 = vmatpush2.msra.mxu0 %v821
      %1336 = vmatprep.subr.mxu0 0.0
      %1337 = vmatpush2.msra.mxu0 %v820
      %1338 = vmatprep.subr.mxu0 0.0
      %1339 = vmatpush2.msra.mxu0 %v819
      %1340 = vmatprep.subr.mxu0 0.0
      %1341 = vmatpush2.msra.mxu0 %v818
      %1342 = vmatprep.subr.mxu0 0.0
      %1343 = vmatpush2.msra.mxu0 %v817
      %1344 = vmatprep.subr.mxu0 0.0
      %1345 = vmatpush2.msra.mxu0 %v816
      %1346 = vmatprep.subr.mxu0 0.0
      %1347 = vmatpush2.msra.mxu0 %v815
      %1348 = vmatprep.subr.mxu0 0.0
      %1349 = vmatpush2.msra.mxu0 %v814
      %1350 = vmatprep.subr.mxu0 0.0
      %1351 = vmatpush2.msra.mxu0 %v813
      %1352 = vmatprep.subr.mxu0 0.0
      %1353 = vmatpush2.msra.mxu0 %v812
      %1354 = vmatprep.subr.mxu0 0.0
      %1355 = vmatpush2.msra.mxu0 %v811
      %1356 = vmatprep.mubr.f32.mxu0 %v606
      %1357 = vmatmul.mubr.f32.gmra.mxu0 %v507
      %v1358 = vpop.f32.mrf.mxu0
      %v1359 = vadd.f32 %v1154, %v1358
      %v1360 = vpop.f32.mrf.mxu0
      %1361 = vmatprep.mubr.f32.mxu0 %v608
      %1362 = vmatmul.mubr.f32.gmra.mxu0 %v509
      %v1363 = vpop.f32.mrf.mxu0
      %v1364 = vadd.f32 %v1159, %v1363
      %v1365 = vpop.f32.mrf.mxu0
      %1366 = vmatprep.mubr.f32.mxu0 %v611
      %1367 = vmatmul.mubr.f32.gmra.mxu0 %v512
      %v1368 = vpop.f32.mrf.mxu0
      %v1369 = vadd.f32 %v1164, %v1368
      %v1370 = vpop.f32.mrf.mxu0
      %1371 = vmatprep.mubr.f32.mxu0 %v613
      %1372 = vmatmul.mubr.f32.gmra.mxu0 %v514
      %v1373 = vpop.f32.mrf.mxu0
      %v1374 = vadd.f32 %v1169, %v1373
      %v1375 = vpop.f32.mrf.mxu0
      %1376 = vmatprep.mubr.f32.mxu0 %v616
      %1377 = vmatmul.mubr.f32.gmra.mxu0 %v517
      %v1378 = vpop.f32.mrf.mxu0
      %v1379 = vadd.f32 %v1174, %v1378
      %v1380 = vpop.f32.mrf.mxu0
      %1381 = vmatprep.mubr.f32.mxu0 %v618
      %1382 = vmatmul.mubr.f32.gmra.mxu0 %v519
      %v1383 = vpop.f32.mrf.mxu0
      %v1384 = vadd.f32 %v1179, %v1383
      %v1385 = vpop.f32.mrf.mxu0
      %1386 = vmatprep.mubr.f32.mxu0 %v621
      %1387 = vmatmul.mubr.f32.gmra.mxu0 %v522
      %v1388 = vpop.f32.mrf.mxu0
      %v1389 = vadd.f32 %v1184, %v1388
      %v1390 = vpop.f32.mrf.mxu0
      %1391 = vmatprep.mubr.f32.mxu0 %v623
      %1392 = vmatmul.mubr.f32.gmra.mxu0 %v524
      %v1393 = vpop.f32.mrf.mxu0
      %v1394 = vadd.f32 %v1189, %v1393
      %v1395 = vpop.f32.mrf.mxu0
      %1396 = vmatprep.mubr.f32.mxu0 %v626
      %1397 = vmatmul.mubr.f32.gmra.mxu0 %v527
      %v1398 = vpop.f32.mrf.mxu0
      %v1399 = vadd.f32 %v1194, %v1398
      %v1400 = vpop.f32.mrf.mxu0
      %1401 = vmatprep.mubr.f32.mxu0 %v628
      %1402 = vmatmul.mubr.f32.gmra.mxu0 %v529
      %v1403 = vpop.f32.mrf.mxu0
      %v1404 = vadd.f32 %v1199, %v1403
      %v1405 = vpop.f32.mrf.mxu0
      %1406 = vmatprep.mubr.f32.mxu0 %v631
      %1407 = vmatmul.mubr.f32.gmra.mxu0 %v532
      %v1408 = vpop.f32.mrf.mxu0
      %v1409 = vadd.f32 %v1204, %v1408
      %v1410 = vpop.f32.mrf.mxu0
      %1411 = vmatprep.mubr.f32.mxu0 %v633
      %1412 = vmatmul.mubr.f32.gmra.mxu0 %v534
      %v1413 = vpop.f32.mrf.mxu0
      %v1414 = vadd.f32 %v1209, %v1413
      %v1415 = vpop.f32.mrf.mxu0
      %1416 = vmatprep.mubr.f32.mxu0 %v636
      %1417 = vmatmul.mubr.f32.gmra.mxu0 %v537
      %v1418 = vpop.f32.mrf.mxu0
      %v1419 = vadd.f32 %v1214, %v1418
      %v1420 = vpop.f32.mrf.mxu0
      %1421 = vmatprep.mubr.f32.mxu0 %v638
      %1422 = vmatmul.mubr.f32.gmra.mxu0 %v539
      %v1423 = vpop.f32.mrf.mxu0
      %v1424 = vadd.f32 %v1219, %v1423
      %v1425 = vpop.f32.mrf.mxu0
      %1426 = vmatprep.mubr.f32.mxu0 %v641
      %1427 = vmatmul.mubr.f32.gmra.mxu0 %v542
      %v1428 = vpop.f32.mrf.mxu0
      %v1429 = vadd.f32 %v1224, %v1428
      %v1430 = vpop.f32.mrf.mxu0
      %1431 = vmatprep.mubr.f32.mxu0 %v643
      %1432 = vmatmul.mubr.f32.gmra.mxu0 %v544
      %v1433 = vpop.f32.mrf.mxu0
      %v1434 = vadd.f32 %v1229, %v1433
      %v1435 = vpop.f32.mrf.mxu0
      %1436 = vmatprep.mubr.f32.mxu0 %v646
      %1437 = vmatmul.mubr.f32.gmra.mxu0 %v547
      %v1438 = vpop.f32.mrf.mxu0
      %v1439 = vadd.f32 %v1234, %v1438
      %v1440 = vpop.f32.mrf.mxu0
      %1441 = vmatprep.mubr.f32.mxu0 %v648
      %1442 = vmatmul.mubr.f32.gmra.mxu0 %v549
      %v1443 = vpop.f32.mrf.mxu0
      %v1444 = vadd.f32 %v1239, %v1443
      %v1445 = vpop.f32.mrf.mxu0
      %1446 = vmatprep.mubr.f32.mxu0 %v651
      %1447 = vmatmul.mubr.f32.gmra.mxu0 %v552
      %v1448 = vpop.f32.mrf.mxu0
      %v1449 = vadd.f32 %v1244, %v1448
      %v1450 = vpop.f32.mrf.mxu0
      %1451 = vmatprep.mubr.f32.mxu0 %v653
      %1452 = vmatmul.mubr.f32.gmra.mxu0 %v554
      %v1453 = vpop.f32.mrf.mxu0
      %v1454 = vadd.f32 %v1249, %v1453
      %v1455 = vpop.f32.mrf.mxu0
      %1456 = vmatprep.mubr.f32.mxu0 %v656
      %1457 = vmatmul.mubr.f32.gmra.mxu0 %v557
      %v1458 = vpop.f32.mrf.mxu0
      %v1459 = vadd.f32 %v1254, %v1458
      %v1460 = vpop.f32.mrf.mxu0
      %1461 = vmatprep.mubr.f32.mxu0 %v658
      %1462 = vmatmul.mubr.f32.gmra.mxu0 %v559
      %v1463 = vpop.f32.mrf.mxu0
      %v1464 = vadd.f32 %v1259, %v1463
      %v1465 = vpop.f32.mrf.mxu0
      %1466 = vmatprep.mubr.f32.mxu0 %v661
      %1467 = vmatmul.mubr.f32.gmra.mxu0 %v562
      %v1468 = vpop.f32.mrf.mxu0
      %v1469 = vadd.f32 %v1264, %v1468
      %v1470 = vpop.f32.mrf.mxu0
      %1471 = vmatprep.mubr.f32.mxu0 %v663
      %1472 = vmatmul.mubr.f32.gmra.mxu0 %v564
      %v1473 = vpop.f32.mrf.mxu0
      %v1474 = vadd.f32 %v1269, %v1473
      %v1475 = vpop.f32.mrf.mxu0
      %1476 = vmatprep.mubr.f32.mxu0 %v666
      %1477 = vmatmul.mubr.f32.gmra.mxu0 %v567
      %v1478 = vpop.f32.mrf.mxu0
      %v1479 = vadd.f32 %v1274, %v1478
      %v1480 = vpop.f32.mrf.mxu0
      %1481 = vmatprep.mubr.f32.mxu0 %v668
      %1482 = vmatmul.mubr.f32.gmra.mxu0 %v569
      %v1483 = vpop.f32.mrf.mxu0
      %v1484 = vadd.f32 %v1279, %v1483
      %v1485 = vpop.f32.mrf.mxu0
      %1486 = vmatprep.mubr.f32.mxu0 %v709
      %1487 = vmatmul.mubr.f32.gmra.mxu0 %v702
      %v1488 = vpop.f32.mrf.mxu0
      %v1489 = vadd.f32 %v1284, %v1488
      %v1490 = vpop.f32.mrf.mxu0
      %1491 = vmatprep.mubr.f32.mxu0 %v711
      %1492 = vmatmul.mubr.f32.gmra.mxu0 %v704
      %v1493 = vpop.f32.mrf.mxu0
      %v1494 = vadd.f32 %v1289, %v1493
      %v1495 = vpop.f32.mrf.mxu0
      %1496 = vdwg.mxu0
      %1497 = vmatprep.subr.mxu0 0.0
      %1498 = vmatpush1.msra.mxu0 %v842
      %1499 = vmatprep.subr.mxu0 0.0
      %1500 = vmatpush1.msra.mxu0 %v841
      %1501 = vmatprep.subr.mxu0 0.0
      %1502 = vmatpush1.msra.mxu0 %v840
      %1503 = vmatprep.subr.mxu0 0.0
      %1504 = vmatpush1.msra.mxu0 %v839
      %1505 = vmatprep.subr.mxu0 0.0
      %1506 = vmatpush1.msra.mxu0 %v838
      %1507 = vmatprep.subr.mxu0 0.0
      %1508 = vmatpush1.msra.mxu0 %v837
      %1509 = vmatprep.subr.mxu0 0.0
      %1510 = vmatpush1.msra.mxu0 %v836
      %1511 = vmatprep.subr.mxu0 0.0
      %1512 = vmatpush1.msra.mxu0 %v835
      %1513 = vmatprep.subr.mxu0 0.0
      %1514 = vmatpush1.msra.mxu0 %v834
      %1515 = vmatprep.subr.mxu0 0.0
      %1516 = vmatpush1.msra.mxu0 %v833
      %1517 = vmatprep.subr.mxu0 0.0
      %1518 = vmatpush1.msra.mxu0 %v832
      %1519 = vmatprep.subr.mxu0 0.0
      %1520 = vmatpush1.msra.mxu0 %v831
      %1521 = vmatprep.subr.mxu0 0.0
      %1522 = vmatpush1.msra.mxu0 %v830
      %1523 = vmatprep.subr.mxu0 0.0
      %1524 = vmatpush1.msra.mxu0 %v829
      %1525 = vmatprep.subr.mxu0 0.0
      %1526 = vmatpush1.msra.mxu0 %v828
      %1527 = vmatprep.subr.mxu0 0.0
      %1528 = vmatpush1.msra.mxu0 %v827
      %1529 = vmatprep.subr.mxu0 0.0
      %1530 = vmatpush2.msra.mxu0 %v858
      %1531 = vmatprep.subr.mxu0 0.0
      %1532 = vmatpush2.msra.mxu0 %v857
      %1533 = vmatprep.subr.mxu0 0.0
      %1534 = vmatpush2.msra.mxu0 %v856
      %1535 = vmatprep.subr.mxu0 0.0
      %1536 = vmatpush2.msra.mxu0 %v855
      %1537 = vmatprep.subr.mxu0 0.0
      %1538 = vmatpush2.msra.mxu0 %v854
      %1539 = vmatprep.subr.mxu0 0.0
      %1540 = vmatpush2.msra.mxu0 %v853
      %1541 = vmatprep.subr.mxu0 0.0
      %1542 = vmatpush2.msra.mxu0 %v852
      %1543 = vmatprep.subr.mxu0 0.0
      %1544 = vmatpush2.msra.mxu0 %v851
      %1545 = vmatprep.subr.mxu0 0.0
      %1546 = vmatpush2.msra.mxu0 %v850
      %1547 = vmatprep.subr.mxu0 0.0
      %1548 = vmatpush2.msra.mxu0 %v849
      %1549 = vmatprep.subr.mxu0 0.0
      %1550 = vmatpush2.msra.mxu0 %v848
      %1551 = vmatprep.subr.mxu0 0.0
      %1552 = vmatpush2.msra.mxu0 %v847
      %1553 = vmatprep.subr.mxu0 0.0
      %1554 = vmatpush2.msra.mxu0 %v846
      %1555 = vmatprep.subr.mxu0 0.0
      %1556 = vmatpush2.msra.mxu0 %v845
      %1557 = vmatprep.subr.mxu0 0.0
      %1558 = vmatpush2.msra.mxu0 %v844
      %1559 = vmatprep.subr.mxu0 0.0
      %1560 = vmatpush2.msra.mxu0 %v843
      %1561 = vmatprep.mubr.f32.mxu0 %v512
      %1562 = vmatmul.mubr.f32.gmra.mxu0 %v415
      %v1563 = vpop.f32.mrf.mxu0
      %v1564 = vadd.f32 %v1359, %v1563
      %v1565 = vpop.f32.mrf.mxu0
      %1566 = vmatprep.mubr.f32.mxu0 %v514
      %1567 = vmatmul.mubr.f32.gmra.mxu0 %v416
      %v1568 = vpop.f32.mrf.mxu0
      %v1569 = vadd.f32 %v1364, %v1568
      %v1570 = vpop.f32.mrf.mxu0
      %1571 = vmatprep.mubr.f32.mxu0 %v517
      %1572 = vmatmul.mubr.f32.gmra.mxu0 %v418
      %v1573 = vpop.f32.mrf.mxu0
      %v1574 = vadd.f32 %v1369, %v1573
      %v1575 = vpop.f32.mrf.mxu0
      %1576 = vmatprep.mubr.f32.mxu0 %v519
      %1577 = vmatmul.mubr.f32.gmra.mxu0 %v419
      %v1578 = vpop.f32.mrf.mxu0
      %v1579 = vadd.f32 %v1374, %v1578
      %v1580 = vpop.f32.mrf.mxu0
      %1581 = vmatprep.mubr.f32.mxu0 %v522
      %1582 = vmatmul.mubr.f32.gmra.mxu0 %v421
      %v1583 = vpop.f32.mrf.mxu0
      %v1584 = vadd.f32 %v1379, %v1583
      %v1585 = vpop.f32.mrf.mxu0
      %1586 = vmatprep.mubr.f32.mxu0 %v524
      %1587 = vmatmul.mubr.f32.gmra.mxu0 %v422
      %v1588 = vpop.f32.mrf.mxu0
      %v1589 = vadd.f32 %v1384, %v1588
      %v1590 = vpop.f32.mrf.mxu0
      %1591 = vmatprep.mubr.f32.mxu0 %v527
      %1592 = vmatmul.mubr.f32.gmra.mxu0 %v424
      %v1593 = vpop.f32.mrf.mxu0
      %v1594 = vadd.f32 %v1389, %v1593
      %v1595 = vpop.f32.mrf.mxu0
      %1596 = vmatprep.mubr.f32.mxu0 %v529
      %1597 = vmatmul.mubr.f32.gmra.mxu0 %v425
      %v1598 = vpop.f32.mrf.mxu0
      %v1599 = vadd.f32 %v1394, %v1598
      %v1600 = vpop.f32.mrf.mxu0
      %1601 = vmatprep.mubr.f32.mxu0 %v532
      %1602 = vmatmul.mubr.f32.gmra.mxu0 %v427
      %v1603 = vpop.f32.mrf.mxu0
      %v1604 = vadd.f32 %v1399, %v1603
      %v1605 = vpop.f32.mrf.mxu0
      %1606 = vmatprep.mubr.f32.mxu0 %v534
      %1607 = vmatmul.mubr.f32.gmra.mxu0 %v428
      %v1608 = vpop.f32.mrf.mxu0
      %v1609 = vadd.f32 %v1404, %v1608
      %v1610 = vpop.f32.mrf.mxu0
      %1611 = vmatprep.mubr.f32.mxu0 %v537
      %1612 = vmatmul.mubr.f32.gmra.mxu0 %v430
      %v1613 = vpop.f32.mrf.mxu0
      %v1614 = vadd.f32 %v1409, %v1613
      %v1615 = vpop.f32.mrf.mxu0
      %1616 = vmatprep.mubr.f32.mxu0 %v539
      %1617 = vmatmul.mubr.f32.gmra.mxu0 %v431
      %v1618 = vpop.f32.mrf.mxu0
      %v1619 = vadd.f32 %v1414, %v1618
      %v1620 = vpop.f32.mrf.mxu0
      %1621 = vmatprep.mubr.f32.mxu0 %v542
      %1622 = vmatmul.mubr.f32.gmra.mxu0 %v433
      %v1623 = vpop.f32.mrf.mxu0
      %v1624 = vadd.f32 %v1419, %v1623
      %v1625 = vpop.f32.mrf.mxu0
      %1626 = vmatprep.mubr.f32.mxu0 %v544
      %1627 = vmatmul.mubr.f32.gmra.mxu0 %v434
      %v1628 = vpop.f32.mrf.mxu0
      %v1629 = vadd.f32 %v1424, %v1628
      %v1630 = vpop.f32.mrf.mxu0
      %1631 = vmatprep.mubr.f32.mxu0 %v547
      %1632 = vmatmul.mubr.f32.gmra.mxu0 %v436
      %v1633 = vpop.f32.mrf.mxu0
      %v1634 = vadd.f32 %v1429, %v1633
      %v1635 = vpop.f32.mrf.mxu0
      %1636 = vmatprep.mubr.f32.mxu0 %v549
      %1637 = vmatmul.mubr.f32.gmra.mxu0 %v437
      %v1638 = vpop.f32.mrf.mxu0
      %v1639 = vadd.f32 %v1434, %v1638
      %v1640 = vpop.f32.mrf.mxu0
      %1641 = vmatprep.mubr.f32.mxu0 %v552
      %1642 = vmatmul.mubr.f32.gmra.mxu0 %v439
      %v1643 = vpop.f32.mrf.mxu0
      %v1644 = vadd.f32 %v1439, %v1643
      %v1645 = vpop.f32.mrf.mxu0
      %1646 = vmatprep.mubr.f32.mxu0 %v554
      %1647 = vmatmul.mubr.f32.gmra.mxu0 %v440
      %v1648 = vpop.f32.mrf.mxu0
      %v1649 = vadd.f32 %v1444, %v1648
      %v1650 = vpop.f32.mrf.mxu0
      %1651 = vmatprep.mubr.f32.mxu0 %v557
      %1652 = vmatmul.mubr.f32.gmra.mxu0 %v442
      %v1653 = vpop.f32.mrf.mxu0
      %v1654 = vadd.f32 %v1449, %v1653
      %v1655 = vpop.f32.mrf.mxu0
      %1656 = vmatprep.mubr.f32.mxu0 %v559
      %1657 = vmatmul.mubr.f32.gmra.mxu0 %v443
      %v1658 = vpop.f32.mrf.mxu0
      %v1659 = vadd.f32 %v1454, %v1658
      %v1660 = vpop.f32.mrf.mxu0
      %1661 = vmatprep.mubr.f32.mxu0 %v562
      %1662 = vmatmul.mubr.f32.gmra.mxu0 %v445
      %v1663 = vpop.f32.mrf.mxu0
      %v1664 = vadd.f32 %v1459, %v1663
      %v1665 = vpop.f32.mrf.mxu0
      %1666 = vmatprep.mubr.f32.mxu0 %v564
      %1667 = vmatmul.mubr.f32.gmra.mxu0 %v446
      %v1668 = vpop.f32.mrf.mxu0
      %v1669 = vadd.f32 %v1464, %v1668
      %v1670 = vpop.f32.mrf.mxu0
      %1671 = vmatprep.mubr.f32.mxu0 %v567
      %1672 = vmatmul.mubr.f32.gmra.mxu0 %v448
      %v1673 = vpop.f32.mrf.mxu0
      %v1674 = vadd.f32 %v1469, %v1673
      %v1675 = vpop.f32.mrf.mxu0
      %1676 = vmatprep.mubr.f32.mxu0 %v569
      %1677 = vmatmul.mubr.f32.gmra.mxu0 %v449
      %v1678 = vpop.f32.mrf.mxu0
      %v1679 = vadd.f32 %v1474, %v1678
      %v1680 = vpop.f32.mrf.mxu0
      %1681 = vmatprep.mubr.f32.mxu0 %v702
      %1682 = vmatmul.mubr.f32.gmra.mxu0 %v451
      %v1683 = vpop.f32.mrf.mxu0
      %v1684 = vadd.f32 %v1479, %v1683
      %v1685 = vpop.f32.mrf.mxu0
      %1686 = vmatprep.mubr.f32.mxu0 %v704
      %1687 = vmatmul.mubr.f32.gmra.mxu0 %v452
      %v1688 = vpop.f32.mrf.mxu0
      %v1689 = vadd.f32 %v1484, %v1688
      %v1690 = vpop.f32.mrf.mxu0
      %1691 = vmatprep.mubr.f32.mxu0 %v719
      %1692 = vmatmul.mubr.f32.gmra.mxu0 %v454
      %v1693 = vpop.f32.mrf.mxu0
      %v1694 = vadd.f32 %v1489, %v1693
      %v1695 = vpop.f32.mrf.mxu0
      %1696 = vmatprep.mubr.f32.mxu0 %v721
      %1697 = vmatmul.mubr.f32.gmra.mxu0 %v455
      %v1698 = vpop.f32.mrf.mxu0
      %v1699 = vadd.f32 %v1494, %v1698
      %v1700 = vpop.f32.mrf.mxu0
      %1701 = vdwg.mxu0
      %1702 = vmatprep.subr.mxu0 0.0
      %1703 = vmatpush1.msra.mxu0 %v874
      %1704 = vmatprep.subr.mxu0 0.0
      %1705 = vmatpush1.msra.mxu0 %v873
      %1706 = vmatprep.subr.mxu0 0.0
      %1707 = vmatpush1.msra.mxu0 %v872
      %1708 = vmatprep.subr.mxu0 0.0
      %1709 = vmatpush1.msra.mxu0 %v871
      %1710 = vmatprep.subr.mxu0 0.0
      %1711 = vmatpush1.msra.mxu0 %v870
      %1712 = vmatprep.subr.mxu0 0.0
      %1713 = vmatpush1.msra.mxu0 %v869
      %1714 = vmatprep.subr.mxu0 0.0
      %1715 = vmatpush1.msra.mxu0 %v868
      %1716 = vmatprep.subr.mxu0 0.0
      %1717 = vmatpush1.msra.mxu0 %v867
      %1718 = vmatprep.subr.mxu0 0.0
      %1719 = vmatpush1.msra.mxu0 %v866
      %1720 = vmatprep.subr.mxu0 0.0
      %1721 = vmatpush1.msra.mxu0 %v865
      %1722 = vmatprep.subr.mxu0 0.0
      %1723 = vmatpush1.msra.mxu0 %v864
      %1724 = vmatprep.subr.mxu0 0.0
      %1725 = vmatpush1.msra.mxu0 %v863
      %1726 = vmatprep.subr.mxu0 0.0
      %1727 = vmatpush1.msra.mxu0 %v862
      %1728 = vmatprep.subr.mxu0 0.0
      %1729 = vmatpush1.msra.mxu0 %v861
      %1730 = vmatprep.subr.mxu0 0.0
      %1731 = vmatpush1.msra.mxu0 %v860
      %1732 = vmatprep.subr.mxu0 0.0
      %1733 = vmatpush1.msra.mxu0 %v859
      %1734 = vmatprep.subr.mxu0 0.0
      %1735 = vmatpush2.msra.mxu0 0.0
      %1736 = vmatprep.subr.mxu0 0.0
      %1737 = vmatpush2.msra.mxu0 0.0
      %1738 = vmatprep.subr.mxu0 0.0
      %1739 = vmatpush2.msra.mxu0 0.0
      %1740 = vmatprep.subr.mxu0 0.0
      %1741 = vmatpush2.msra.mxu0 0.0
      %1742 = vmatprep.subr.mxu0 0.0
      %1743 = vmatpush2.msra.mxu0 0.0
      %1744 = vmatprep.subr.mxu0 0.0
      %1745 = vmatpush2.msra.mxu0 0.0
      %1746 = vmatprep.subr.mxu0 0.0
      %1747 = vmatpush2.msra.mxu0 0.0
      %1748 = vmatprep.subr.mxu0 0.0
      %1749 = vmatpush2.msra.mxu0 0.0
      %1750 = vmatprep.subr.mxu0 0.0
      %1751 = vmatpush2.msra.mxu0 0.0
      %1752 = vmatprep.subr.mxu0 0.0
      %1753 = vmatpush2.msra.mxu0 0.0
      %1754 = vmatprep.subr.mxu0 0.0
      %1755 = vmatpush2.msra.mxu0 0.0
      %1756 = vmatprep.subr.mxu0 0.0
      %1757 = vmatpush2.msra.mxu0 0.0
      %1758 = vmatprep.subr.mxu0 0.0
      %1759 = vmatpush2.msra.mxu0 0.0
      %1760 = vmatprep.subr.mxu0 0.0
      %1761 = vmatpush2.msra.mxu0 0.0
      %1762 = vmatprep.subr.mxu0 0.0
      %1763 = vmatpush2.msra.mxu0 0.0
      %1764 = vmatprep.subr.mxu0 0.0
      %1765 = vmatpush2.msra.mxu0 0.0
      %1766 = vmatprep.mubr.f32.mxu0 0.0
      %1767 = vmatmul.mubr.f32.gmra.mxu0 %v611
      %v1768 = vpop.f32.mrf.mxu0
      %v1769 = vadd.f32 %v1564, %v1768
      %v1770 = vpop.f32.mrf.mxu0
      %1771 = vmatprep.mubr.f32.mxu0 0.0
      %1772 = vmatmul.mubr.f32.gmra.mxu0 %v613
      %v1773 = vpop.f32.mrf.mxu0
      %v1774 = vadd.f32 %v1569, %v1773
      %v1775 = vpop.f32.mrf.mxu0
      %1776 = vmatprep.mubr.f32.mxu0 0.0
      %1777 = vmatmul.mubr.f32.gmra.mxu0 %v616
      %v1778 = vpop.f32.mrf.mxu0
      %v1779 = vadd.f32 %v1574, %v1778
      %v1780 = vpop.f32.mrf.mxu0
      %1781 = vmatprep.mubr.f32.mxu0 0.0
      %1782 = vmatmul.mubr.f32.gmra.mxu0 %v618
      %v1783 = vpop.f32.mrf.mxu0
      %v1784 = vadd.f32 %v1579, %v1783
      %v1785 = vpop.f32.mrf.mxu0
      %1786 = vmatprep.mubr.f32.mxu0 0.0
      %1787 = vmatmul.mubr.f32.gmra.mxu0 %v621
      %v1788 = vpop.f32.mrf.mxu0
      %v1789 = vadd.f32 %v1584, %v1788
      %v1790 = vpop.f32.mrf.mxu0
      %1791 = vmatprep.mubr.f32.mxu0 0.0
      %1792 = vmatmul.mubr.f32.gmra.mxu0 %v623
      %v1793 = vpop.f32.mrf.mxu0
      %v1794 = vadd.f32 %v1589, %v1793
      %v1795 = vpop.f32.mrf.mxu0
      %1796 = vmatprep.mubr.f32.mxu0 0.0
      %1797 = vmatmul.mubr.f32.gmra.mxu0 %v626
      %v1798 = vpop.f32.mrf.mxu0
      %v1799 = vadd.f32 %v1594, %v1798
      %v1800 = vpop.f32.mrf.mxu0
      %1801 = vmatprep.mubr.f32.mxu0 0.0
      %1802 = vmatmul.mubr.f32.gmra.mxu0 %v628
      %v1803 = vpop.f32.mrf.mxu0
      %v1804 = vadd.f32 %v1599, %v1803
      %v1805 = vpop.f32.mrf.mxu0
      %1806 = vmatprep.mubr.f32.mxu0 0.0
      %1807 = vmatmul.mubr.f32.gmra.mxu0 %v631
      %v1808 = vpop.f32.mrf.mxu0
      %v1809 = vadd.f32 %v1604, %v1808
      %v1810 = vpop.f32.mrf.mxu0
      %1811 = vmatprep.mubr.f32.mxu0 0.0
      %1812 = vmatmul.mubr.f32.gmra.mxu0 %v633
      %v1813 = vpop.f32.mrf.mxu0
      %v1814 = vadd.f32 %v1609, %v1813
      %v1815 = vpop.f32.mrf.mxu0
      %1816 = vmatprep.mubr.f32.mxu0 0.0
      %1817 = vmatmul.mubr.f32.gmra.mxu0 %v636
      %v1818 = vpop.f32.mrf.mxu0
      %v1819 = vadd.f32 %v1614, %v1818
      %v1820 = vpop.f32.mrf.mxu0
      %1821 = vmatprep.mubr.f32.mxu0 0.0
      %1822 = vmatmul.mubr.f32.gmra.mxu0 %v638
      %v1823 = vpop.f32.mrf.mxu0
      %v1824 = vadd.f32 %v1619, %v1823
      %v1825 = vpop.f32.mrf.mxu0
      %1826 = vmatprep.mubr.f32.mxu0 0.0
      %1827 = vmatmul.mubr.f32.gmra.mxu0 %v641
      %v1828 = vpop.f32.mrf.mxu0
      %v1829 = vadd.f32 %v1624, %v1828
      %v1830 = vpop.f32.mrf.mxu0
      %1831 = vmatprep.mubr.f32.mxu0 0.0
      %1832 = vmatmul.mubr.f32.gmra.mxu0 %v643
      %v1833 = vpop.f32.mrf.mxu0
      %v1834 = vadd.f32 %v1629, %v1833
      %v1835 = vpop.f32.mrf.mxu0
      %1836 = vmatprep.mubr.f32.mxu0 0.0
      %1837 = vmatmul.mubr.f32.gmra.mxu0 %v646
      %v1838 = vpop.f32.mrf.mxu0
      %v1839 = vadd.f32 %v1634, %v1838
      %v1840 = vpop.f32.mrf.mxu0
      %1841 = vmatprep.mubr.f32.mxu0 0.0
      %1842 = vmatmul.mubr.f32.gmra.mxu0 %v648
      %v1843 = vpop.f32.mrf.mxu0
      %v1844 = vadd.f32 %v1639, %v1843
      %v1845 = vpop.f32.mrf.mxu0
      %1846 = vmatprep.mubr.f32.mxu0 0.0
      %1847 = vmatmul.mubr.f32.gmra.mxu0 %v651
      %v1848 = vpop.f32.mrf.mxu0
      %v1849 = vadd.f32 %v1644, %v1848
      %v1850 = vpop.f32.mrf.mxu0
      %1851 = vmatprep.mubr.f32.mxu0 0.0
      %1852 = vmatmul.mubr.f32.gmra.mxu0 %v653
      %v1853 = vpop.f32.mrf.mxu0
      %v1854 = vadd.f32 %v1649, %v1853
      %v1855 = vpop.f32.mrf.mxu0
      %1856 = vmatprep.mubr.f32.mxu0 0.0
      %1857 = vmatmul.mubr.f32.gmra.mxu0 %v656
      %v1858 = vpop.f32.mrf.mxu0
      %v1859 = vadd.f32 %v1654, %v1858
      %v1860 = vpop.f32.mrf.mxu0
      %1861 = vmatprep.mubr.f32.mxu0 0.0
      %1862 = vmatmul.mubr.f32.gmra.mxu0 %v658
      %v1863 = vpop.f32.mrf.mxu0
      %v1864 = vadd.f32 %v1659, %v1863
      %v1865 = vpop.f32.mrf.mxu0
      %1866 = vmatprep.mubr.f32.mxu0 0.0
      %1867 = vmatmul.mubr.f32.gmra.mxu0 %v661
      %v1868 = vpop.f32.mrf.mxu0
      %v1869 = vadd.f32 %v1664, %v1868
      %v1870 = vpop.f32.mrf.mxu0
      %1871 = vmatprep.mubr.f32.mxu0 0.0
      %1872 = vmatmul.mubr.f32.gmra.mxu0 %v663
      %v1873 = vpop.f32.mrf.mxu0
      %v1874 = vadd.f32 %v1669, %v1873
      %v1875 = vpop.f32.mrf.mxu0
      %1876 = vmatprep.mubr.f32.mxu0 0.0
      %1877 = vmatmul.mubr.f32.gmra.mxu0 %v666
      %v1878 = vpop.f32.mrf.mxu0
      %v1879 = vadd.f32 %v1674, %v1878
      %v1880 = vpop.f32.mrf.mxu0
      %1881 = vmatprep.mubr.f32.mxu0 0.0
      %1882 = vmatmul.mubr.f32.gmra.mxu0 %v668
      %v1883 = vpop.f32.mrf.mxu0
      %v1884 = vadd.f32 %v1679, %v1883
      %v1885 = vpop.f32.mrf.mxu0
      %1886 = vmatprep.mubr.f32.mxu0 0.0
      %1887 = vmatmul.mubr.f32.gmra.mxu0 %v709
      %v1888 = vpop.f32.mrf.mxu0
      %v1889 = vadd.f32 %v1684, %v1888
      %v1890 = vpop.f32.mrf.mxu0
      %1891 = vmatprep.mubr.f32.mxu0 0.0
      %1892 = vmatmul.mubr.f32.gmra.mxu0 %v711
      %v1893 = vpop.f32.mrf.mxu0
      %v1894 = vadd.f32 %v1689, %v1893
      %v1895 = vpop.f32.mrf.mxu0
      %1896 = vmatprep.mubr.f32.mxu0 0.0
      %1897 = vmatmul.mubr.f32.gmra.mxu0 %v726
      %v1898 = vpop.f32.mrf.mxu0
      %v1899 = vadd.f32 %v1694, %v1898
      %v1900 = vpop.f32.mrf.mxu0
      %1901 = vmatprep.mubr.f32.mxu0 0.0
      %1902 = vmatmul.mubr.f32.gmra.mxu0 %v728
      %v1903 = vpop.f32.mrf.mxu0
      %v1904 = vadd.f32 %v1699, %v1903
      %v1905 = vpop.f32.mrf.mxu0
      %1906 = vdwg.mxu0
      %v1907 = vmax.f32 %v1769, 0.0
      %v1908 = vmax.f32 %v1774, 0.0
      %v1909 = vmax.f32 %v1779, 0.0
      %v1910 = vmax.f32 %v1784, 0.0
      %v1911 = vmax.f32 %v1789, 0.0
      %v1912 = vmax.f32 %v1794, 0.0
      %v1913 = vmax.f32 %v1799, 0.0
      %v1914 = vmax.f32 %v1804, 0.0
      %v1915 = vmax.f32 %v1809, 0.0
      %v1916 = vmax.f32 %v1814, 0.0
      %v1917 = vmax.f32 %v1819, 0.0
      %v1918 = vmax.f32 %v1824, 0.0
      %v1919 = vmax.f32 %v1829, 0.0
      %v1920 = vmax.f32 %v1834, 0.0
      %v1921 = vmax.f32 %v1839, 0.0
      %v1922 = vmax.f32 %v1844, 0.0
      %v1923 = vmax.f32 %v1849, 0.0
      %v1924 = vmax.f32 %v1854, 0.0
      %v1925 = vmax.f32 %v1859, 0.0
      %v1926 = vmax.f32 %v1864, 0.0
      %v1927 = vmax.f32 %v1869, 0.0
      %v1928 = vmax.f32 %v1874, 0.0
      %v1929 = vmax.f32 %v1879, 0.0
      %v1930 = vmax.f32 %v1884, 0.0
      %v1931 = vmax.f32 %v1889, 0.0
      %v1932 = vmax.f32 %v1894, 0.0
      %v1933 = vmax.f32 %v1899, 0.0
      %v1934 = vmax.f32 %v1904, 0.0
      %v1935 = vlaneseq
      %v1936 = vshrl.u32 %v1935, 7
      %v1937 = vadd.s32 %v1936, 8
      %v1938 = vadd.s32 %v1936, 16
      %v1939 = vadd.s32 %v1936, 24
      %v1940 = vadd.s32 %v1936, 32
      %v1941 = vadd.s32 %v1936, 40
      %v1942 = vadd.s32 %v1936, 48
      %v1943 = vadd.s32 %v1936, 56
      %v1944 = vadd.s32 %v1936, 64
      %v1945 = vadd.s32 %v1936, 72
      %v1946 = vadd.s32 %v1936, 80
      %v1947 = vadd.s32 %v1936, 88
      %v1948 = vadd.s32 %v1936, 96
      %v1949 = vadd.s32 %v1936, 104
      %v1950 = vadd.s32 %v1936, 112
      %v1951 = vadd.s32 %v1936, 120
      %v1952 = vadd.s32 %v1936, 128
      %v1953 = vadd.s32 %v1936, 136
      %v1954 = vadd.s32 %v1936, 144
      %v1955 = vadd.s32 %v1936, 152
      %v1956 = vadd.s32 %v1936, 160
      %v1957 = vadd.s32 %v1936, 168
      %v1958 = vadd.s32 %v1936, 176
      %v1959 = vadd.s32 %v1936, 184
      %v1960 = vadd.s32 %v1936, 192
      %v1961 = vadd.s32 %v1936, 200
      %v1962 = vadd.s32 %v1936, 208
      %v1963 = vadd.s32 %v1936, 216
      %vm1964 = vcmp.lt.s32.totalorder %v1936, 0
      %v1965 = vsub.s32 0, %v1936
      %v1966 = vsel %vm1964, %v1965, %v1936
      %v1967 = vshrl.u32 %v1966, 4
      %v1968 = vand.u32 %v1966, 15
      %v1969 = vsub.s32 0, %v1968
      %v1970 = vsel %vm1964, %v1969, %v1968
      %vm1971 = vcmp.lt.s32.totalorder %v1937, 0
      %v1972 = vsub.s32 0, %v1937
      %v1973 = vsel %vm1971, %v1972, %v1937
      %v1974 = vshrl.u32 %v1973, 4
      %v1975 = vand.u32 %v1973, 15
      %v1976 = vsub.s32 0, %v1975
      %v1977 = vsel %vm1971, %v1976, %v1975
      %vm1978 = vcmp.lt.s32.totalorder %v1938, 0
      %v1979 = vsub.s32 0, %v1938
      %v1980 = vsel %vm1978, %v1979, %v1938
      %v1981 = vshrl.u32 %v1980, 4
      %v1982 = vand.u32 %v1980, 15
      %v1983 = vsub.s32 0, %v1982
      %v1984 = vsel %vm1978, %v1983, %v1982
      %vm1985 = vcmp.lt.s32.totalorder %v1939, 0
      %v1986 = vsub.s32 0, %v1939
      %v1987 = vsel %vm1985, %v1986, %v1939
      %v1988 = vshrl.u32 %v1987, 4
      %v1989 = vand.u32 %v1987, 15
      %v1990 = vsub.s32 0, %v1989
      %v1991 = vsel %vm1985, %v1990, %v1989
      %vm1992 = vcmp.lt.s32.totalorder %v1940, 0
      %v1993 = vsub.s32 0, %v1940
      %v1994 = vsel %vm1992, %v1993, %v1940
      %v1995 = vshrl.u32 %v1994, 4
      %v1996 = vand.u32 %v1994, 15
      %v1997 = vsub.s32 0, %v1996
      %v1998 = vsel %vm1992, %v1997, %v1996
      %vm1999 = vcmp.lt.s32.totalorder %v1941, 0
      %v2000 = vsub.s32 0, %v1941
      %v2001 = vsel %vm1999, %v2000, %v1941
      %v2002 = vshrl.u32 %v2001, 4
      %v2003 = vand.u32 %v2001, 15
      %v2004 = vsub.s32 0, %v2003
      %v2005 = vsel %vm1999, %v2004, %v2003
      %vm2006 = vcmp.lt.s32.totalorder %v1942, 0
      %v2007 = vsub.s32 0, %v1942
      %v2008 = vsel %vm2006, %v2007, %v1942
      %v2009 = vshrl.u32 %v2008, 4
      %v2010 = vand.u32 %v2008, 15
      %v2011 = vsub.s32 0, %v2010
      %v2012 = vsel %vm2006, %v2011, %v2010
      %vm2013 = vcmp.lt.s32.totalorder %v1943, 0
      %v2014 = vsub.s32 0, %v1943
      %v2015 = vsel %vm2013, %v2014, %v1943
      %v2016 = vshrl.u32 %v2015, 4
      %v2017 = vand.u32 %v2015, 15
      %v2018 = vsub.s32 0, %v2017
      %v2019 = vsel %vm2013, %v2018, %v2017
      %vm2020 = vcmp.lt.s32.totalorder %v1944, 0
      %v2021 = vsub.s32 0, %v1944
      %v2022 = vsel %vm2020, %v2021, %v1944
      %v2023 = vshrl.u32 %v2022, 4
      %v2024 = vand.u32 %v2022, 15
      %v2025 = vsub.s32 0, %v2024
      %v2026 = vsel %vm2020, %v2025, %v2024
      %vm2027 = vcmp.lt.s32.totalorder %v1945, 0
      %v2028 = vsub.s32 0, %v1945
      %v2029 = vsel %vm2027, %v2028, %v1945
      %v2030 = vshrl.u32 %v2029, 4
      %v2031 = vand.u32 %v2029, 15
      %v2032 = vsub.s32 0, %v2031
      %v2033 = vsel %vm2027, %v2032, %v2031
      %vm2034 = vcmp.lt.s32.totalorder %v1946, 0
      %v2035 = vsub.s32 0, %v1946
      %v2036 = vsel %vm2034, %v2035, %v1946
      %v2037 = vshrl.u32 %v2036, 4
      %v2038 = vand.u32 %v2036, 15
      %v2039 = vsub.s32 0, %v2038
      %v2040 = vsel %vm2034, %v2039, %v2038
      %vm2041 = vcmp.lt.s32.totalorder %v1947, 0
      %v2042 = vsub.s32 0, %v1947
      %v2043 = vsel %vm2041, %v2042, %v1947
      %v2044 = vshrl.u32 %v2043, 4
      %v2045 = vand.u32 %v2043, 15
      %v2046 = vsub.s32 0, %v2045
      %v2047 = vsel %vm2041, %v2046, %v2045
      %vm2048 = vcmp.lt.s32.totalorder %v1948, 0
      %v2049 = vsub.s32 0, %v1948
      %v2050 = vsel %vm2048, %v2049, %v1948
      %v2051 = vshrl.u32 %v2050, 4
      %v2052 = vand.u32 %v2050, 15
      %v2053 = vsub.s32 0, %v2052
      %v2054 = vsel %vm2048, %v2053, %v2052
      %vm2055 = vcmp.lt.s32.totalorder %v1949, 0
      %v2056 = vsub.s32 0, %v1949
      %v2057 = vsel %vm2055, %v2056, %v1949
      %v2058 = vshrl.u32 %v2057, 4
      %v2059 = vand.u32 %v2057, 15
      %v2060 = vsub.s32 0, %v2059
      %v2061 = vsel %vm2055, %v2060, %v2059
      %vm2062 = vcmp.lt.s32.totalorder %v1950, 0
      %v2063 = vsub.s32 0, %v1950
      %v2064 = vsel %vm2062, %v2063, %v1950
      %v2065 = vshrl.u32 %v2064, 4
      %v2066 = vand.u32 %v2064, 15
      %v2067 = vsub.s32 0, %v2066
      %v2068 = vsel %vm2062, %v2067, %v2066
      %vm2069 = vcmp.lt.s32.totalorder %v1951, 0
      %v2070 = vsub.s32 0, %v1951
      %v2071 = vsel %vm2069, %v2070, %v1951
      %v2072 = vshrl.u32 %v2071, 4
      %v2073 = vand.u32 %v2071, 15
      %v2074 = vsub.s32 0, %v2073
      %v2075 = vsel %vm2069, %v2074, %v2073
      %vm2076 = vcmp.lt.s32.totalorder %v1952, 0
      %v2077 = vsub.s32 0, %v1952
      %v2078 = vsel %vm2076, %v2077, %v1952
      %v2079 = vshrl.u32 %v2078, 4
      %v2080 = vand.u32 %v2078, 15
      %v2081 = vsub.s32 0, %v2080
      %v2082 = vsel %vm2076, %v2081, %v2080
      %vm2083 = vcmp.lt.s32.totalorder %v1953, 0
      %v2084 = vsub.s32 0, %v1953
      %v2085 = vsel %vm2083, %v2084, %v1953
      %v2086 = vshrl.u32 %v2085, 4
      %v2087 = vand.u32 %v2085, 15
      %v2088 = vsub.s32 0, %v2087
      %v2089 = vsel %vm2083, %v2088, %v2087
      %vm2090 = vcmp.lt.s32.totalorder %v1954, 0
      %v2091 = vsub.s32 0, %v1954
      %v2092 = vsel %vm2090, %v2091, %v1954
      %v2093 = vshrl.u32 %v2092, 4
      %v2094 = vand.u32 %v2092, 15
      %v2095 = vsub.s32 0, %v2094
      %v2096 = vsel %vm2090, %v2095, %v2094
      %vm2097 = vcmp.lt.s32.totalorder %v1955, 0
      %v2098 = vsub.s32 0, %v1955
      %v2099 = vsel %vm2097, %v2098, %v1955
      %v2100 = vshrl.u32 %v2099, 4
      %v2101 = vand.u32 %v2099, 15
      %v2102 = vsub.s32 0, %v2101
      %v2103 = vsel %vm2097, %v2102, %v2101
      %vm2104 = vcmp.lt.s32.totalorder %v1956, 0
      %v2105 = vsub.s32 0, %v1956
      %v2106 = vsel %vm2104, %v2105, %v1956
      %v2107 = vshrl.u32 %v2106, 4
      %v2108 = vand.u32 %v2106, 15
      %v2109 = vsub.s32 0, %v2108
      %v2110 = vsel %vm2104, %v2109, %v2108
      %vm2111 = vcmp.lt.s32.totalorder %v1957, 0
      %v2112 = vsub.s32 0, %v1957
      %v2113 = vsel %vm2111, %v2112, %v1957
      %v2114 = vshrl.u32 %v2113, 4
      %v2115 = vand.u32 %v2113, 15
      %v2116 = vsub.s32 0, %v2115
      %v2117 = vsel %vm2111, %v2116, %v2115
      %vm2118 = vcmp.lt.s32.totalorder %v1958, 0
      %v2119 = vsub.s32 0, %v1958
      %v2120 = vsel %vm2118, %v2119, %v1958
      %v2121 = vshrl.u32 %v2120, 4
      %v2122 = vand.u32 %v2120, 15
      %v2123 = vsub.s32 0, %v2122
      %v2124 = vsel %vm2118, %v2123, %v2122
      %vm2125 = vcmp.lt.s32.totalorder %v1959, 0
      %v2126 = vsub.s32 0, %v1959
      %v2127 = vsel %vm2125, %v2126, %v1959
      %v2128 = vshrl.u32 %v2127, 4
      %v2129 = vand.u32 %v2127, 15
      %v2130 = vsub.s32 0, %v2129
      %v2131 = vsel %vm2125, %v2130, %v2129
      %vm2132 = vcmp.lt.s32.totalorder %v1960, 0
      %v2133 = vsub.s32 0, %v1960
      %v2134 = vsel %vm2132, %v2133, %v1960
      %v2135 = vshrl.u32 %v2134, 4
      %v2136 = vand.u32 %v2134, 15
      %v2137 = vsub.s32 0, %v2136
      %v2138 = vsel %vm2132, %v2137, %v2136
      %vm2139 = vcmp.lt.s32.totalorder %v1961, 0
      %v2140 = vsub.s32 0, %v1961
      %v2141 = vsel %vm2139, %v2140, %v1961
      %v2142 = vshrl.u32 %v2141, 4
      %v2143 = vand.u32 %v2141, 15
      %v2144 = vsub.s32 0, %v2143
      %v2145 = vsel %vm2139, %v2144, %v2143
      %vm2146 = vcmp.lt.s32.totalorder %v1962, 0
      %v2147 = vsub.s32 0, %v1962
      %v2148 = vsel %vm2146, %v2147, %v1962
      %v2149 = vshrl.u32 %v2148, 4
      %v2150 = vand.u32 %v2148, 15
      %v2151 = vsub.s32 0, %v2150
      %v2152 = vsel %vm2146, %v2151, %v2150
      %vm2153 = vcmp.lt.s32.totalorder %v1963, 0
      %v2154 = vsub.s32 0, %v1963
      %v2155 = vsel %vm2153, %v2154, %v1963
      %v2156 = vshrl.u32 %v2155, 4
      %v2157 = vand.u32 %v2155, 15
      %v2158 = vsub.s32 0, %v2157
      %v2159 = vsel %vm2153, %v2158, %v2157
      %vm2160 = vcmp.ne.s32.totalorder %v1970, 0
      %vm2161 = vcmp.ne.s32.totalorder %v1977, 0
      %vm2162 = vcmp.ne.s32.totalorder %v1984, 0
      %vm2163 = vcmp.ne.s32.totalorder %v1991, 0
      %vm2164 = vcmp.ne.s32.totalorder %v1998, 0
      %vm2165 = vcmp.ne.s32.totalorder %v2005, 0
      %vm2166 = vcmp.ne.s32.totalorder %v2012, 0
      %vm2167 = vcmp.ne.s32.totalorder %v2019, 0
      %vm2168 = vcmp.ne.s32.totalorder %v2026, 0
      %vm2169 = vcmp.ne.s32.totalorder %v2033, 0
      %vm2170 = vcmp.ne.s32.totalorder %v2040, 0
      %vm2171 = vcmp.ne.s32.totalorder %v2047, 0
      %vm2172 = vcmp.ne.s32.totalorder %v2054, 0
      %vm2173 = vcmp.ne.s32.totalorder %v2061, 0
      %vm2174 = vcmp.ne.s32.totalorder %v2068, 0
      %vm2175 = vcmp.ne.s32.totalorder %v2075, 0
      %vm2176 = vcmp.ne.s32.totalorder %v2082, 0
      %vm2177 = vcmp.ne.s32.totalorder %v2089, 0
      %vm2178 = vcmp.ne.s32.totalorder %v2096, 0
      %vm2179 = vcmp.ne.s32.totalorder %v2103, 0
      %vm2180 = vcmp.ne.s32.totalorder %v2110, 0
      %vm2181 = vcmp.ne.s32.totalorder %v2117, 0
      %vm2182 = vcmp.ne.s32.totalorder %v2124, 0
      %vm2183 = vcmp.ne.s32.totalorder %v2131, 0
      %vm2184 = vcmp.ne.s32.totalorder %v2138, 0
      %vm2185 = vcmp.ne.s32.totalorder %v2145, 0
      %vm2186 = vcmp.ne.s32.totalorder %v2152, 0
      %vm2187 = vcmp.ne.s32.totalorder %v2159, 0
      %vm2188 = vcmp.lt.s32.totalorder %v1970, 0
      %vm2189 = vcmp.lt.s32.totalorder %v1977, 0
      %vm2190 = vcmp.lt.s32.totalorder %v1984, 0
      %vm2191 = vcmp.lt.s32.totalorder %v1991, 0
      %vm2192 = vcmp.lt.s32.totalorder %v1998, 0
      %vm2193 = vcmp.lt.s32.totalorder %v2005, 0
      %vm2194 = vcmp.lt.s32.totalorder %v2012, 0
      %vm2195 = vcmp.lt.s32.totalorder %v2019, 0
      %vm2196 = vcmp.lt.s32.totalorder %v2026, 0
      %vm2197 = vcmp.lt.s32.totalorder %v2033, 0
      %vm2198 = vcmp.lt.s32.totalorder %v2040, 0
      %vm2199 = vcmp.lt.s32.totalorder %v2047, 0
      %vm2200 = vcmp.lt.s32.totalorder %v2054, 0
      %vm2201 = vcmp.lt.s32.totalorder %v2061, 0
      %vm2202 = vcmp.lt.s32.totalorder %v2068, 0
      %vm2203 = vcmp.lt.s32.totalorder %v2075, 0
      %vm2204 = vcmp.lt.s32.totalorder %v2082, 0
      %vm2205 = vcmp.lt.s32.totalorder %v2089, 0
      %vm2206 = vcmp.lt.s32.totalorder %v2096, 0
      %vm2207 = vcmp.lt.s32.totalorder %v2103, 0
      %vm2208 = vcmp.lt.s32.totalorder %v2110, 0
      %vm2209 = vcmp.lt.s32.totalorder %v2117, 0
      %vm2210 = vcmp.lt.s32.totalorder %v2124, 0
      %vm2211 = vcmp.lt.s32.totalorder %v2131, 0
      %vm2212 = vcmp.lt.s32.totalorder %v2138, 0
      %vm2213 = vcmp.lt.s32.totalorder %v2145, 0
      %vm2214 = vcmp.lt.s32.totalorder %v2152, 0
      %vm2215 = vcmp.lt.s32.totalorder %v2159, 0
      %vm2216 = vmand %vm2188, %vm2160
      %vm2217 = vmand %vm2189, %vm2161
      %vm2218 = vmand %vm2190, %vm2162
      %vm2219 = vmand %vm2191, %vm2163
      %vm2220 = vmand %vm2192, %vm2164
      %vm2221 = vmand %vm2193, %vm2165
      %vm2222 = vmand %vm2194, %vm2166
      %vm2223 = vmand %vm2195, %vm2167
      %vm2224 = vmand %vm2196, %vm2168
      %vm2225 = vmand %vm2197, %vm2169
      %vm2226 = vmand %vm2198, %vm2170
      %vm2227 = vmand %vm2199, %vm2171
      %vm2228 = vmand %vm2200, %vm2172
      %vm2229 = vmand %vm2201, %vm2173
      %vm2230 = vmand %vm2202, %vm2174
      %vm2231 = vmand %vm2203, %vm2175
      %vm2232 = vmand %vm2204, %vm2176
      %vm2233 = vmand %vm2205, %vm2177
      %vm2234 = vmand %vm2206, %vm2178
      %vm2235 = vmand %vm2207, %vm2179
      %vm2236 = vmand %vm2208, %vm2180
      %vm2237 = vmand %vm2209, %vm2181
      %vm2238 = vmand %vm2210, %vm2182
      %vm2239 = vmand %vm2211, %vm2183
      %vm2240 = vmand %vm2212, %vm2184
      %vm2241 = vmand %vm2213, %vm2185
      %vm2242 = vmand %vm2214, %vm2186
      %vm2243 = vmand %vm2215, %vm2187
      %v2244 = vadd.s32 %v1970, 16
      %v2245 = vadd.s32 %v1977, 16
      %v2246 = vadd.s32 %v1984, 16
      %v2247 = vadd.s32 %v1991, 16
      %v2248 = vadd.s32 %v1998, 16
      %v2249 = vadd.s32 %v2005, 16
      %v2250 = vadd.s32 %v2012, 16
      %v2251 = vadd.s32 %v2019, 16
      %v2252 = vadd.s32 %v2026, 16
      %v2253 = vadd.s32 %v2033, 16
      %v2254 = vadd.s32 %v2040, 16
      %v2255 = vadd.s32 %v2047, 16
      %v2256 = vadd.s32 %v2054, 16
      %v2257 = vadd.s32 %v2061, 16
      %v2258 = vadd.s32 %v2068, 16
      %v2259 = vadd.s32 %v2075, 16
      %v2260 = vadd.s32 %v2082, 16
      %v2261 = vadd.s32 %v2089, 16
      %v2262 = vadd.s32 %v2096, 16
      %v2263 = vadd.s32 %v2103, 16
      %v2264 = vadd.s32 %v2110, 16
      %v2265 = vadd.s32 %v2117, 16
      %v2266 = vadd.s32 %v2124, 16
      %v2267 = vadd.s32 %v2131, 16
      %v2268 = vadd.s32 %v2138, 16
      %v2269 = vadd.s32 %v2145, 16
      %v2270 = vadd.s32 %v2152, 16
      %v2271 = vadd.s32 %v2159, 16
      %v2272 = vsel %vm2216, %v2244, %v1970
      %v2273 = vsel %vm2217, %v2245, %v1977
      %v2274 = vsel %vm2218, %v2246, %v1984
      %v2275 = vsel %vm2219, %v2247, %v1991
      %v2276 = vsel %vm2220, %v2248, %v1998
      %v2277 = vsel %vm2221, %v2249, %v2005
      %v2278 = vsel %vm2222, %v2250, %v2012
      %v2279 = vsel %vm2223, %v2251, %v2019
      %v2280 = vsel %vm2224, %v2252, %v2026
      %v2281 = vsel %vm2225, %v2253, %v2033
      %v2282 = vsel %vm2226, %v2254, %v2040
      %v2283 = vsel %vm2227, %v2255, %v2047
      %v2284 = vsel %vm2228, %v2256, %v2054
      %v2285 = vsel %vm2229, %v2257, %v2061
      %v2286 = vsel %vm2230, %v2258, %v2068
      %v2287 = vsel %vm2231, %v2259, %v2075
      %v2288 = vsel %vm2232, %v2260, %v2082
      %v2289 = vsel %vm2233, %v2261, %v2089
      %v2290 = vsel %vm2234, %v2262, %v2096
      %v2291 = vsel %vm2235, %v2263, %v2103
      %v2292 = vsel %vm2236, %v2264, %v2110
      %v2293 = vsel %vm2237, %v2265, %v2117
      %v2294 = vsel %vm2238, %v2266, %v2124
      %v2295 = vsel %vm2239, %v2267, %v2131
      %v2296 = vsel %vm2240, %v2268, %v2138
      %v2297 = vsel %vm2241, %v2269, %v2145
      %v2298 = vsel %vm2242, %v2270, %v2152
      %v2299 = vsel %vm2243, %v2271, %v2159
      %vm2300 = vcmp.lt.s32.totalorder %v2272, 14
      %vm2301 = vcmp.lt.s32.totalorder %v2273, 14
      %vm2302 = vcmp.lt.s32.totalorder %v2274, 14
      %vm2303 = vcmp.lt.s32.totalorder %v2275, 14
      %vm2304 = vcmp.lt.s32.totalorder %v2276, 14
      %vm2305 = vcmp.lt.s32.totalorder %v2277, 14
      %vm2306 = vcmp.lt.s32.totalorder %v2278, 14
      %vm2307 = vcmp.lt.s32.totalorder %v2279, 14
      %vm2308 = vcmp.lt.s32.totalorder %v2280, 14
      %vm2309 = vcmp.lt.s32.totalorder %v2281, 14
      %vm2310 = vcmp.lt.s32.totalorder %v2282, 14
      %vm2311 = vcmp.lt.s32.totalorder %v2283, 14
      %vm2312 = vcmp.lt.s32.totalorder %v2284, 14
      %vm2313 = vcmp.lt.s32.totalorder %v2285, 14
      %vm2314 = vcmp.lt.s32.totalorder %v2286, 14
      %vm2315 = vcmp.lt.s32.totalorder %v2287, 14
      %vm2316 = vcmp.lt.s32.totalorder %v2288, 14
      %vm2317 = vcmp.lt.s32.totalorder %v2289, 14
      %vm2318 = vcmp.lt.s32.totalorder %v2290, 14
      %vm2319 = vcmp.lt.s32.totalorder %v2291, 14
      %vm2320 = vcmp.lt.s32.totalorder %v2292, 14
      %vm2321 = vcmp.lt.s32.totalorder %v2293, 14
      %vm2322 = vcmp.lt.s32.totalorder %v2294, 14
      %vm2323 = vcmp.lt.s32.totalorder %v2295, 14
      %vm2324 = vcmp.lt.s32.totalorder %v2296, 14
      %vm2325 = vcmp.lt.s32.totalorder %v2297, 14
      %vm2326 = vcmp.lt.s32.totalorder %v2298, 14
      %vm2327 = vcmp.lt.s32.totalorder %v2299, 14
      %v2328 = vsel %vm2300, 1, 0
      %v2329 = vsel %vm2301, 1, 0
      %v2330 = vsel %vm2302, 1, 0
      %v2331 = vsel %vm2303, 1, 0
      %v2332 = vsel %vm2304, 1, 0
      %v2333 = vsel %vm2305, 1, 0
      %v2334 = vsel %vm2306, 1, 0
      %v2335 = vsel %vm2307, 1, 0
      %v2336 = vsel %vm2308, 1, 0
      %v2337 = vsel %vm2309, 1, 0
      %v2338 = vsel %vm2310, 1, 0
      %v2339 = vsel %vm2311, 1, 0
      %v2340 = vsel %vm2312, 1, 0
      %v2341 = vsel %vm2313, 1, 0
      %v2342 = vsel %vm2314, 1, 0
      %v2343 = vsel %vm2315, 1, 0
      %v2344 = vsel %vm2316, 1, 0
      %v2345 = vsel %vm2317, 1, 0
      %v2346 = vsel %vm2318, 1, 0
      %v2347 = vsel %vm2319, 1, 0
      %v2348 = vsel %vm2320, 1, 0
      %v2349 = vsel %vm2321, 1, 0
      %v2350 = vsel %vm2322, 1, 0
      %v2351 = vsel %vm2323, 1, 0
      %v2352 = vsel %vm2324, 1, 0
      %v2353 = vsel %vm2325, 1, 0
      %v2354 = vsel %vm2326, 1, 0
      %v2355 = vsel %vm2327, 1, 0
      %vm2356 = vcmp.eq.s32.totalorder %v2328, 1
      %vm2357 = vcmp.eq.s32.totalorder %v2329, 1
      %vm2358 = vcmp.eq.s32.totalorder %v2330, 1
      %vm2359 = vcmp.eq.s32.totalorder %v2331, 1
      %vm2360 = vcmp.eq.s32.totalorder %v2332, 1
      %vm2361 = vcmp.eq.s32.totalorder %v2333, 1
      %vm2362 = vcmp.eq.s32.totalorder %v2334, 1
      %vm2363 = vcmp.eq.s32.totalorder %v2335, 1
      %vm2364 = vcmp.eq.s32.totalorder %v2336, 1
      %vm2365 = vcmp.eq.s32.totalorder %v2337, 1
      %vm2366 = vcmp.eq.s32.totalorder %v2338, 1
      %vm2367 = vcmp.eq.s32.totalorder %v2339, 1
      %vm2368 = vcmp.eq.s32.totalorder %v2340, 1
      %vm2369 = vcmp.eq.s32.totalorder %v2341, 1
      %vm2370 = vcmp.eq.s32.totalorder %v2342, 1
      %vm2371 = vcmp.eq.s32.totalorder %v2343, 1
      %vm2372 = vcmp.eq.s32.totalorder %v2344, 1
      %vm2373 = vcmp.eq.s32.totalorder %v2345, 1
      %vm2374 = vcmp.eq.s32.totalorder %v2346, 1
      %vm2375 = vcmp.eq.s32.totalorder %v2347, 1
      %vm2376 = vcmp.eq.s32.totalorder %v2348, 1
      %vm2377 = vcmp.eq.s32.totalorder %v2349, 1
      %vm2378 = vcmp.eq.s32.totalorder %v2350, 1
      %vm2379 = vcmp.eq.s32.totalorder %v2351, 1
      %vm2380 = vcmp.eq.s32.totalorder %v2352, 1
      %vm2381 = vcmp.eq.s32.totalorder %v2353, 1
      %vm2382 = vcmp.eq.s32.totalorder %v2354, 1
      %vm2383 = vcmp.eq.s32.totalorder %v2355, 1
      %v2384 = vsel %vm2356, %v1907, 0.0
      %v2385 = vsel %vm2357, %v1908, 0.0
      %v2386 = vsel %vm2358, %v1909, 0.0
      %v2387 = vsel %vm2359, %v1910, 0.0
      %v2388 = vsel %vm2360, %v1911, 0.0
      %v2389 = vsel %vm2361, %v1912, 0.0
      %v2390 = vsel %vm2362, %v1913, 0.0
      %v2391 = vsel %vm2363, %v1914, 0.0
      %v2392 = vsel %vm2364, %v1915, 0.0
      %v2393 = vsel %vm2365, %v1916, 0.0
      %v2394 = vsel %vm2366, %v1917, 0.0
      %v2395 = vsel %vm2367, %v1918, 0.0
      %v2396 = vsel %vm2368, %v1919, 0.0
      %v2397 = vsel %vm2369, %v1920, 0.0
      %v2398 = vsel %vm2370, %v1921, 0.0
      %v2399 = vsel %vm2371, %v1922, 0.0
      %v2400 = vsel %vm2372, %v1923, 0.0
      %v2401 = vsel %vm2373, %v1924, 0.0
      %v2402 = vsel %vm2374, %v1925, 0.0
      %v2403 = vsel %vm2375, %v1926, 0.0
      %v2404 = vsel %vm2376, %v1927, 0.0
      %v2405 = vsel %vm2377, %v1928, 0.0
      %v2406 = vsel %vm2378, %v1929, 0.0
      %v2407 = vsel %vm2379, %v1930, 0.0
      %v2408 = vsel %vm2380, %v1931, 0.0
      %v2409 = vsel %vm2381, %v1932, 0.0
      %v2410 = vsel %vm2382, %v1933, 0.0
      %v2411 = vsel %vm2383, %v1934, 0.0
      %v2412 = vadd.f32 %v2384, %v2385
      %v2413 = vadd.f32 %v2412, %v2386
      %v2414 = vadd.f32 %v2413, %v2387
      %v2415 = vadd.f32 %v2414, %v2388
      %v2416 = vadd.f32 %v2415, %v2389
      %v2417 = vadd.f32 %v2416, %v2390
      %v2418 = vadd.f32 %v2417, %v2391
      %v2419 = vadd.f32 %v2418, %v2392
      %v2420 = vadd.f32 %v2419, %v2393
      %v2421 = vadd.f32 %v2420, %v2394
      %v2422 = vadd.f32 %v2421, %v2395
      %v2423 = vadd.f32 %v2422, %v2396
      %v2424 = vadd.f32 %v2423, %v2397
      %v2425 = vadd.f32 %v2424, %v2398
      %v2426 = vadd.f32 %v2425, %v2399
      %v2427 = vadd.f32 %v2426, %v2400
      %v2428 = vadd.f32 %v2427, %v2401
      %v2429 = vadd.f32 %v2428, %v2402
      %v2430 = vadd.f32 %v2429, %v2403
      %v2431 = vadd.f32 %v2430, %v2404
      %v2432 = vadd.f32 %v2431, %v2405
      %v2433 = vadd.f32 %v2432, %v2406
      %v2434 = vadd.f32 %v2433, %v2407
      %v2435 = vadd.f32 %v2434, %v2408
      %v2436 = vadd.f32 %v2435, %v2409
      %v2437 = vadd.f32 %v2436, %v2410
      %v2438 = vadd.f32 %v2437, %v2411
      %v2439 = vrot.slane %v2438, 4
      %v2440 = vadd.f32 %v2438, %v2439
      %v2441 = vrot.slane %v2440, 2
      %v2442 = vadd.f32 %v2440, %v2441
      %v2443 = vrot.slane %v2442, 1
      %v2444 = vadd.f32 %v2442, %v2443
      %v2445 = vmul.f32 %v2384, %v2384
      %v2446 = vmul.f32 %v2385, %v2385
      %v2447 = vmul.f32 %v2386, %v2386
      %v2448 = vmul.f32 %v2387, %v2387
      %v2449 = vmul.f32 %v2388, %v2388
      %v2450 = vmul.f32 %v2389, %v2389
      %v2451 = vmul.f32 %v2390, %v2390
      %v2452 = vmul.f32 %v2391, %v2391
      %v2453 = vmul.f32 %v2392, %v2392
      %v2454 = vmul.f32 %v2393, %v2393
      %v2455 = vmul.f32 %v2394, %v2394
      %v2456 = vmul.f32 %v2395, %v2395
      %v2457 = vmul.f32 %v2396, %v2396
      %v2458 = vmul.f32 %v2397, %v2397
      %v2459 = vmul.f32 %v2398, %v2398
      %v2460 = vmul.f32 %v2399, %v2399
      %v2461 = vmul.f32 %v2400, %v2400
      %v2462 = vmul.f32 %v2401, %v2401
      %v2463 = vmul.f32 %v2402, %v2402
      %v2464 = vmul.f32 %v2403, %v2403
      %v2465 = vmul.f32 %v2404, %v2404
      %v2466 = vmul.f32 %v2405, %v2405
      %v2467 = vmul.f32 %v2406, %v2406
      %v2468 = vmul.f32 %v2407, %v2407
      %v2469 = vmul.f32 %v2408, %v2408
      %v2470 = vmul.f32 %v2409, %v2409
      %v2471 = vmul.f32 %v2410, %v2410
      %v2472 = vmul.f32 %v2411, %v2411
      %v2473 = vadd.f32 %v2445, %v2446
      %v2474 = vadd.f32 %v2473, %v2447
      %v2475 = vadd.f32 %v2474, %v2448
      %v2476 = vadd.f32 %v2475, %v2449
      %v2477 = vadd.f32 %v2476, %v2450
      %v2478 = vadd.f32 %v2477, %v2451
      %v2479 = vadd.f32 %v2478, %v2452
      %v2480 = vadd.f32 %v2479, %v2453
      %v2481 = vadd.f32 %v2480, %v2454
      %v2482 = vadd.f32 %v2481, %v2455
      %v2483 = vadd.f32 %v2482, %v2456
      %v2484 = vadd.f32 %v2483, %v2457
      %v2485 = vadd.f32 %v2484, %v2458
      %v2486 = vadd.f32 %v2485, %v2459
      %v2487 = vadd.f32 %v2486, %v2460
      %v2488 = vadd.f32 %v2487, %v2461
      %v2489 = vadd.f32 %v2488, %v2462
      %v2490 = vadd.f32 %v2489, %v2463
      %v2491 = vadd.f32 %v2490, %v2464
      %v2492 = vadd.f32 %v2491, %v2465
      %v2493 = vadd.f32 %v2492, %v2466
      %v2494 = vadd.f32 %v2493, %v2467
      %v2495 = vadd.f32 %v2494, %v2468
      %v2496 = vadd.f32 %v2495, %v2469
      %v2497 = vadd.f32 %v2496, %v2470
      %v2498 = vadd.f32 %v2497, %v2471
      %v2499 = vadd.f32 %v2498, %v2472
      %v2500 = vrot.slane %v2499, 4
      %v2501 = vadd.f32 %v2499, %v2500
      %v2502 = vrot.slane %v2501, 2
      %v2503 = vadd.f32 %v2501, %v2502
      %v2504 = vrot.slane %v2503, 1
      %v2505 = vadd.f32 %v2503, %v2504
      %vm2506 = vcmp.eq.s32.totalorder %v1936, 0
      %v2507 = vsel %vm2506, %v2444, 0.0
      %vm2508 = vcmp.eq.s32.totalorder %v1936, 1
      %v2509 = vsel %vm2508, %v2505, 0.0
      %v2510 = vadd.f32 %v2507, %v2509
      %2511 = vst [vmem:[%s295] sm:$0xff] %v2510
      %2512 = vst [vmem:[%s287] sm:$0xff] %v1907
      %2513 = vst [vmem:[%s287 + $0x8] sm:$0x3f] %v1908
      %2514 = vst [vmem:[%s287 + $0x10] sm:$0xff] %v1909
      %2515 = vst [vmem:[%s287 + $0x18] sm:$0x3f] %v1910
      %2516 = vst [vmem:[%s287 + $0x20] sm:$0xff] %v1911
      %2517 = vst [vmem:[%s287 + $0x28] sm:$0x3f] %v1912
      %2518 = vst [vmem:[%s287 + $0x30] sm:$0xff] %v1913
      %2519 = vst [vmem:[%s287 + $0x38] sm:$0x3f] %v1914
      %2520 = vst [vmem:[%s287 + $0x40] sm:$0xff] %v1915
      %2521 = vst [vmem:[%s287 + $0x48] sm:$0x3f] %v1916
      %2522 = vst [vmem:[%s287 + $0x50] sm:$0xff] %v1917
      %2523 = vst [vmem:[%s287 + $0x58] sm:$0x3f] %v1918
      %2524 = vst [vmem:[%s287 + $0x60] sm:$0xff] %v1919
      %2525 = vst [vmem:[%s287 + $0x68] sm:$0x3f] %v1920
      %2526 = vst [vmem:[%s287 + $0x70] sm:$0xff] %v1921
      %2527 = vst [vmem:[%s287 + $0x78] sm:$0x3f] %v1922
      %2528 = vst [vmem:[%s287 + $0x80] sm:$0xff] %v1923
      %2529 = vst [vmem:[%s287 + $0x88] sm:$0x3f] %v1924
      %2530 = vst [vmem:[%s287 + $0x90] sm:$0xff] %v1925
      %2531 = vst [vmem:[%s287 + $0x98] sm:$0x3f] %v1926
      %2532 = vst [vmem:[%s287 + $0xa0] sm:$0xff] %v1927
      %2533 = vst [vmem:[%s287 + $0xa8] sm:$0x3f] %v1928
      %2534 = vst [vmem:[%s287 + $0xb0] sm:$0xff] %v1929
      %2535 = vst [vmem:[%s287 + $0xb8] sm:$0x3f] %v1930
      %2536 = vst [vmem:[%s287 + $0xc0] sm:$0xff] %v1931
      %2537 = vst [vmem:[%s287 + $0xc8] sm:$0x3f] %v1932
      %2538 = vst [vmem:[%s287 + $0xd0] sm:$0xff] %v1933
      %2539 = vst [vmem:[%s287 + $0xd8] sm:$0x3f] %v1934
      %s2540 = smul.u32 14, %s23
      %p2541 = scmp.lt.s32.totalorder %s22, 1
      %s2542 = scalar_select %p2541, %s22, 1
      %p2543 = scmp.lt.s32.totalorder %s2540, 13
      %s2544 = scalar_select %p2543, %s2540, 13
      %s2545 = smul.addr %s2544, 2
      %s2546 = smul.addr %s2542, 28
      %s2547 = sadd.s32 %s2545, %s2546
      %s2548 = smul.addr %s2547, 8
      %s2549 = scalar_lea.vmem %s5, %s2548
      %p2550 = scmp.lt.s32.totalorder %s22, 1
      %s2551 = scalar_select %p2550, %s22, 1
      %p2552 = scmp.lt.s32.totalorder %s23, 0
      %s2553 = scalar_select %p2552, %s23, 0
      %s2554 = sadd.s32 %s2553, %s2551
      %s2555 = smul.addr %s2554, 8
      %s2556 = scalar_lea.vmem %s6, %s2555
      // Predicated region
      $region41: #{conv3x3_forward.3} parent=39 // pred_check
        %p2557 = pneg %p160
      $region42: #{conv3x3_forward.3} parent=39 // pred_check_branch
        %2559 = sbr.rel (%p2557) target = $region44
      $region43: #{conv3x3_forward.3} parent=39 // pred_region
        %s2560 = smul.u32 14, %s23
      $region44: #{conv3x3_forward.3} parent=39 // pred_fallthru
        _
      // Predicated region
      $region45: #{conv3x3_forward.3} parent=39 // pred_check
        %p2561 = pneg %p188
      $region46: #{conv3x3_forward.3} parent=39 // pred_check_branch
        %2563 = sbr.rel (%p2561) target = $region48
      $region47: #{conv3x3_forward.3} parent=39 // pred_region
        _
      $region48: #{conv3x3_forward.3} parent=39 // pred_fallthru
        _
    $region40: #{conv3x3_forward.3} parent=5 // pred_fallthru
      _
    %p2564 = scmp.le.s32.totalorder 2, %s13
    // Predicated region
    $region49: #{conv3x3_forward.3} parent=5 // pred_check
      %p2565 = pneg %p2564
    $region50: #{conv3x3_forward.3} parent=5 // pred_check_branch
      %2567 = sbr.rel (%p2565) target = $region52
    $region51: #{conv3x3_forward.3} parent=5 // pred_region
      %s2568 = ssub.s32 %s13, 2
      // Predicated region
      $region53: #{conv3x3_forward.3} parent=51 // pred_check
        %p2569 = pneg %p166
      $region54: #{conv3x3_forward.3} parent=51 // pred_check_branch
        %2571 = sbr.rel (%p2569) target = $region56
      $region55: #{conv3x3_forward.3} parent=51 // pred_region
        %s2572 = smul.u32 14, %s25
        %p2573 = scmp.lt.s32.totalorder %s24, 1
        %s2574 = scalar_select %p2573, %s24, 1
        %p2575 = scmp.lt.s32.totalorder %s2572, 13
        %s2576 = scalar_select %p2575, %s2572, 13
        %s2577 = smul.addr %s2576, 2
        %s2578 = smul.addr %s2574, 28
        %s2579 = sadd.s32 %s2577, %s2578
        %s2580 = smul.addr %s2579, 8
        %s2581 = scalar_lea.vmem %s5, %s2580
      $region56: #{conv3x3_forward.3} parent=51 // pred_fallthru
        _
      // Predicated region
      $region57: #{conv3x3_forward.3} parent=51 // pred_check
        %p2582 = pneg %p194
      $region58: #{conv3x3_forward.3} parent=51 // pred_check_branch
        %2584 = sbr.rel (%p2582) target = $region60
      $region59: #{conv3x3_forward.3} parent=51 // pred_region
        %p2585 = scmp.lt.s32.totalorder %s24, 1
        %s2586 = scalar_select %p2585, %s24, 1
        %p2587 = scmp.lt.s32.totalorder %s25, 0
        %s2588 = scalar_select %p2587, %s25, 0
        %s2589 = sadd.s32 %s2588, %s2586
        %s2590 = smul.addr %s2589, 8
        %s2591 = scalar_lea.vmem %s6, %s2590
      $region60: #{conv3x3_forward.3} parent=51 // pred_fallthru
        _
    $region52: #{conv3x3_forward.3} parent=5 // pred_fallthru
      _
  $region6: #{conv3x3_forward.3} parent=0 // loop_footer
    %s17 = sadd.s32 1, %s13
  $region7: #{conv3x3_forward.3} parent=0 // loop_footer_branch
    %12 = sbr.rel target = $region3
  $region8: #{conv3x3_forward.3} parent=0 // loop_exit
    _

</llo_original>
